<compile_context>
chip_gen: v5e
topology: v5e:2x2
jax: 0.10.0
libtpu: 0.0.40
codegen_flags: <defaults>
</compile_context>

<pallas_src>
import functools

import jax
import jax.numpy as jnp
from jax.experimental import pallas as pl
from jax.experimental.pallas import tpu as pltpu


def _round_up(x, m):
    return (x + m - 1) // m * m


def bottleneck_kernel(x_ref, w1_ref, s1_ref, b1_ref,
                      w2_ref, s2_ref, b2_ref,
                      w3_ref, s3_ref, b3_ref,
                      o_ref, t1pad, *, dilation, row_tile):
    """One grid step = one (batch, row-tile)."""
    d = dilation
    TH = row_tile
    W = x_ref.shape[2]
    Cp = x_ref.shape[3]
    Pp = w1_ref.shape[1]
    Cop = w3_ref.shape[1]
    cdt = t1pad.dtype                       # compute/storage dtype (bf16)

    h = pl.program_id(1)
    nh = pl.num_programs(1)
    r0 = pl.multiple_of(h * TH, TH)         # first image row of this tile

    def conv1_bn_relu(x3d):
        # x3d: (rows, W, Cp) bf16 -> (rows, W, Pp) bf16
        rows = x3d.shape[0]
        xm = x3d.reshape(rows * W, Cp)      # layout-free merge when W % 8 == 0
        y = jnp.dot(xm, w1_ref[...], preferred_element_type=jnp.float32)
        y = jnp.maximum(y * s1_ref[...] + b1_ref[...], 0.0)
        return y.astype(cdt).reshape(rows, W, Pp)

    # ---- zero only the thin left/right W-halo column strips (every step, so
    #      no cross-iteration scratch state; cheap vs. full-buffer zero) ----
    zcol = jnp.zeros((TH + 2 * d, d, Pp), cdt)
    t1pad[:, 0:d, :] = zcol
    t1pad[:, d + W:d + W + d, :] = zcol

    # ---- conv1 + bn1 + relu into the padded scratch ----
    xc = x_ref[0, pl.ds(r0, TH)]            # (TH, W, Cp) bf16 (reused for residual)
    t1pad[d:d + TH, d:d + W, :] = conv1_bn_relu(xc)

    zrow = jnp.zeros((d, W, Pp), cdt)

    @pl.when(h == 0)
    def _():
        t1pad[0:d, d:d + W, :] = zrow

    @pl.when(h > 0)
    def _():
        t1pad[0:d, d:d + W, :] = conv1_bn_relu(x_ref[0, pl.ds(r0 - d, d)])

    @pl.when(h == nh - 1)
    def _():
        t1pad[TH + d:TH + 2 * d, d:d + W, :] = zrow

    @pl.when(h < nh - 1)
    def _():
        t1pad[TH + d:TH + 2 * d, d:d + W, :] = conv1_bn_relu(
            x_ref[0, pl.ds(r0 + TH, d)])

    # ---- conv2 (3x3, stride=1, dilation=d, padding=d): 9 shifted-window
    #      bf16 matmuls on the MXU, accumulated in f32 ----
    acc = None
    for kh in range(3):
        for kw in range(3):
            patch = t1pad[kh * d:kh * d + TH, kw * d:kw * d + W, :]
            z = jnp.dot(patch.reshape(TH * W, Pp), w2_ref[kh, kw],
                        preferred_element_type=jnp.float32)
            acc = z if acc is None else acc + z
    t2 = jnp.maximum(acc * s2_ref[...] + b2_ref[...], 0.0).astype(cdt)

    # ---- conv3 (1x1) + bn3 ----
    t3 = jnp.dot(t2, w3_ref[...], preferred_element_type=jnp.float32)
    t3 = t3 * s3_ref[...] + b3_ref[...]

    # ---- residual add + relu ----
    res = xc.reshape(TH * W, Cp).astype(jnp.float32)
    out = jnp.maximum(t3 + res, 0.0)
    o_ref[0] = out.reshape(TH, W, Cop).astype(o_ref.dtype)


def _fold_bn(stats, pad_to=None, eps=1e-5):
    gamma, beta, mean, var = stats
    scale = gamma / jnp.sqrt(var + eps)
    bias = beta - mean * scale
    if pad_to is not None:
        c = scale.shape[0]
        scale = jnp.pad(scale, (0, pad_to - c), constant_values=1.0)
        bias = jnp.pad(bias, (0, pad_to - c), constant_values=0.0)
    return (scale.reshape(1, -1).astype(jnp.float32),
            bias.reshape(1, -1).astype(jnp.float32))


def bottleneck_forward_nhwc(x_nhwc, params, dilation=1, row_tile=8,
                            compute_dtype=jnp.bfloat16):
    """x_nhwc: (N, H, W, Cin) any float dtype.  Returns NHWC in compute_dtype."""
    N, H, W, cin = x_nhwc.shape
    w1 = params["w1"]                       # (Cin, planes)
    w2 = params["w2"]                       # (3, 3, planes, planes)
    w3 = params["w3"]                       # (planes, Cout)
    planes = w1.shape[1]
    cout = w3.shape[1]
    assert cout == cin, "residual add requires inplanes == planes * 4 (downsample=None)"

    d = dilation
    TH = min(row_tile, H)
    assert H % TH == 0, "TODO(synk): ragged last row tile not handled"
    assert d < TH

    # lane-dense channel padding (multiples of 128)
    Cp = _round_up(cin, 128)
    Pp = _round_up(planes, 128)
    Cop = _round_up(cout, 128)

    # activations/weights in bf16 (MXU-native); pad/cast fuse into one XLA pass
    x = jnp.pad(x_nhwc.astype(compute_dtype), ((0, 0), (0, 0), (0, 0), (0, Cp - cin)))
    w1p = jnp.pad(w1, ((0, Cp - cin), (0, Pp - planes))).astype(compute_dtype)
    w2p = jnp.pad(w2, ((0, 0), (0, 0), (0, Pp - planes), (0, Pp - planes))).astype(compute_dtype)
    w3p = jnp.pad(w3, ((0, Pp - planes), (0, Cop - cout))).astype(compute_dtype)

    s1, b1 = _fold_bn(params["bn1"], Pp)
    s2, b2 = _fold_bn(params["bn2"], Pp)
    s3, b3 = _fold_bn(params["bn3"], Cop)

    kern = functools.partial(bottleneck_kernel, dilation=d, row_tile=TH)
    full2 = lambda n, h: (0, 0)
    full4 = lambda n, h: (0, 0, 0, 0)

    out = pl.pallas_call(
        kern,
        out_shape=jax.ShapeDtypeStruct((N, H, W, Cop), compute_dtype),
        grid_spec=pltpu.PrefetchScalarGridSpec(
            num_scalar_prefetch=0,
            grid=(N, H // TH),
            in_specs=[
                # x: whole image per batch element, resident across the row axis
                pl.BlockSpec((1, H, W, Cp), lambda n, h: (n, 0, 0, 0)),
                pl.BlockSpec(w1p.shape, full2),
                pl.BlockSpec(s1.shape, full2), pl.BlockSpec(b1.shape, full2),
                pl.BlockSpec(w2p.shape, full4),
                pl.BlockSpec(s2.shape, full2), pl.BlockSpec(b2.shape, full2),
                pl.BlockSpec(w3p.shape, full2),
                pl.BlockSpec(s3.shape, full2), pl.BlockSpec(b3.shape, full2),
            ],
            out_specs=pl.BlockSpec((1, TH, W, Cop), lambda n, h: (n, h, 0, 0)),
            scratch_shapes=[pltpu.VMEM((TH + 2 * d, W + 2 * d, Pp), compute_dtype)],
        ),
        compiler_params=pltpu.CompilerParams(
            dimension_semantics=("parallel", "parallel"),
            vmem_limit_bytes=64 * 1024 * 1024,
        ),
    )(x, w1p, s1, b1, w2p, s2, b2, w3p, s3, b3)

    return out[..., :cout]                  # drop channel padding (NHWC, bf16)


def bottleneck_forward(x_nchw, params, dilation=1, row_tile=8):
    """NCHW wrapper for parity with the PyTorch module.  A NHWC model should
    call bottleneck_forward_nhwc directly and skip both transposes."""
    x = jnp.transpose(x_nchw, (0, 2, 3, 1))
    out = bottleneck_forward_nhwc(x, params, dilation=dilation, row_tile=row_tile)
    return jnp.transpose(out, (0, 3, 1, 2))


def reference_forward(x_nchw, params, dilation=1):
    """Pure-JAX f32 reference (lax conv) for numerical verification."""
    x = jnp.transpose(x_nchw, (0, 2, 3, 1)).astype(jnp.float32)
    dn = ("NHWC", "HWIO", "NHWC")
    d = dilation

    def bn(y, stats):
        s, b = _fold_bn(stats)
        return y * s.reshape(1, 1, 1, -1) + b.reshape(1, 1, 1, -1)

    w1 = params["w1"].reshape(1, 1, *params["w1"].shape).astype(jnp.float32)
    w2 = params["w2"].astype(jnp.float32)
    w3 = params["w3"].reshape(1, 1, *params["w3"].shape).astype(jnp.float32)

    out = jax.lax.conv_general_dilated(x, w1, (1, 1), "VALID", dimension_numbers=dn)
    out = jax.nn.relu(bn(out, params["bn1"]))
    out = jax.lax.conv_general_dilated(out, w2, (1, 1),
                                       [(d, d), (d, d)], rhs_dilation=(d, d),
                                       dimension_numbers=dn)
    out = jax.nn.relu(bn(out, params["bn2"]))
    out = jax.lax.conv_general_dilated(out, w3, (1, 1), "VALID", dimension_numbers=dn)
    out = bn(out, params["bn3"])
    out = jax.nn.relu(out + x)
    return jnp.transpose(out, (0, 3, 1, 2))


def make_params(key, inplanes, planes):
    ks = jax.random.split(key, 6)

    def bn_stats(k, c):
        k1, k2, k3, k4 = jax.random.split(k, 4)
        gamma = 1.0 + 0.1 * jax.random.normal(k1, (c,), jnp.float32)
        beta = 0.1 * jax.random.normal(k2, (c,), jnp.float32)
        mean = 0.05 * jax.random.normal(k3, (c,), jnp.float32)
        var = 1.0 + 0.2 * jax.random.uniform(k4, (c,), jnp.float32)
        return (gamma, beta, mean, var)

    return {
        "w1": 0.1 * jax.random.normal(ks[0], (inplanes, planes), jnp.float32),
        "w2": 0.1 * jax.random.normal(ks[1], (3, 3, planes, planes), jnp.float32),
        "w3": 0.1 * jax.random.normal(ks[2], (planes, planes * 4), jnp.float32),
        "bn1": bn_stats(ks[3], planes),
        "bn2": bn_stats(ks[4], planes),
        "bn3": bn_stats(ks[5], planes * 4),
    }


def _bf16_round(a):
    return a.astype(jnp.bfloat16).astype(jnp.float32)


if __name__ == "__main__":
    key = jax.random.PRNGKey(0)
    kx, kp = jax.random.split(key)

    # Small demo shapes: N=2, inplanes=16, planes=4 (expansion 4 -> 16 out
    # channels), 16x16 spatial -> 2 row tiles of 8 (exercises the halo logic).
    N, inplanes, planes, H, W = 2, 16, 4, 16, 16
    x = jax.random.normal(kx, (N, inplanes, H, W), jnp.float32)   # NCHW like PyTorch
    params = make_params(kp, inplanes, planes)

    # The reference gets the same bf16-rounded operands the kernel sees, so the
    # comparison only measures intermediate/accumulation precision.
    xq = _bf16_round(x)
    params_q = dict(params)
    params_q["w1"] = _bf16_round(params["w1"])
    params_q["w2"] = _bf16_round(params["w2"])
    params_q["w3"] = _bf16_round(params["w3"])

    for dilation in (1, 2):
        out = bottleneck_forward(x, params, dilation=dilation, row_tile=8)
        out = jax.block_until_ready(out)
        assert out.shape == (N, planes * 4, H, W)

        ref = jax.block_until_ready(reference_forward(xq, params_q, dilation=dilation))
        err = float(jnp.max(jnp.abs(out.astype(jnp.float32) - ref)))
        assert jnp.allclose(out.astype(jnp.float32), ref, atol=3e-2, rtol=3e-2), (dilation, err)

    print("KERNEL_OK")
</pallas_src>

<mosaic_0001>
module attributes {stable_mosaic.version = 11 : i64} {
  func.func @bottleneck_kernel(%arg0: i32, %arg1: i32, %arg2: memref<1x16x16x128xbf16, #tpu.memory_space<vmem>>, %arg3: memref<128x128xbf16, #tpu.memory_space<vmem>>, %arg4: memref<1x128xf32, #tpu.memory_space<vmem>>, %arg5: memref<1x128xf32, #tpu.memory_space<vmem>>, %arg6: memref<3x3x128x128xbf16, #tpu.memory_space<vmem>>, %arg7: memref<1x128xf32, #tpu.memory_space<vmem>>, %arg8: memref<1x128xf32, #tpu.memory_space<vmem>>, %arg9: memref<128x128xbf16, #tpu.memory_space<vmem>>, %arg10: memref<1x128xf32, #tpu.memory_space<vmem>>, %arg11: memref<1x128xf32, #tpu.memory_space<vmem>>, %arg12: memref<1x8x16x128xbf16, #tpu.memory_space<vmem>>, %arg13: memref<10x18x128xbf16, #tpu.memory_space<vmem>>) attributes {dimension_semantics = [#tpu.dimension_semantics<parallel>, #tpu.dimension_semantics<parallel>], iteration_bounds = array<i64: 2, 2>, scalar_prefetch = 0 : i64, scratch_operands = 1 : i64, tpu.core_type = #tpu.core_type<tc>, window_params = [{transform_indices = @transform_0, window_bounds = array<i64: 1, 16, 16, 128>}, {pipeline_mode = #tpu.pipeline_mode<synchronous>, transform_indices = @transform_1, window_bounds = array<i64: 128, 128>}, {pipeline_mode = #tpu.pipeline_mode<synchronous>, transform_indices = @transform_2, window_bounds = array<i64: 1, 128>}, {pipeline_mode = #tpu.pipeline_mode<synchronous>, transform_indices = @transform_3, window_bounds = array<i64: 1, 128>}, {pipeline_mode = #tpu.pipeline_mode<synchronous>, transform_indices = @transform_4, window_bounds = array<i64: 3, 3, 128, 128>}, {pipeline_mode = #tpu.pipeline_mode<synchronous>, transform_indices = @transform_5, window_bounds = array<i64: 1, 128>}, {pipeline_mode = #tpu.pipeline_mode<synchronous>, transform_indices = @transform_6, window_bounds = array<i64: 1, 128>}, {pipeline_mode = #tpu.pipeline_mode<synchronous>, transform_indices = @transform_7, window_bounds = array<i64: 128, 128>}, {pipeline_mode = #tpu.pipeline_mode<synchronous>, transform_indices = @transform_8, window_bounds = array<i64: 1, 128>}, {pipeline_mode = #tpu.pipeline_mode<synchronous>, transform_indices = @transform_9, window_bounds = array<i64: 1, 128>}, {transform_indices = @transform_10, window_bounds = array<i64: 1, 8, 16, 128>}]} {
    %c8_i32 = arith.constant 8 : i32
    %0 = arith.muli %arg1, %c8_i32 : i32
    %1 = tpu.assume_multiple %0, 8 : i32
    %cst = arith.constant 0.000000e+00 : bf16
    %2 = vector.broadcast %cst : bf16 to vector<10x1x128xbf16>
    %c0 = arith.constant 0 : index
    %c0_0 = arith.constant 0 : index
    %c0_1 = arith.constant 0 : index
    %3 = vector.load %arg13[%c0, %c0_0, %c0_1] : memref<10x18x128xbf16, #tpu.memory_space<vmem>>, vector<10x1x128xbf16>
    tpu.vector_store %arg13[%c0, %c0_0, %c0_1], %2 {strides = array<i32>} : memref<10x18x128xbf16, #tpu.memory_space<vmem>>, vector<10x1x128xbf16>,
    %c0_2 = arith.constant 0 : index
    %c17 = arith.constant 17 : index
    %c0_3 = arith.constant 0 : index
    %4 = vector.load %arg13[%c0_2, %c17, %c0_3] : memref<10x18x128xbf16, #tpu.memory_space<vmem>>, vector<10x1x128xbf16>
    tpu.vector_store %arg13[%c0_2, %c17, %c0_3], %2 {strides = array<i32>} : memref<10x18x128xbf16, #tpu.memory_space<vmem>>, vector<10x1x128xbf16>,
    %c0_4 = arith.constant 0 : index
    %5 = arith.index_cast %1 : i32 to index
    %c0_5 = arith.constant 0 : index
    %c0_6 = arith.constant 0 : index
    %6 = vector.load %arg2[%c0_4, %5, %c0_5, %c0_6] : memref<1x16x16x128xbf16, #tpu.memory_space<vmem>>, vector<1x8x16x128xbf16>
    %7 = vector.shape_cast %6 : vector<1x8x16x128xbf16> to vector<8x16x128xbf16>
    %8 = vector.shape_cast %7 : vector<8x16x128xbf16> to vector<128x128xbf16>
    %c0_7 = arith.constant 0 : index
    %c0_8 = arith.constant 0 : index
    %9 = vector.load %arg3[%c0_7, %c0_8] : memref<128x128xbf16, #tpu.memory_space<vmem>>, vector<128x128xbf16>
    %cst_9 = arith.constant dense<0.000000e+00> : vector<128x128xf32>
    %10 = tpu.matmul %8, %9, %cst_9 {dimension_numbers = #tpu.dot_dimension_numbers<[1], [0], [0], [1], [0, 0, 1, 1], [], []>} : vector<128x128xbf16>, vector<128x128xbf16>, vector<128x128xf32> -> vector<128x128xf32>
    %c0_10 = arith.constant 0 : index
    %c0_11 = arith.constant 0 : index
    %11 = vector.load %arg4[%c0_10, %c0_11] : memref<1x128xf32, #tpu.memory_space<vmem>>, vector<1x128xf32>
    %12 = vector.broadcast %11 : vector<1x128xf32> to vector<128x128xf32>
    %13 = arith.mulf %10, %12 : vector<128x128xf32>
    %c0_12 = arith.constant 0 : index
    %c0_13 = arith.constant 0 : index
    %14 = vector.load %arg5[%c0_12, %c0_13] : memref<1x128xf32, #tpu.memory_space<vmem>>, vector<1x128xf32>
    %15 = vector.broadcast %14 : vector<1x128xf32> to vector<128x128xf32>
    %16 = arith.addf %13, %15 : vector<128x128xf32>
    %cst_14 = arith.constant 0.000000e+00 : f32
    %17 = vector.broadcast %cst_14 : f32 to vector<128x128xf32>
    %18 = arith.maximumf %16, %17 : vector<128x128xf32>
    %19 = arith.truncf %18 : vector<128x128xf32> to vector<128x128xbf16>
    %20 = vector.shape_cast %19 : vector<128x128xbf16> to vector<8x16x128xbf16>
    %c1 = arith.constant 1 : index
    %c1_15 = arith.constant 1 : index
    %c0_16 = arith.constant 0 : index
    %21 = vector.load %arg13[%c1, %c1_15, %c0_16] : memref<10x18x128xbf16, #tpu.memory_space<vmem>>, vector<8x16x128xbf16>
    tpu.vector_store %arg13[%c1, %c1_15, %c0_16], %20 {strides = array<i32>} : memref<10x18x128xbf16, #tpu.memory_space<vmem>>, vector<8x16x128xbf16>,
    %cst_17 = arith.constant 0.000000e+00 : bf16
    %22 = vector.broadcast %cst_17 : bf16 to vector<1x16x128xbf16>
    %c0_i32 = arith.constant 0 : i32
    %23 = arith.cmpi eq, %arg1, %c0_i32 : i32
    %24 = arith.extui %23 : i1 to i32
    %c0_i32_18 = arith.constant 0 : i32
    %25 = arith.cmpi ne, %24, %c0_i32_18 : i32
    scf.if %25 {
      %c0_112 = arith.constant 0 : index
      %c1_113 = arith.constant 1 : index
      %c0_114 = arith.constant 0 : index
      %115 = vector.load %arg13[%c0_112, %c1_113, %c0_114] : memref<10x18x128xbf16, #tpu.memory_space<vmem>>, vector<1x16x128xbf16>
      tpu.vector_store %arg13[%c0_112, %c1_113, %c0_114], %22 {strides = array<i32>} : memref<10x18x128xbf16, #tpu.memory_space<vmem>>, vector<1x16x128xbf16>,
    } else {
    }
    %c0_i32_19 = arith.constant 0 : i32
    %26 = arith.cmpi sgt, %arg1, %c0_i32_19 : i32
    %27 = arith.extui %26 : i1 to i32
    %c0_i32_20 = arith.constant 0 : i32
    %28 = arith.cmpi ne, %27, %c0_i32_20 : i32
    scf.if %28 {
      %c1_i32_112 = arith.constant 1 : i32
      %115 = arith.subi %1, %c1_i32_112 : i32
      %c0_113 = arith.constant 0 : index
      %116 = arith.index_cast %115 : i32 to index
      %c0_114 = arith.constant 0 : index
      %c0_115 = arith.constant 0 : index
      %117 = vector.load %arg2[%c0_113, %116, %c0_114, %c0_115] : memref<1x16x16x128xbf16, #tpu.memory_space<vmem>>, vector<1x1x16x128xbf16>
      %118 = vector.shape_cast %117 : vector<1x1x16x128xbf16> to vector<1x16x128xbf16>
      %119 = vector.shape_cast %118 : vector<1x16x128xbf16> to vector<16x128xbf16>
      %c0_116 = arith.constant 0 : index
      %c0_117 = arith.constant 0 : index
      %120 = vector.load %arg3[%c0_116, %c0_117] : memref<128x128xbf16, #tpu.memory_space<vmem>>, vector<128x128xbf16>
      %cst_118 = arith.constant dense<0.000000e+00> : vector<16x128xf32>
      %121 = tpu.matmul %119, %120, %cst_118 {dimension_numbers = #tpu.dot_dimension_numbers<[1], [0], [0], [1], [0, 0, 1, 1], [], []>} : vector<16x128xbf16>, vector<128x128xbf16>, vector<16x128xf32> -> vector<16x128xf32>
      %c0_119 = arith.constant 0 : index
      %c0_120 = arith.constant 0 : index
      %122 = vector.load %arg4[%c0_119, %c0_120] : memref<1x128xf32, #tpu.memory_space<vmem>>, vector<1x128xf32>
      %123 = vector.broadcast %122 : vector<1x128xf32> to vector<16x128xf32>
      %124 = arith.mulf %121, %123 : vector<16x128xf32>
      %c0_121 = arith.constant 0 : index
      %c0_122 = arith.constant 0 : index
      %125 = vector.load %arg5[%c0_121, %c0_122] : memref<1x128xf32, #tpu.memory_space<vmem>>, vector<1x128xf32>
      %126 = vector.broadcast %125 : vector<1x128xf32> to vector<16x128xf32>
      %127 = arith.addf %124, %126 : vector<16x128xf32>
      %cst_123 = arith.constant 0.000000e+00 : f32
      %128 = vector.broadcast %cst_123 : f32 to vector<16x128xf32>
      %129 = arith.maximumf %127, %128 : vector<16x128xf32>
      %130 = arith.truncf %129 : vector<16x128xf32> to vector<16x128xbf16>
      %131 = vector.shape_cast %130 : vector<16x128xbf16> to vector<1x16x128xbf16>
      %c0_124 = arith.constant 0 : index
      %c1_125 = arith.constant 1 : index
      %c0_126 = arith.constant 0 : index
      %132 = vector.load %arg13[%c0_124, %c1_125, %c0_126] : memref<10x18x128xbf16, #tpu.memory_space<vmem>>, vector<1x16x128xbf16>
      tpu.vector_store %arg13[%c0_124, %c1_125, %c0_126], %131 {strides = array<i32>} : memref<10x18x128xbf16, #tpu.memory_space<vmem>>, vector<1x16x128xbf16>,
    } else {
    }
    %c1_i32 = arith.constant 1 : i32
    %29 = arith.cmpi eq, %arg1, %c1_i32 : i32
    %30 = arith.extui %29 : i1 to i32
    %c0_i32_21 = arith.constant 0 : i32
    %31 = arith.cmpi ne, %30, %c0_i32_21 : i32
    scf.if %31 {
      %c9 = arith.constant 9 : index
      %c1_112 = arith.constant 1 : index
      %c0_113 = arith.constant 0 : index
      %115 = vector.load %arg13[%c9, %c1_112, %c0_113] : memref<10x18x128xbf16, #tpu.memory_space<vmem>>, vector<1x16x128xbf16>
      tpu.vector_store %arg13[%c9, %c1_112, %c0_113], %22 {strides = array<i32>} : memref<10x18x128xbf16, #tpu.memory_space<vmem>>, vector<1x16x128xbf16>,
    } else {
    }
    %c1_i32_22 = arith.constant 1 : i32
    %32 = arith.cmpi slt, %arg1, %c1_i32_22 : i32
    %33 = arith.extui %32 : i1 to i32
    %c0_i32_23 = arith.constant 0 : i32
    %34 = arith.cmpi ne, %33, %c0_i32_23 : i32
    scf.if %34 {
      %c8_i32_112 = arith.constant 8 : i32
      %115 = arith.addi %1, %c8_i32_112 : i32
      %c0_113 = arith.constant 0 : index
      %116 = arith.index_cast %115 : i32 to index
      %c0_114 = arith.constant 0 : index
      %c0_115 = arith.constant 0 : index
      %117 = vector.load %arg2[%c0_113, %116, %c0_114, %c0_115] : memref<1x16x16x128xbf16, #tpu.memory_space<vmem>>, vector<1x1x16x128xbf16>
      %118 = vector.shape_cast %117 : vector<1x1x16x128xbf16> to vector<1x16x128xbf16>
      %119 = vector.shape_cast %118 : vector<1x16x128xbf16> to vector<16x128xbf16>
      %c0_116 = arith.constant 0 : index
      %c0_117 = arith.constant 0 : index
      %120 = vector.load %arg3[%c0_116, %c0_117] : memref<128x128xbf16, #tpu.memory_space<vmem>>, vector<128x128xbf16>
      %cst_118 = arith.constant dense<0.000000e+00> : vector<16x128xf32>
      %121 = tpu.matmul %119, %120, %cst_118 {dimension_numbers = #tpu.dot_dimension_numbers<[1], [0], [0], [1], [0, 0, 1, 1], [], []>} : vector<16x128xbf16>, vector<128x128xbf16>, vector<16x128xf32> -> vector<16x128xf32>
      %c0_119 = arith.constant 0 : index
      %c0_120 = arith.constant 0 : index
      %122 = vector.load %arg4[%c0_119, %c0_120] : memref<1x128xf32, #tpu.memory_space<vmem>>, vector<1x128xf32>
      %123 = vector.broadcast %122 : vector<1x128xf32> to vector<16x128xf32>
      %124 = arith.mulf %121, %123 : vector<16x128xf32>
      %c0_121 = arith.constant 0 : index
      %c0_122 = arith.constant 0 : index
      %125 = vector.load %arg5[%c0_121, %c0_122] : memref<1x128xf32, #tpu.memory_space<vmem>>, vector<1x128xf32>
      %126 = vector.broadcast %125 : vector<1x128xf32> to vector<16x128xf32>
      %127 = arith.addf %124, %126 : vector<16x128xf32>
      %cst_123 = arith.constant 0.000000e+00 : f32
      %128 = vector.broadcast %cst_123 : f32 to vector<16x128xf32>
      %129 = arith.maximumf %127, %128 : vector<16x128xf32>
      %130 = arith.truncf %129 : vector<16x128xf32> to vector<16x128xbf16>
      %131 = vector.shape_cast %130 : vector<16x128xbf16> to vector<1x16x128xbf16>
      %c9 = arith.constant 9 : index
      %c1_124 = arith.constant 1 : index
      %c0_125 = arith.constant 0 : index
      %132 = vector.load %arg13[%c9, %c1_124, %c0_125] : memref<10x18x128xbf16, #tpu.memory_space<vmem>>, vector<1x16x128xbf16>
      tpu.vector_store %arg13[%c9, %c1_124, %c0_125], %131 {strides = array<i32>} : memref<10x18x128xbf16, #tpu.memory_space<vmem>>, vector<1x16x128xbf16>,
    } else {
    }
    %c0_24 = arith.constant 0 : index
    %c0_25 = arith.constant 0 : index
    %c0_26 = arith.constant 0 : index
    %35 = vector.load %arg13[%c0_24, %c0_25, %c0_26] : memref<10x18x128xbf16, #tpu.memory_space<vmem>>, vector<8x16x128xbf16>
    %36 = vector.shape_cast %35 : vector<8x16x128xbf16> to vector<128x128xbf16>
    %c0_27 = arith.constant 0 : index
    %c0_28 = arith.constant 0 : index
    %c0_29 = arith.constant 0 : index
    %c0_30 = arith.constant 0 : index
    %37 = vector.load %arg6[%c0_27, %c0_28, %c0_29, %c0_30] : memref<3x3x128x128xbf16, #tpu.memory_space<vmem>>, vector<1x1x128x128xbf16>
    %38 = vector.shape_cast %37 : vector<1x1x128x128xbf16> to vector<128x128xbf16>
    %cst_31 = arith.constant dense<0.000000e+00> : vector<128x128xf32>
    %39 = tpu.matmul %36, %38, %cst_31 {dimension_numbers = #tpu.dot_dimension_numbers<[1], [0], [0], [1], [0, 0, 1, 1], [], []>} : vector<128x128xbf16>, vector<128x128xbf16>, vector<128x128xf32> -> vector<128x128xf32>
    %c0_32 = arith.constant 0 : index
    %c1_33 = arith.constant 1 : index
    %c0_34 = arith.constant 0 : index
    %40 = vector.load %arg13[%c0_32, %c1_33, %c0_34] : memref<10x18x128xbf16, #tpu.memory_space<vmem>>, vector<8x16x128xbf16>
    %41 = vector.shape_cast %40 : vector<8x16x128xbf16> to vector<128x128xbf16>
    %c0_35 = arith.constant 0 : index
    %c1_36 = arith.constant 1 : index
    %c0_37 = arith.constant 0 : index
    %c0_38 = arith.constant 0 : index
    %42 = vector.load %arg6[%c0_35, %c1_36, %c0_37, %c0_38] : memref<3x3x128x128xbf16, #tpu.memory_space<vmem>>, vector<1x1x128x128xbf16>
    %43 = vector.shape_cast %42 : vector<1x1x128x128xbf16> to vector<128x128xbf16>
    %cst_39 = arith.constant dense<0.000000e+00> : vector<128x128xf32>
    %44 = tpu.matmul %41, %43, %cst_39 {dimension_numbers = #tpu.dot_dimension_numbers<[1], [0], [0], [1], [0, 0, 1, 1], [], []>} : vector<128x128xbf16>, vector<128x128xbf16>, vector<128x128xf32> -> vector<128x128xf32>
    %45 = arith.addf %39, %44 : vector<128x128xf32>
    %c0_40 = arith.constant 0 : index
    %c2 = arith.constant 2 : index
    %c0_41 = arith.constant 0 : index
    %46 = vector.load %arg13[%c0_40, %c2, %c0_41] : memref<10x18x128xbf16, #tpu.memory_space<vmem>>, vector<8x16x128xbf16>
    %47 = vector.shape_cast %46 : vector<8x16x128xbf16> to vector<128x128xbf16>
    %c0_42 = arith.constant 0 : index
    %c2_43 = arith.constant 2 : index
    %c0_44 = arith.constant 0 : index
    %c0_45 = arith.constant 0 : index
    %48 = vector.load %arg6[%c0_42, %c2_43, %c0_44, %c0_45] : memref<3x3x128x128xbf16, #tpu.memory_space<vmem>>, vector<1x1x128x128xbf16>
    %49 = vector.shape_cast %48 : vector<1x1x128x128xbf16> to vector<128x128xbf16>
    %cst_46 = arith.constant dense<0.000000e+00> : vector<128x128xf32>
    %50 = tpu.matmul %47, %49, %cst_46 {dimension_numbers = #tpu.dot_dimension_numbers<[1], [0], [0], [1], [0, 0, 1, 1], [], []>} : vector<128x128xbf16>, vector<128x128xbf16>, vector<128x128xf32> -> vector<128x128xf32>
    %51 = arith.addf %45, %50 : vector<128x128xf32>
    %c1_47 = arith.constant 1 : index
    %c0_48 = arith.constant 0 : index
    %c0_49 = arith.constant 0 : index
    %52 = vector.load %arg13[%c1_47, %c0_48, %c0_49] : memref<10x18x128xbf16, #tpu.memory_space<vmem>>, vector<8x16x128xbf16>
    %53 = vector.shape_cast %52 : vector<8x16x128xbf16> to vector<128x128xbf16>
    %c1_50 = arith.constant 1 : index
    %c0_51 = arith.constant 0 : index
    %c0_52 = arith.constant 0 : index
    %c0_53 = arith.constant 0 : index
    %54 = vector.load %arg6[%c1_50, %c0_51, %c0_52, %c0_53] : memref<3x3x128x128xbf16, #tpu.memory_space<vmem>>, vector<1x1x128x128xbf16>
    %55 = vector.shape_cast %54 : vector<1x1x128x128xbf16> to vector<128x128xbf16>
    %cst_54 = arith.constant dense<0.000000e+00> : vector<128x128xf32>
    %56 = tpu.matmul %53, %55, %cst_54 {dimension_numbers = #tpu.dot_dimension_numbers<[1], [0], [0], [1], [0, 0, 1, 1], [], []>} : vector<128x128xbf16>, vector<128x128xbf16>, vector<128x128xf32> -> vector<128x128xf32>
    %57 = arith.addf %51, %56 : vector<128x128xf32>
    %c1_55 = arith.constant 1 : index
    %c1_56 = arith.constant 1 : index
    %c0_57 = arith.constant 0 : index
    %58 = vector.load %arg13[%c1_55, %c1_56, %c0_57] : memref<10x18x128xbf16, #tpu.memory_space<vmem>>, vector<8x16x128xbf16>
    %59 = vector.shape_cast %58 : vector<8x16x128xbf16> to vector<128x128xbf16>
    %c1_58 = arith.constant 1 : index
    %c1_59 = arith.constant 1 : index
    %c0_60 = arith.constant 0 : index
    %c0_61 = arith.constant 0 : index
    %60 = vector.load %arg6[%c1_58, %c1_59, %c0_60, %c0_61] : memref<3x3x128x128xbf16, #tpu.memory_space<vmem>>, vector<1x1x128x128xbf16>
    %61 = vector.shape_cast %60 : vector<1x1x128x128xbf16> to vector<128x128xbf16>
    %cst_62 = arith.constant dense<0.000000e+00> : vector<128x128xf32>
    %62 = tpu.matmul %59, %61, %cst_62 {dimension_numbers = #tpu.dot_dimension_numbers<[1], [0], [0], [1], [0, 0, 1, 1], [], []>} : vector<128x128xbf16>, vector<128x128xbf16>, vector<128x128xf32> -> vector<128x128xf32>
    %63 = arith.addf %57, %62 : vector<128x128xf32>
    %c1_63 = arith.constant 1 : index
    %c2_64 = arith.constant 2 : index
    %c0_65 = arith.constant 0 : index
    %64 = vector.load %arg13[%c1_63, %c2_64, %c0_65] : memref<10x18x128xbf16, #tpu.memory_space<vmem>>, vector<8x16x128xbf16>
    %65 = vector.shape_cast %64 : vector<8x16x128xbf16> to vector<128x128xbf16>
    %c1_66 = arith.constant 1 : index
    %c2_67 = arith.constant 2 : index
    %c0_68 = arith.constant 0 : index
    %c0_69 = arith.constant 0 : index
    %66 = vector.load %arg6[%c1_66, %c2_67, %c0_68, %c0_69] : memref<3x3x128x128xbf16, #tpu.memory_space<vmem>>, vector<1x1x128x128xbf16>
    %67 = vector.shape_cast %66 : vector<1x1x128x128xbf16> to vector<128x128xbf16>
    %cst_70 = arith.constant dense<0.000000e+00> : vector<128x128xf32>
    %68 = tpu.matmul %65, %67, %cst_70 {dimension_numbers = #tpu.dot_dimension_numbers<[1], [0], [0], [1], [0, 0, 1, 1], [], []>} : vector<128x128xbf16>, vector<128x128xbf16>, vector<128x128xf32> -> vector<128x128xf32>
    %69 = arith.addf %63, %68 : vector<128x128xf32>
    %c2_71 = arith.constant 2 : index
    %c0_72 = arith.constant 0 : index
    %c0_73 = arith.constant 0 : index
    %70 = vector.load %arg13[%c2_71, %c0_72, %c0_73] : memref<10x18x128xbf16, #tpu.memory_space<vmem>>, vector<8x16x128xbf16>
    %71 = vector.shape_cast %70 : vector<8x16x128xbf16> to vector<128x128xbf16>
    %c2_74 = arith.constant 2 : index
    %c0_75 = arith.constant 0 : index
    %c0_76 = arith.constant 0 : index
    %c0_77 = arith.constant 0 : index
    %72 = vector.load %arg6[%c2_74, %c0_75, %c0_76, %c0_77] : memref<3x3x128x128xbf16, #tpu.memory_space<vmem>>, vector<1x1x128x128xbf16>
    %73 = vector.shape_cast %72 : vector<1x1x128x128xbf16> to vector<128x128xbf16>
    %cst_78 = arith.constant dense<0.000000e+00> : vector<128x128xf32>
    %74 = tpu.matmul %71, %73, %cst_78 {dimension_numbers = #tpu.dot_dimension_numbers<[1], [0], [0], [1], [0, 0, 1, 1], [], []>} : vector<128x128xbf16>, vector<128x128xbf16>, vector<128x128xf32> -> vector<128x128xf32>
    %75 = arith.addf %69, %74 : vector<128x128xf32>
    %c2_79 = arith.constant 2 : index
    %c1_80 = arith.constant 1 : index
    %c0_81 = arith.constant 0 : index
    %76 = vector.load %arg13[%c2_79, %c1_80, %c0_81] : memref<10x18x128xbf16, #tpu.memory_space<vmem>>, vector<8x16x128xbf16>
    %77 = vector.shape_cast %76 : vector<8x16x128xbf16> to vector<128x128xbf16>
    %c2_82 = arith.constant 2 : index
    %c1_83 = arith.constant 1 : index
    %c0_84 = arith.constant 0 : index
    %c0_85 = arith.constant 0 : index
    %78 = vector.load %arg6[%c2_82, %c1_83, %c0_84, %c0_85] : memref<3x3x128x128xbf16, #tpu.memory_space<vmem>>, vector<1x1x128x128xbf16>
    %79 = vector.shape_cast %78 : vector<1x1x128x128xbf16> to vector<128x128xbf16>
    %cst_86 = arith.constant dense<0.000000e+00> : vector<128x128xf32>
    %80 = tpu.matmul %77, %79, %cst_86 {dimension_numbers = #tpu.dot_dimension_numbers<[1], [0], [0], [1], [0, 0, 1, 1], [], []>} : vector<128x128xbf16>, vector<128x128xbf16>, vector<128x128xf32> -> vector<128x128xf32>
    %81 = arith.addf %75, %80 : vector<128x128xf32>
    %c2_87 = arith.constant 2 : index
    %c2_88 = arith.constant 2 : index
    %c0_89 = arith.constant 0 : index
    %82 = vector.load %arg13[%c2_87, %c2_88, %c0_89] : memref<10x18x128xbf16, #tpu.memory_space<vmem>>, vector<8x16x128xbf16>
    %83 = vector.shape_cast %82 : vector<8x16x128xbf16> to vector<128x128xbf16>
    %c2_90 = arith.constant 2 : index
    %c2_91 = arith.constant 2 : index
    %c0_92 = arith.constant 0 : index
    %c0_93 = arith.constant 0 : index
    %84 = vector.load %arg6[%c2_90, %c2_91, %c0_92, %c0_93] : memref<3x3x128x128xbf16, #tpu.memory_space<vmem>>, vector<1x1x128x128xbf16>
    %85 = vector.shape_cast %84 : vector<1x1x128x128xbf16> to vector<128x128xbf16>
    %cst_94 = arith.constant dense<0.000000e+00> : vector<128x128xf32>
    %86 = tpu.matmul %83, %85, %cst_94 {dimension_numbers = #tpu.dot_dimension_numbers<[1], [0], [0], [1], [0, 0, 1, 1], [], []>} : vector<128x128xbf16>, vector<128x128xbf16>, vector<128x128xf32> -> vector<128x128xf32>
    %87 = arith.addf %81, %86 : vector<128x128xf32>
    %c0_95 = arith.constant 0 : index
    %c0_96 = arith.constant 0 : index
    %88 = vector.load %arg7[%c0_95, %c0_96] : memref<1x128xf32, #tpu.memory_space<vmem>>, vector<1x128xf32>
    %89 = vector.broadcast %88 : vector<1x128xf32> to vector<128x128xf32>
    %90 = arith.mulf %87, %89 : vector<128x128xf32>
    %c0_97 = arith.constant 0 : index
    %c0_98 = arith.constant 0 : index
    %91 = vector.load %arg8[%c0_97, %c0_98] : memref<1x128xf32, #tpu.memory_space<vmem>>, vector<1x128xf32>
    %92 = vector.broadcast %91 : vector<1x128xf32> to vector<128x128xf32>
    %93 = arith.addf %90, %92 : vector<128x128xf32>
    %cst_99 = arith.constant 0.000000e+00 : f32
    %94 = vector.broadcast %cst_99 : f32 to vector<128x128xf32>
    %95 = arith.maximumf %93, %94 : vector<128x128xf32>
    %96 = arith.truncf %95 : vector<128x128xf32> to vector<128x128xbf16>
    %c0_100 = arith.constant 0 : index
    %c0_101 = arith.constant 0 : index
    %97 = vector.load %arg9[%c0_100, %c0_101] : memref<128x128xbf16, #tpu.memory_space<vmem>>, vector<128x128xbf16>
    %cst_102 = arith.constant dense<0.000000e+00> : vector<128x128xf32>
    %98 = tpu.matmul %96, %97, %cst_102 {dimension_numbers = #tpu.dot_dimension_numbers<[1], [0], [0], [1], [0, 0, 1, 1], [], []>} : vector<128x128xbf16>, vector<128x128xbf16>, vector<128x128xf32> -> vector<128x128xf32>
    %c0_103 = arith.constant 0 : index
    %c0_104 = arith.constant 0 : index
    %99 = vector.load %arg10[%c0_103, %c0_104] : memref<1x128xf32, #tpu.memory_space<vmem>>, vector<1x128xf32>
    %100 = vector.broadcast %99 : vector<1x128xf32> to vector<128x128xf32>
    %101 = arith.mulf %98, %100 : vector<128x128xf32>
    %c0_105 = arith.constant 0 : index
    %c0_106 = arith.constant 0 : index
    %102 = vector.load %arg11[%c0_105, %c0_106] : memref<1x128xf32, #tpu.memory_space<vmem>>, vector<1x128xf32>
    %103 = vector.broadcast %102 : vector<1x128xf32> to vector<128x128xf32>
    %104 = arith.addf %101, %103 : vector<128x128xf32>
    %105 = vector.shape_cast %7 : vector<8x16x128xbf16> to vector<128x128xbf16>
    %106 = arith.extf %105 : vector<128x128xbf16> to vector<128x128xf32>
    %107 = arith.addf %104, %106 : vector<128x128xf32>
    %cst_107 = arith.constant 0.000000e+00 : f32
    %108 = vector.broadcast %cst_107 : f32 to vector<128x128xf32>
    %109 = arith.maximumf %107, %108 : vector<128x128xf32>
    %110 = vector.shape_cast %109 : vector<128x128xf32> to vector<8x16x128xf32>
    %111 = arith.truncf %110 : vector<8x16x128xf32> to vector<8x16x128xbf16>
    %c0_108 = arith.constant 0 : index
    %c0_109 = arith.constant 0 : index
    %c0_110 = arith.constant 0 : index
    %c0_111 = arith.constant 0 : index
    %112 = vector.load %arg12[%c0_108, %c0_109, %c0_110, %c0_111] : memref<1x8x16x128xbf16, #tpu.memory_space<vmem>>, vector<1x8x16x128xbf16>
    %113 = vector.shape_cast %112 : vector<1x8x16x128xbf16> to vector<8x16x128xbf16>
    %114 = vector.shape_cast %111 : vector<8x16x128xbf16> to vector<1x8x16x128xbf16>
    tpu.vector_store %arg12[%c0_108, %c0_109, %c0_110, %c0_111], %114 {strides = array<i32>} : memref<1x8x16x128xbf16, #tpu.memory_space<vmem>>, vector<1x8x16x128xbf16>,
    return
  }
  func.func @transform_0(%arg0: i32, %arg1: i32) -> (i32, i32, i32, i32) {
    %c0_i32 = arith.constant 0 : i32
    %c0_i32_0 = arith.constant 0 : i32
    %c0_i32_1 = arith.constant 0 : i32
    %c0_i32_2 = arith.constant 0 : i32
    return %arg0, %c0_i32, %c0_i32_0, %c0_i32_1 : i32, i32, i32, i32
  }
  func.func @transform_1(%arg0: i32, %arg1: i32) -> (i32, i32) {
    %c0_i32 = arith.constant 0 : i32
    %c0_i32_0 = arith.constant 0 : i32
    %c0_i32_1 = arith.constant 0 : i32
    return %c0_i32, %c0_i32_0 : i32, i32
  }
  func.func @transform_2(%arg0: i32, %arg1: i32) -> (i32, i32) {
    %c0_i32 = arith.constant 0 : i32
    %c0_i32_0 = arith.constant 0 : i32
    %c0_i32_1 = arith.constant 0 : i32
    return %c0_i32, %c0_i32_0 : i32, i32
  }
  func.func @transform_3(%arg0: i32, %arg1: i32) -> (i32, i32) {
    %c0_i32 = arith.constant 0 : i32
    %c0_i32_0 = arith.constant 0 : i32
    %c0_i32_1 = arith.constant 0 : i32
    return %c0_i32, %c0_i32_0 : i32, i32
  }
  func.func @transform_4(%arg0: i32, %arg1: i32) -> (i32, i32, i32, i32) {
    %c0_i32 = arith.constant 0 : i32
    %c0_i32_0 = arith.constant 0 : i32
    %c0_i32_1 = arith.constant 0 : i32
    %c0_i32_2 = arith.constant 0 : i32
    %c0_i32_3 = arith.constant 0 : i32
    return %c0_i32, %c0_i32_0, %c0_i32_1, %c0_i32_2 : i32, i32, i32, i32
  }
  func.func @transform_5(%arg0: i32, %arg1: i32) -> (i32, i32) {
    %c0_i32 = arith.constant 0 : i32
    %c0_i32_0 = arith.constant 0 : i32
    %c0_i32_1 = arith.constant 0 : i32
    return %c0_i32, %c0_i32_0 : i32, i32
  }
  func.func @transform_6(%arg0: i32, %arg1: i32) -> (i32, i32) {
    %c0_i32 = arith.constant 0 : i32
    %c0_i32_0 = arith.constant 0 : i32
    %c0_i32_1 = arith.constant 0 : i32
    return %c0_i32, %c0_i32_0 : i32, i32
  }
  func.func @transform_7(%arg0: i32, %arg1: i32) -> (i32, i32) {
    %c0_i32 = arith.constant 0 : i32
    %c0_i32_0 = arith.constant 0 : i32
    %c0_i32_1 = arith.constant 0 : i32
    return %c0_i32, %c0_i32_0 : i32, i32
  }
  func.func @transform_8(%arg0: i32, %arg1: i32) -> (i32, i32) {
    %c0_i32 = arith.constant 0 : i32
    %c0_i32_0 = arith.constant 0 : i32
    %c0_i32_1 = arith.constant 0 : i32
    return %c0_i32, %c0_i32_0 : i32, i32
  }
  func.func @transform_9(%arg0: i32, %arg1: i32) -> (i32, i32) {
    %c0_i32 = arith.constant 0 : i32
    %c0_i32_0 = arith.constant 0 : i32
    %c0_i32_1 = arith.constant 0 : i32
    return %c0_i32, %c0_i32_0 : i32, i32
  }
  func.func @transform_10(%arg0: i32, %arg1: i32) -> (i32, i32, i32, i32) {
    %c0_i32 = arith.constant 0 : i32
    %c0_i32_0 = arith.constant 0 : i32
    %c0_i32_1 = arith.constant 0 : i32
    return %arg0, %arg1, %c0_i32, %c0_i32_0 : i32, i32, i32, i32
  }
}

</mosaic_0001>

<llo_original>
// kernel: tpu_custom_call.1
$region0: #{tpu_custom_call.1}
  #allocation0 [shape = 'u32[]', space=smem, size = 0x4, offset = 0x4, fixed_abs, tag = 'smem constant byte address 0x4 - core index']
  #allocation1 [shape = 'u32[72,128]{1,0:T(1,128)}', space=vmem, size = 0x9000, scoped, tag = 'internal scratch']
  #allocation2 [shape = 'bf16[10,18,128]{2,1,0:T(8,128)(2,1)}', space=vmem, size = 0xf000, scoped, tag = 'scratch operand']
  %s0 = inlined_call_operand.hbm [shape: bf16[2,16,16,128], index: 0, kind: input, shape index: {}]
  %s1 = inlined_call_operand.hbm [shape: bf16[128,128], index: 1, kind: input, shape index: {}]
  %s2 = inlined_call_operand.vmem [shape: f32[1,128], index: 2, kind: input, shape index: {}]
  %s3 = inlined_call_operand.vmem [shape: f32[1,128], index: 3, kind: input, shape index: {}]
  %s4 = inlined_call_operand.hbm [shape: bf16[3,3,128,128], index: 4, kind: input, shape index: {}]
  %s5 = inlined_call_operand.vmem [shape: f32[1,128], index: 5, kind: input, shape index: {}]
  %s6 = inlined_call_operand.vmem [shape: f32[1,128], index: 6, kind: input, shape index: {}]
  %s7 = inlined_call_operand.hbm [shape: bf16[128,128], index: 7, kind: input, shape index: {}]
  %s8 = inlined_call_operand.vmem [shape: f32[1,128], index: 8, kind: input, shape index: {}]
  %s9 = inlined_call_operand.vmem [shape: f32[1,128], index: 9, kind: input, shape index: {}]
  %s10 = inlined_call_operand.hbm [shape: bf16[2,16,16,128], index: 10, kind: output, shape index: {}]
  %s11 = sld [smem:[#allocation0]]
  $region105: #{tpu_custom_call.1} parent=0
    _
  %s13 = ssub.s32 1, %s11
  %s14 = scalar_select 0, %s13, %s11
  $region1: #{tpu_custom_call.1} parent=0
    #allocation3 [shape = 'u8[131072]{0}', space=vmem, size = 0x20000, scoped, tag = 'input window, operand 0']
    #allocation4 [shape = 's32[2]{0}', space=sflag, size = 0x8, scoped, tag = 'scoped memory for tpu_custom_call.1']
    #allocation5 [shape = 's32[2]{0}', space=sflag, size = 0x8, scoped, tag = 'scoped memory for tpu_custom_call.1']
    #allocation6 [shape = 'u8[32768]{0}', space=vmem, size = 0x8000, scoped, tag = 'input window, operand 1, single buffered']
    #allocation7 [shape = 's32[1]{0}', space=sflag, size = 0x4, scoped, tag = 'scoped memory for tpu_custom_call.1']
    #allocation8 [shape = 'u8[294912]{0}', space=vmem, size = 0x48000, scoped, tag = 'input window, operand 4, single buffered']
    #allocation9 [shape = 'u8[32768]{0}', space=vmem, size = 0x8000, scoped, tag = 'input window, operand 7, single buffered']
    #allocation10 [shape = 's32[1]{0}', space=sflag, size = 0x4, scoped, tag = 'scoped memory for tpu_custom_call.1']
    #allocation11 [shape = 'u8[65536]{0}', space=vmem, size = 0x10000, scoped, tag = 'output window, operand 0']
    %15 = vsyncpa [#allocation4], 0
    %s16 = scalar_lea.sflag [#allocation4], 1
    %17 = vsyncpa %s16, 0
    %18 = vsyncpa [#allocation7], 0
    %19 = vsyncpa [#allocation10], 0
    %20 = vsyncpa [#allocation5], 0
    %s21 = scalar_lea.sflag [#allocation5], 1
    %22 = vsyncpa %s21, 0
    loop: start=0, step=1, limit=6
    $region2: #{tpu_custom_call.1} parent=1 // loop_pre_header
      _
    $region3: #{tpu_custom_call.1} parent=1 // loop_header
      %s24 = sphi 0, %s28
      %p25 = scmp.ge.s32.totalorder %s24, 6
      %s31 = sphi 0, %s43
      %s32 = sphi 0, %s39
      %s33 = sphi 0, %s31
      %s34 = sphi 0, %s32
      %s35 = sphi 0, %s33
      %s36 = sphi 0, %s34
      %s46 = sphi 0, %s48
      %s49 = sphi 0, %s46
      %s50 = sphi 0, %s49
      %s66 = sphi 0, %s50
      %s70 = sphi 0, %s70
      %s72 = sphi 0, %s70
      %s73 = sphi 0, %s72
      %s87 = sphi 0, %s73
      %s91 = sphi 0, %s91
      %s93 = sphi 0, %s91
      %s94 = sphi 0, %s93
      %s108 = sphi 0, %s94
      %s112 = sphi 0, %s112
      %s114 = sphi 0, %s112
      %s115 = sphi 0, %s114
      %s129 = sphi 0, %s115
      %s133 = sphi 0, %s133
      %s135 = sphi 0, %s133
      %s136 = sphi 0, %s135
      %s150 = sphi 0, %s136
      %s154 = sphi 0, %s154
      %s156 = sphi 0, %s154
      %s157 = sphi 0, %s156
      %s171 = sphi 0, %s157
      %s175 = sphi 0, %s175
      %s177 = sphi 0, %s175
      %s178 = sphi 0, %s177
      %s192 = sphi 0, %s178
      %s196 = sphi 0, %s196
      %s198 = sphi 0, %s196
      %s199 = sphi 0, %s198
      %s213 = sphi 0, %s199
      %s217 = sphi 0, %s217
      %s219 = sphi 0, %s217
      %s220 = sphi 0, %s219
      %s234 = sphi 0, %s220
      %s238 = sphi 0, %s238
      %s240 = sphi 0, %s238
      %s241 = sphi 0, %s240
      %s255 = sphi 0, %s241
      %s263 = sphi 0, %s265
      %s266 = sphi 0, %s263
      %s267 = sphi 0, %s266
      %s283 = sphi 0, %s267
    $region4: #{tpu_custom_call.1} parent=1 // loop_header_branch
      %27 = sbr.rel (%p25) target = $region8
    $region5: #{tpu_custom_call.1} parent=1 // loop_body
      %s29 = ssub.s32 %s24, 1
      %s30 = ssub.s32 %s24, 2
      %s37 = sadd.s32 1, %s32
      %p38 = scmp.ge.s32.totalorder %s37, 2
      %s39 = scalar_select %p38, 0, %s37
      %s40 = sadd.s32 1, %s31
      %s41 = scalar_select %p38, %s40, %s31
      %p42 = scmp.ge.s32.totalorder %s41, 2
      %s43 = scalar_select %p42, 0, %s41
      %s44 = ssub.s32 %s31, %s43
      %p45 = scmp.eq.s32.totalorder %s44, 0
      %s47 = sadd.s32 %s46, 1
      %s48 = scalar_select %p45, %s46, %s47
      %p51 = pneg %p45
      %p52 = scmp.eq.s32.totalorder %s24, 3
      %p53 = por %p51, %p52
      %p54 = scmp.ne.s32.totalorder %s46, %s49
      %p55 = scmp.eq.s32.totalorder %s24, 0
      %p56 = por %p54, %p55
      %p57 = scmp.ne.s32.totalorder %s46, %s49
      %p58 = scmp.eq.s32.totalorder %s29, 3
      %p59 = por %p57, %p58
      %p60 = scmp.ne.s32.totalorder %s49, %s50
      %p61 = scmp.eq.s32.totalorder %s29, 0
      %p62 = por %p60, %p61
      %p63 = scmp.ne.s32.totalorder %s49, %s50
      %p64 = scmp.eq.s32.totalorder %s30, 3
      %p65 = por %p63, %p64
      %p67 = scmp.ne.s32.totalorder %s50, %s66
      %p68 = scmp.eq.s32.totalorder %s30, 0
      %p69 = por %p67, %p68
      %s71 = sadd.s32 %s70, 1
      %p74 = scmp.eq.s32.totalorder %s24, 3
      %p75 = scmp.ne.s32.totalorder %s70, %s72
      %p76 = scmp.eq.s32.totalorder %s24, 0
      %p77 = por %p75, %p76
      %p78 = scmp.ne.s32.totalorder %s70, %s72
      %p79 = scmp.eq.s32.totalorder %s29, 3
      %p80 = por %p78, %p79
      %p81 = scmp.ne.s32.totalorder %s72, %s73
      %p82 = scmp.eq.s32.totalorder %s29, 0
      %p83 = por %p81, %p82
      %p84 = scmp.ne.s32.totalorder %s72, %s73
      %p85 = scmp.eq.s32.totalorder %s30, 3
      %p86 = por %p84, %p85
      %p88 = scmp.ne.s32.totalorder %s73, %s87
      %p89 = scmp.eq.s32.totalorder %s30, 0
      %p90 = por %p88, %p89
      %s92 = sadd.s32 %s91, 1
      %p95 = scmp.eq.s32.totalorder %s24, 3
      %p96 = scmp.ne.s32.totalorder %s91, %s93
      %p97 = scmp.eq.s32.totalorder %s24, 0
      %p98 = por %p96, %p97
      %p99 = scmp.ne.s32.totalorder %s91, %s93
      %p100 = scmp.eq.s32.totalorder %s29, 3
      %p101 = por %p99, %p100
      %p102 = scmp.ne.s32.totalorder %s93, %s94
      %p103 = scmp.eq.s32.totalorder %s29, 0
      %p104 = por %p102, %p103
      %p105 = scmp.ne.s32.totalorder %s93, %s94
      %p106 = scmp.eq.s32.totalorder %s30, 3
      %p107 = por %p105, %p106
      %p109 = scmp.ne.s32.totalorder %s94, %s108
      %p110 = scmp.eq.s32.totalorder %s30, 0
      %p111 = por %p109, %p110
      %s113 = sadd.s32 %s112, 1
      %p116 = scmp.eq.s32.totalorder %s24, 3
      %p117 = scmp.ne.s32.totalorder %s112, %s114
      %p118 = scmp.eq.s32.totalorder %s24, 0
      %p119 = por %p117, %p118
      %p120 = scmp.ne.s32.totalorder %s112, %s114
      %p121 = scmp.eq.s32.totalorder %s29, 3
      %p122 = por %p120, %p121
      %p123 = scmp.ne.s32.totalorder %s114, %s115
      %p124 = scmp.eq.s32.totalorder %s29, 0
      %p125 = por %p123, %p124
      %p126 = scmp.ne.s32.totalorder %s114, %s115
      %p127 = scmp.eq.s32.totalorder %s30, 3
      %p128 = por %p126, %p127
      %p130 = scmp.ne.s32.totalorder %s115, %s129
      %p131 = scmp.eq.s32.totalorder %s30, 0
      %p132 = por %p130, %p131
      %s134 = sadd.s32 %s133, 1
      %p137 = scmp.eq.s32.totalorder %s24, 3
      %p138 = scmp.ne.s32.totalorder %s133, %s135
      %p139 = scmp.eq.s32.totalorder %s24, 0
      %p140 = por %p138, %p139
      %p141 = scmp.ne.s32.totalorder %s133, %s135
      %p142 = scmp.eq.s32.totalorder %s29, 3
      %p143 = por %p141, %p142
      %p144 = scmp.ne.s32.totalorder %s135, %s136
      %p145 = scmp.eq.s32.totalorder %s29, 0
      %p146 = por %p144, %p145
      %p147 = scmp.ne.s32.totalorder %s135, %s136
      %p148 = scmp.eq.s32.totalorder %s30, 3
      %p149 = por %p147, %p148
      %p151 = scmp.ne.s32.totalorder %s136, %s150
      %p152 = scmp.eq.s32.totalorder %s30, 0
      %p153 = por %p151, %p152
      %s155 = sadd.s32 %s154, 1
      %p158 = scmp.eq.s32.totalorder %s24, 3
      %p159 = scmp.ne.s32.totalorder %s154, %s156
      %p160 = scmp.eq.s32.totalorder %s24, 0
      %p161 = por %p159, %p160
      %p162 = scmp.ne.s32.totalorder %s154, %s156
      %p163 = scmp.eq.s32.totalorder %s29, 3
      %p164 = por %p162, %p163
      %p165 = scmp.ne.s32.totalorder %s156, %s157
      %p166 = scmp.eq.s32.totalorder %s29, 0
      %p167 = por %p165, %p166
      %p168 = scmp.ne.s32.totalorder %s156, %s157
      %p169 = scmp.eq.s32.totalorder %s30, 3
      %p170 = por %p168, %p169
      %p172 = scmp.ne.s32.totalorder %s157, %s171
      %p173 = scmp.eq.s32.totalorder %s30, 0
      %p174 = por %p172, %p173
      %s176 = sadd.s32 %s175, 1
      %p179 = scmp.eq.s32.totalorder %s24, 3
      %p180 = scmp.ne.s32.totalorder %s175, %s177
      %p181 = scmp.eq.s32.totalorder %s24, 0
      %p182 = por %p180, %p181
      %p183 = scmp.ne.s32.totalorder %s175, %s177
      %p184 = scmp.eq.s32.totalorder %s29, 3
      %p185 = por %p183, %p184
      %p186 = scmp.ne.s32.totalorder %s177, %s178
      %p187 = scmp.eq.s32.totalorder %s29, 0
      %p188 = por %p186, %p187
      %p189 = scmp.ne.s32.totalorder %s177, %s178
      %p190 = scmp.eq.s32.totalorder %s30, 3
      %p191 = por %p189, %p190
      %p193 = scmp.ne.s32.totalorder %s178, %s192
      %p194 = scmp.eq.s32.totalorder %s30, 0
      %p195 = por %p193, %p194
      %s197 = sadd.s32 %s196, 1
      %p200 = scmp.eq.s32.totalorder %s24, 3
      %p201 = scmp.ne.s32.totalorder %s196, %s198
      %p202 = scmp.eq.s32.totalorder %s24, 0
      %p203 = por %p201, %p202
      %p204 = scmp.ne.s32.totalorder %s196, %s198
      %p205 = scmp.eq.s32.totalorder %s29, 3
      %p206 = por %p204, %p205
      %p207 = scmp.ne.s32.totalorder %s198, %s199
      %p208 = scmp.eq.s32.totalorder %s29, 0
      %p209 = por %p207, %p208
      %p210 = scmp.ne.s32.totalorder %s198, %s199
      %p211 = scmp.eq.s32.totalorder %s30, 3
      %p212 = por %p210, %p211
      %p214 = scmp.ne.s32.totalorder %s199, %s213
      %p215 = scmp.eq.s32.totalorder %s30, 0
      %p216 = por %p214, %p215
      %s218 = sadd.s32 %s217, 1
      %p221 = scmp.eq.s32.totalorder %s24, 3
      %p222 = scmp.ne.s32.totalorder %s217, %s219
      %p223 = scmp.eq.s32.totalorder %s24, 0
      %p224 = por %p222, %p223
      %p225 = scmp.ne.s32.totalorder %s217, %s219
      %p226 = scmp.eq.s32.totalorder %s29, 3
      %p227 = por %p225, %p226
      %p228 = scmp.ne.s32.totalorder %s219, %s220
      %p229 = scmp.eq.s32.totalorder %s29, 0
      %p230 = por %p228, %p229
      %p231 = scmp.ne.s32.totalorder %s219, %s220
      %p232 = scmp.eq.s32.totalorder %s30, 3
      %p233 = por %p231, %p232
      %p235 = scmp.ne.s32.totalorder %s220, %s234
      %p236 = scmp.eq.s32.totalorder %s30, 0
      %p237 = por %p235, %p236
      %s239 = sadd.s32 %s238, 1
      %p242 = scmp.eq.s32.totalorder %s24, 3
      %p243 = scmp.ne.s32.totalorder %s238, %s240
      %p244 = scmp.eq.s32.totalorder %s24, 0
      %p245 = por %p243, %p244
      %p246 = scmp.ne.s32.totalorder %s238, %s240
      %p247 = scmp.eq.s32.totalorder %s29, 3
      %p248 = por %p246, %p247
      %p249 = scmp.ne.s32.totalorder %s240, %s241
      %p250 = scmp.eq.s32.totalorder %s29, 0
      %p251 = por %p249, %p250
      %p252 = scmp.ne.s32.totalorder %s240, %s241
      %p253 = scmp.eq.s32.totalorder %s30, 3
      %p254 = por %p252, %p253
      %p256 = scmp.ne.s32.totalorder %s241, %s255
      %p257 = scmp.eq.s32.totalorder %s30, 0
      %p258 = por %p256, %p257
      %s259 = ssub.s32 %s31, %s43
      %s260 = ssub.s32 %s32, %s39
      %s261 = sor.u32 %s259, %s260
      %p262 = scmp.eq.s32.totalorder %s261, 0
      %s264 = sadd.s32 %s263, 1
      %s265 = scalar_select %p262, %s263, %s264
      %p268 = pneg %p262
      %p269 = scmp.eq.s32.totalorder %s24, 3
      %p270 = por %p268, %p269
      %p271 = scmp.ne.s32.totalorder %s263, %s266
      %p272 = scmp.eq.s32.totalorder %s24, 0
      %p273 = por %p271, %p272
      %p274 = scmp.ne.s32.totalorder %s263, %s266
      %p275 = scmp.eq.s32.totalorder %s29, 3
      %p276 = por %p274, %p275
      %p277 = scmp.ne.s32.totalorder %s266, %s267
      %p278 = scmp.eq.s32.totalorder %s29, 0
      %p279 = por %p277, %p278
      %p280 = scmp.ne.s32.totalorder %s266, %s267
      %p281 = scmp.eq.s32.totalorder %s30, 3
      %p282 = por %p280, %p281
      %p284 = scmp.ne.s32.totalorder %s267, %s283
      %p285 = scmp.eq.s32.totalorder %s30, 0
      %p286 = por %p284, %p285
      %p287 = scmp.le.s32.totalorder 1, %s24
      %p288 = scmp.lt.s32.totalorder %s24, 5
      %p289 = pnand %p287, %p288
      %p290 = pneg %p289
      // Predicated region
      $region9: #{tpu_custom_call.1} parent=5 // pred_check
        _
      $region10: #{tpu_custom_call.1} parent=5 // pred_check_branch
        %292 = sbr.rel (%p289) target = $region12
      $region11: #{tpu_custom_call.1} parent=5 // pred_region
        %s293 = ssub.s32 %s24, 1
        // Predicated region
        $region13: #{tpu_custom_call.1} parent=11 // pred_check
          %p294 = pneg %p83
        $region14: #{tpu_custom_call.1} parent=11 // pred_check_branch
          %296 = sbr.rel (%p294) target = $region16
        $region15: #{tpu_custom_call.1} parent=11 // pred_region
          %298 = vsyncadd [#allocation7], 0
          %s299 = sshll.u32 %s1, 4
          %s300 = int_to_ptr.hbm [resolvable:$true] %s299
          %s301 = sshll.u32 [#allocation6], 4
          %s302 = int_to_ptr.vmem [resolvable:$true] %s301
          %307 = dma.hbm_to_vmem [thread:$0]  %s300, 1024, %s302, [#allocation7], 64, 64, 4
        $region16: #{tpu_custom_call.1} parent=11 // pred_fallthru
          _
        // Predicated region
        $region17: #{tpu_custom_call.1} parent=11 // pred_check
          %p308 = pneg %p104
        $region18: #{tpu_custom_call.1} parent=11 // pred_check_branch
          %310 = sbr.rel (%p308) target = $region20
        $region19: #{tpu_custom_call.1} parent=11 // pred_region
          _
        $region20: #{tpu_custom_call.1} parent=11 // pred_fallthru
          _
        // Predicated region
        $region21: #{tpu_custom_call.1} parent=11 // pred_check
          %p311 = pneg %p125
        $region22: #{tpu_custom_call.1} parent=11 // pred_check_branch
          %313 = sbr.rel (%p311) target = $region24
        $region23: #{tpu_custom_call.1} parent=11 // pred_region
          _
        $region24: #{tpu_custom_call.1} parent=11 // pred_fallthru
          _
        // Predicated region
        $region25: #{tpu_custom_call.1} parent=11 // pred_check
          %p314 = pneg %p146
        $region26: #{tpu_custom_call.1} parent=11 // pred_check_branch
          %316 = sbr.rel (%p314) target = $region28
        $region27: #{tpu_custom_call.1} parent=11 // pred_region
          %318 = vsyncadd [#allocation7], 0
          %s319 = sshll.u32 %s4, 4
          %s320 = int_to_ptr.hbm [resolvable:$true] %s319
          %s321 = sshll.u32 [#allocation8], 4
          %s322 = int_to_ptr.vmem [resolvable:$true] %s321
          %327 = dma.hbm_to_vmem [thread:$0]  %s320, 9216, %s322, [#allocation7], 64, 64, 4
        $region28: #{tpu_custom_call.1} parent=11 // pred_fallthru
          _
        // Predicated region
        $region29: #{tpu_custom_call.1} parent=11 // pred_check
          %p328 = pneg %p167
        $region30: #{tpu_custom_call.1} parent=11 // pred_check_branch
          %330 = sbr.rel (%p328) target = $region32
        $region31: #{tpu_custom_call.1} parent=11 // pred_region
          _
        $region32: #{tpu_custom_call.1} parent=11 // pred_fallthru
          _
        // Predicated region
        $region33: #{tpu_custom_call.1} parent=11 // pred_check
          %p331 = pneg %p188
        $region34: #{tpu_custom_call.1} parent=11 // pred_check_branch
          %333 = sbr.rel (%p331) target = $region36
        $region35: #{tpu_custom_call.1} parent=11 // pred_region
          _
        $region36: #{tpu_custom_call.1} parent=11 // pred_fallthru
          _
        // Predicated region
        $region37: #{tpu_custom_call.1} parent=11 // pred_check
          %p334 = pneg %p209
        $region38: #{tpu_custom_call.1} parent=11 // pred_check_branch
          %336 = sbr.rel (%p334) target = $region40
        $region39: #{tpu_custom_call.1} parent=11 // pred_region
          %338 = vsyncadd [#allocation10], 0
          %s339 = sshll.u32 %s7, 4
          %s340 = int_to_ptr.hbm [resolvable:$true] %s339
          %s341 = sshll.u32 [#allocation9], 4
          %s342 = int_to_ptr.vmem [resolvable:$true] %s341
          %347 = dma.hbm_to_vmem [thread:$0]  %s340, 1024, %s342, [#allocation10], 64, 64, 4
        $region40: #{tpu_custom_call.1} parent=11 // pred_fallthru
          _
        // Predicated region
        $region41: #{tpu_custom_call.1} parent=11 // pred_check
          %p348 = pneg %p230
        $region42: #{tpu_custom_call.1} parent=11 // pred_check_branch
          %350 = sbr.rel (%p348) target = $region44
        $region43: #{tpu_custom_call.1} parent=11 // pred_region
          _
        $region44: #{tpu_custom_call.1} parent=11 // pred_fallthru
          _
        // Predicated region
        $region45: #{tpu_custom_call.1} parent=11 // pred_check
          %p351 = pneg %p251
        $region46: #{tpu_custom_call.1} parent=11 // pred_check_branch
          %353 = sbr.rel (%p351) target = $region48
        $region47: #{tpu_custom_call.1} parent=11 // pred_region
          _
        $region48: #{tpu_custom_call.1} parent=11 // pred_fallthru
          _
      $region12: #{tpu_custom_call.1} parent=5 // pred_fallthru
        _
      %p354 = scmp.lt.s32.totalorder %s24, 4
      // Predicated region
      $region49: #{tpu_custom_call.1} parent=5 // pred_check
        %p355 = pneg %p354
      $region50: #{tpu_custom_call.1} parent=5 // pred_check_branch
        %357 = sbr.rel (%p355) target = $region52
      $region51: #{tpu_custom_call.1} parent=5 // pred_region
        // Predicated region
        $region53: #{tpu_custom_call.1} parent=51 // pred_check
          %p358 = pneg %p56
        $region54: #{tpu_custom_call.1} parent=51 // pred_check_branch
          %360 = sbr.rel (%p358) target = $region56
        $region55: #{tpu_custom_call.1} parent=51 // pred_region
          %s361 = sand.u32 %s46, 1
          %s362 = scalar_lea.sflag [#allocation4], %s361
          %s363 = sand.u32 %s46, 1
          %s364 = smul.addr %s363, 128
          %s365 = scalar_lea.vmem [#allocation3], %s364
          %367 = vsyncadd %s362, 0
          %s368 = smul.addr %s31, 32
          %s369 = smul.addr %s368, 4
          %s370 = scalar_lea.hbm %s0, %s369
          %s371 = sshll.u32 %s370, 4
          %s372 = int_to_ptr.hbm [resolvable:$true] %s371
          %s373 = sshll.u32 %s365, 4
          %s374 = int_to_ptr.vmem [resolvable:$true] %s373
          %379 = dma.hbm_to_vmem [thread:$0]  %s372, 2048, %s374, %s362, 64, 64, 4
        $region56: #{tpu_custom_call.1} parent=51 // pred_fallthru
          _
      $region52: #{tpu_custom_call.1} parent=5 // pred_fallthru
        _
      %p380 = scmp.le.s32.totalorder 1, %s24
      %p381 = scmp.lt.s32.totalorder %s24, 5
      %p382 = pnand %p380, %p381
      %p383 = pneg %p382
      // Predicated region
      $region57: #{tpu_custom_call.1} parent=5 // pred_check
        _
      $region58: #{tpu_custom_call.1} parent=5 // pred_check_branch
        %385 = sbr.rel (%p382) target = $region60
      $region59: #{tpu_custom_call.1} parent=5 // pred_region
        %s386 = ssub.s32 %s24, 1
        %s387 = sand.u32 %s49, 1
        %s388 = scalar_lea.sflag [#allocation4], %s387
        %s389 = sand.u32 %s49, 1
        %s390 = smul.addr %s389, 128
        %s391 = scalar_lea.vmem [#allocation3], %s390
        // Predicated region
        $region61: #{tpu_custom_call.1} parent=59 // pred_check
          %p392 = pneg %p62
        $region62: #{tpu_custom_call.1} parent=59 // pred_check_branch
          %394 = sbr.rel (%p392) target = $region64
        $region63: #{tpu_custom_call.1} parent=59 // pred_region
          %396 = dma.done %s388, 2048
        $region64: #{tpu_custom_call.1} parent=59 // pred_fallthru
          _
        // Predicated region
        $region65: #{tpu_custom_call.1} parent=59 // pred_check
          %p397 = pneg %p83
        $region66: #{tpu_custom_call.1} parent=59 // pred_check_branch
          %399 = sbr.rel (%p397) target = $region68
        $region67: #{tpu_custom_call.1} parent=59 // pred_region
          %401 = dma.done [#allocation7], 1024
        $region68: #{tpu_custom_call.1} parent=59 // pred_fallthru
          _
        // Predicated region
        $region69: #{tpu_custom_call.1} parent=59 // pred_check
          %p402 = pneg %p146
        $region70: #{tpu_custom_call.1} parent=59 // pred_check_branch
          %404 = sbr.rel (%p402) target = $region72
        $region71: #{tpu_custom_call.1} parent=59 // pred_region
          %406 = dma.done [#allocation7], 9216
        $region72: #{tpu_custom_call.1} parent=59 // pred_fallthru
          _
        // Predicated region
        $region73: #{tpu_custom_call.1} parent=59 // pred_check
          %p407 = pneg %p209
        $region74: #{tpu_custom_call.1} parent=59 // pred_check_branch
          %409 = sbr.rel (%p407) target = $region76
        $region75: #{tpu_custom_call.1} parent=59 // pred_region
          %411 = dma.done [#allocation10], 1024
        $region76: #{tpu_custom_call.1} parent=59 // pred_fallthru
          _
        %s412 = sand.u32 %s49, 1
        %s413 = scalar_lea.sflag [#allocation4], %s412
        %s414 = sand.u32 %s49, 1
        %s415 = smul.addr %s414, 128
        %s416 = scalar_lea.vmem [#allocation3], %s415
        %p417 = pneg %p62
        %p418 = pneg %p59
        %p419 = pneg %p83
        %p420 = pneg %p80
        %p421 = pneg %p104
        %p422 = pneg %p101
        %p423 = pneg %p125
        %p424 = pneg %p122
        %p425 = pneg %p146
        %p426 = pneg %p143
        %p427 = pneg %p167
        %p428 = pneg %p164
        %p429 = pneg %p188
        %p430 = pneg %p185
        %p431 = pneg %p209
        %p432 = pneg %p206
        %p433 = pneg %p230
        %p434 = pneg %p227
        %p435 = pneg %p251
        %p436 = pneg %p248
        %p437 = pneg %p279
        %p438 = pneg %p276
        %s439 = sand.u32 %s266, 1
        %s440 = scalar_lea.sflag [#allocation5], %s439
        %s441 = sand.u32 %s266, 1
        %s442 = smul.addr %s441, 64
        %s443 = scalar_lea.vmem [#allocation11], %s442
        %s444 = smul.u32 8, %s34
        %s446 = smul.u32 %s34, 8
        %vm447 = vcmask 1040384
        %vm448 = vsmask.f32 256
        %vm449 = vmand %vm447, %vm448
        %v450 = vld [vmem:[#allocation2] sm:$0x1]
        %v451 = vsel %vm449, 0, %v450
        %452 = vst [vmem:[#allocation2] sm:$0x1] %v451
        %v453 = vld [vmem:[#allocation2 + $0xc] sm:$0x1]
        %v454 = vsel %vm449, 0, %v453
        %455 = vst [vmem:[#allocation2 + $0xc] sm:$0x1] %v454
        %v456 = vld [vmem:[#allocation2 + $0x18] sm:$0x1]
        %v457 = vsel %vm449, 0, %v456
        %458 = vst [vmem:[#allocation2 + $0x18] sm:$0x1] %v457
        %v459 = vld [vmem:[#allocation2 + $0x24] sm:$0x1]
        %v460 = vsel %vm449, 0, %v459
        %461 = vst [vmem:[#allocation2 + $0x24] sm:$0x1] %v460
        %v462 = vld [vmem:[#allocation2 + $0x30] sm:$0x1]
        %v463 = vsel %vm449, 0, %v462
        %464 = vst [vmem:[#allocation2 + $0x30] sm:$0x1] %v463
        %v465 = vld [vmem:[#allocation2 + $0x3c] sm:$0x1]
        %v466 = vsel %vm449, 0, %v465
        %467 = vst [vmem:[#allocation2 + $0x3c] sm:$0x1] %v466
        %v468 = vld [vmem:[#allocation2 + $0x48] sm:$0x1]
        %v469 = vsel %vm449, 0, %v468
        %470 = vst [vmem:[#allocation2 + $0x48] sm:$0x1] %v469
        %v471 = vld [vmem:[#allocation2 + $0x54] sm:$0x1]
        %v472 = vsel %vm449, 0, %v471
        %473 = vst [vmem:[#allocation2 + $0x54] sm:$0x1] %v472
        %v474 = vld [vmem:[#allocation2 + $0x60] sm:$0x1]
        %v475 = vsel %vm449, 0, %v474
        %476 = vst [vmem:[#allocation2 + $0x60] sm:$0x1] %v475
        %v477 = vld [vmem:[#allocation2 + $0x6c] sm:$0x1]
        %v478 = vsel %vm449, 0, %v477
        %479 = vst [vmem:[#allocation2 + $0x6c] sm:$0x1] %v478
        %vm480 = vsmask.f32 7938
        %vm481 = vmand %vm447, %vm480
        %v482 = vld [vmem:[#allocation2 + $0x8] sm:$0x1]
        %v483 = vsel %vm481, 0, %v482
        %484 = vst [vmem:[#allocation2 + $0x8] sm:$0x1] %v483
        %v485 = vld [vmem:[#allocation2 + $0x14] sm:$0x1]
        %v486 = vsel %vm481, 0, %v485
        %487 = vst [vmem:[#allocation2 + $0x14] sm:$0x1] %v486
        %v488 = vld [vmem:[#allocation2 + $0x20] sm:$0x1]
        %v489 = vsel %vm481, 0, %v488
        %490 = vst [vmem:[#allocation2 + $0x20] sm:$0x1] %v489
        %v491 = vld [vmem:[#allocation2 + $0x2c] sm:$0x1]
        %v492 = vsel %vm481, 0, %v491
        %493 = vst [vmem:[#allocation2 + $0x2c] sm:$0x1] %v492
        %v494 = vld [vmem:[#allocation2 + $0x38] sm:$0x1]
        %v495 = vsel %vm481, 0, %v494
        %496 = vst [vmem:[#allocation2 + $0x38] sm:$0x1] %v495
        %v497 = vld [vmem:[#allocation2 + $0x44] sm:$0x1]
        %v498 = vsel %vm481, 0, %v497
        %499 = vst [vmem:[#allocation2 + $0x44] sm:$0x1] %v498
        %v500 = vld [vmem:[#allocation2 + $0x50] sm:$0x1]
        %v501 = vsel %vm481, 0, %v500
        %502 = vst [vmem:[#allocation2 + $0x50] sm:$0x1] %v501
        %v503 = vld [vmem:[#allocation2 + $0x5c] sm:$0x1]
        %v504 = vsel %vm481, 0, %v503
        %505 = vst [vmem:[#allocation2 + $0x5c] sm:$0x1] %v504
        %v506 = vld [vmem:[#allocation2 + $0x68] sm:$0x1]
        %v507 = vsel %vm481, 0, %v506
        %508 = vst [vmem:[#allocation2 + $0x68] sm:$0x1] %v507
        %v509 = vld [vmem:[#allocation2 + $0x74] sm:$0x1]
        %v510 = vsel %vm481, 0, %v509
        %511 = vst [vmem:[#allocation2 + $0x74] sm:$0x1] %v510
        %s512 = smul.u32 %s446, 2
        %s513 = smul.addr %s512, 4
        %s514 = scalar_lea.vmem %s391, %s513 [#allocation3]
        %v515 = vld [vmem:[%s514] sm:$0xf]
        %v516 = vld [vmem:[%s514 + $0x4] sm:$0xf]
        %v517 = vld [vmem:[%s514 + $0x8] sm:$0xf]
        %v518 = vld [vmem:[%s514 + $0xc] sm:$0xf]
        %v519 = vld [vmem:[%s514 + $0x10] sm:$0xf]
        %v520 = vld [vmem:[%s514 + $0x14] sm:$0xf]
        %v521 = vld [vmem:[%s514 + $0x18] sm:$0xf]
        %v522 = vld [vmem:[%s514 + $0x1c] sm:$0xf]
        %v523 = vld [vmem:[%s514 + $0x20] sm:$0xf]
        %v524 = vld [vmem:[%s514 + $0x24] sm:$0xf]
        %v525 = vld [vmem:[%s514 + $0x28] sm:$0xf]
        %v526 = vld [vmem:[%s514 + $0x2c] sm:$0xf]
        %v527 = vld [vmem:[%s514 + $0x30] sm:$0xf]
        %v528 = vld [vmem:[%s514 + $0x34] sm:$0xf]
        %v529 = vld [vmem:[%s514 + $0x38] sm:$0xf]
        %v530 = vld [vmem:[%s514 + $0x3c] sm:$0xf]
        %v531 = vld [vmem:[#allocation6] sm:$0xf]
        %v532 = vld [vmem:[#allocation6 + $0x4] sm:$0xf]
        %v533 = vld [vmem:[#allocation6 + $0x8] sm:$0xf]
        %v534 = vld [vmem:[#allocation6 + $0xc] sm:$0xf]
        %v535 = vld [vmem:[#allocation6 + $0x10] sm:$0xf]
        %v536 = vld [vmem:[#allocation6 + $0x14] sm:$0xf]
        %v537 = vld [vmem:[#allocation6 + $0x18] sm:$0xf]
        %v538 = vld [vmem:[#allocation6 + $0x1c] sm:$0xf]
        %v539 = vld [vmem:[#allocation6 + $0x20] sm:$0xf]
        %v540 = vld [vmem:[#allocation6 + $0x24] sm:$0xf]
        %v541 = vld [vmem:[#allocation6 + $0x28] sm:$0xf]
        %v542 = vld [vmem:[#allocation6 + $0x2c] sm:$0xf]
        %v543 = vld [vmem:[#allocation6 + $0x30] sm:$0xf]
        %v544 = vld [vmem:[#allocation6 + $0x34] sm:$0xf]
        %v545 = vld [vmem:[#allocation6 + $0x38] sm:$0xf]
        %v546 = vld [vmem:[#allocation6 + $0x3c] sm:$0xf]
        %v563 = vunpack.c.l.b16 %v515
        %v564 = vunpack.c.l.b16 %v516
        %v565 = vunpack.c.l.b16 %v517
        %v566 = vunpack.c.l.b16 %v518
        %v567 = vunpack.c.l.b16 %v519
        %v568 = vunpack.c.l.b16 %v520
        %v569 = vunpack.c.l.b16 %v521
        %v570 = vunpack.c.l.b16 %v522
        %v571 = vunpack.c.l.b16 %v523
        %v572 = vunpack.c.l.b16 %v524
        %v573 = vunpack.c.l.b16 %v525
        %v574 = vunpack.c.l.b16 %v526
        %v575 = vunpack.c.l.b16 %v527
        %v576 = vunpack.c.l.b16 %v528
        %v577 = vunpack.c.l.b16 %v529
        %v578 = vunpack.c.l.b16 %v530
        %v579 = vpack.c.b16 %v564, %v563
        %v580 = vpack.c.b16 %v566, %v565
        %v581 = vpack.c.b16 %v568, %v567
        %v582 = vpack.c.b16 %v570, %v569
        %v583 = vpack.c.b16 %v572, %v571
        %v584 = vpack.c.b16 %v574, %v573
        %v585 = vpack.c.b16 %v576, %v575
        %v586 = vpack.c.b16 %v578, %v577
        %v611 = vunpack.c.l.b16 %v531
        %v612 = vunpack.c.l.b16 %v532
        %v613 = vunpack.c.l.b16 %v533
        %v614 = vunpack.c.l.b16 %v534
        %v615 = vunpack.c.l.b16 %v535
        %v616 = vunpack.c.l.b16 %v536
        %v617 = vunpack.c.l.b16 %v537
        %v618 = vunpack.c.l.b16 %v538
        %v619 = vunpack.c.l.b16 %v539
        %v620 = vunpack.c.l.b16 %v540
        %v621 = vunpack.c.l.b16 %v541
        %v622 = vunpack.c.l.b16 %v542
        %v623 = vunpack.c.l.b16 %v543
        %v624 = vunpack.c.l.b16 %v544
        %v625 = vunpack.c.l.b16 %v545
        %v626 = vunpack.c.l.b16 %v546
        %v627 = vpack.c.b16 %v612, %v611
        %v628 = vpack.c.b16 %v614, %v613
        %v629 = vpack.c.b16 %v616, %v615
        %v630 = vpack.c.b16 %v618, %v617
        %v631 = vpack.c.b16 %v620, %v619
        %v632 = vpack.c.b16 %v622, %v621
        %v633 = vpack.c.b16 %v624, %v623
        %v634 = vpack.c.b16 %v626, %v625
        %643 = vmatpush.bf16.msra.mxu0 %v634
        %644 = vmatpush.bf16.msra.mxu0 %v633
        %645 = vmatpush.bf16.msra.mxu0 %v632
        %646 = vmatpush.bf16.msra.mxu0 %v631
        %647 = vmatpush.bf16.msra.mxu0 %v630
        %648 = vmatpush.bf16.msra.mxu0 %v629
        %649 = vmatpush.bf16.msra.mxu0 %v628
        %650 = vmatpush.bf16.msra.mxu0 %v627
        %651 = vmatmul.bf16.gmra.mxu0 %v579
        %v652 = vpop.f32.mrf.mxu0
        %v653 = vadd.f32 0.0, %v652
        %v654 = vpop.f32.mrf.mxu0
        %v655 = vadd.f32 0.0, %v654
        %656 = vmatmul.bf16.gmra.mxu0 %v580
        %v657 = vpop.f32.mrf.mxu0
        %v658 = vadd.f32 0.0, %v657
        %v659 = vpop.f32.mrf.mxu0
        %v660 = vadd.f32 0.0, %v659
        %661 = vmatmul.bf16.gmra.mxu0 %v581
        %v662 = vpop.f32.mrf.mxu0
        %v663 = vadd.f32 0.0, %v662
        %v664 = vpop.f32.mrf.mxu0
        %v665 = vadd.f32 0.0, %v664
        %666 = vmatmul.bf16.gmra.mxu0 %v582
        %v667 = vpop.f32.mrf.mxu0
        %v668 = vadd.f32 0.0, %v667
        %v669 = vpop.f32.mrf.mxu0
        %v670 = vadd.f32 0.0, %v669
        %671 = vmatmul.bf16.gmra.mxu0 %v583
        %v672 = vpop.f32.mrf.mxu0
        %v673 = vadd.f32 0.0, %v672
        %v674 = vpop.f32.mrf.mxu0
        %v675 = vadd.f32 0.0, %v674
        %676 = vmatmul.bf16.gmra.mxu0 %v584
        %v677 = vpop.f32.mrf.mxu0
        %v678 = vadd.f32 0.0, %v677
        %v679 = vpop.f32.mrf.mxu0
        %v680 = vadd.f32 0.0, %v679
        %681 = vmatmul.bf16.gmra.mxu0 %v585
        %v682 = vpop.f32.mrf.mxu0
        %v683 = vadd.f32 0.0, %v682
        %v684 = vpop.f32.mrf.mxu0
        %v685 = vadd.f32 0.0, %v684
        %686 = vmatmul.bf16.gmra.mxu0 %v586
        %v687 = vpop.f32.mrf.mxu0
        %v688 = vadd.f32 0.0, %v687
        %v689 = vpop.f32.mrf.mxu0
        %v690 = vadd.f32 0.0, %v689
        %691 = vdwg.mxu0
        %v692 = vld [vmem:[%s2] sm:$0x1]
        %v694 = vperm.slane %v692, 0
        %v696 = vmul.f32 %v653, %v694
        %v697 = vmul.f32 %v655, %v694
        %v698 = vmul.f32 %v658, %v694
        %v699 = vmul.f32 %v660, %v694
        %v700 = vmul.f32 %v663, %v694
        %v701 = vmul.f32 %v665, %v694
        %v702 = vmul.f32 %v668, %v694
        %v703 = vmul.f32 %v670, %v694
        %v704 = vmul.f32 %v673, %v694
        %v705 = vmul.f32 %v675, %v694
        %v706 = vmul.f32 %v678, %v694
        %v707 = vmul.f32 %v680, %v694
        %v708 = vmul.f32 %v683, %v694
        %v709 = vmul.f32 %v685, %v694
        %v710 = vmul.f32 %v688, %v694
        %v711 = vmul.f32 %v690, %v694
        %v712 = vld [vmem:[%s3] sm:$0x1]
        %v714 = vperm.slane %v712, 0
        %v716 = vadd.f32 %v696, %v714
        %v717 = vadd.f32 %v697, %v714
        %v718 = vadd.f32 %v698, %v714
        %v719 = vadd.f32 %v699, %v714
        %v720 = vadd.f32 %v700, %v714
        %v721 = vadd.f32 %v701, %v714
        %v722 = vadd.f32 %v702, %v714
        %v723 = vadd.f32 %v703, %v714
        %v724 = vadd.f32 %v704, %v714
        %v725 = vadd.f32 %v705, %v714
        %v726 = vadd.f32 %v706, %v714
        %v727 = vadd.f32 %v707, %v714
        %v728 = vadd.f32 %v708, %v714
        %v729 = vadd.f32 %v709, %v714
        %v730 = vadd.f32 %v710, %v714
        %v731 = vadd.f32 %v711, %v714
        %v732 = vmax.f32 %v716, 0.0
        %v733 = vmax.f32 %v717, 0.0
        %v734 = vmax.f32 %v718, 0.0
        %v735 = vmax.f32 %v719, 0.0
        %v736 = vmax.f32 %v720, 0.0
        %v737 = vmax.f32 %v721, 0.0
        %v738 = vmax.f32 %v722, 0.0
        %v739 = vmax.f32 %v723, 0.0
        %v740 = vmax.f32 %v724, 0.0
        %v741 = vmax.f32 %v725, 0.0
        %v742 = vmax.f32 %v726, 0.0
        %v743 = vmax.f32 %v727, 0.0
        %v744 = vmax.f32 %v728, 0.0
        %v745 = vmax.f32 %v729, 0.0
        %v746 = vmax.f32 %v730, 0.0
        %v747 = vmax.f32 %v731, 0.0
        %v748 = vpack.c.bf16 %v732, %v732
        %v749 = vpack.c.bf16 %v733, %v733
        %v750 = vpack.c.bf16 %v734, %v734
        %v751 = vpack.c.bf16 %v735, %v735
        %v752 = vpack.c.bf16 %v736, %v736
        %v753 = vpack.c.bf16 %v737, %v737
        %v754 = vpack.c.bf16 %v738, %v738
        %v755 = vpack.c.bf16 %v739, %v739
        %v756 = vpack.c.bf16 %v740, %v740
        %v757 = vpack.c.bf16 %v741, %v741
        %v758 = vpack.c.bf16 %v742, %v742
        %v759 = vpack.c.bf16 %v743, %v743
        %v760 = vpack.c.bf16 %v744, %v744
        %v761 = vpack.c.bf16 %v745, %v745
        %v762 = vpack.c.bf16 %v746, %v746
        %v763 = vpack.c.bf16 %v747, %v747
        %vm764 = vsmask.f32 4368
        %vm765 = vmor %vm448, %vm764
        %v767 = vshrl.u32 %v748, 16
        %v769 = vrot.slane %v767, 7
        %v770 = vshll.u32 %v748, 16
        %v772 = vor.u32 %v769, %v770
        %v773 = vrot.slane %v769, 4
        %v775 = vshrl.u32 %v749, 16
        %v777 = vrot.slane %v775, 7
        %v778 = vshll.u32 %v749, 16
        %v780 = vor.u32 %v777, %v778
        %v781 = vsel %vm765, %v773, %v780
        %v782 = vrot.slane %v777, 4
        %v784 = vshrl.u32 %v750, 16
        %v786 = vrot.slane %v784, 7
        %v787 = vshll.u32 %v750, 16
        %v789 = vor.u32 %v786, %v787
        %v790 = vrot.slane %v786, 4
        %v792 = vshrl.u32 %v751, 16
        %v794 = vrot.slane %v792, 7
        %v795 = vshll.u32 %v751, 16
        %v797 = vor.u32 %v794, %v795
        %v798 = vsel %vm765, %v790, %v797
        %v799 = vrot.slane %v794, 4
        %v801 = vshrl.u32 %v752, 16
        %v803 = vrot.slane %v801, 7
        %v804 = vshll.u32 %v752, 16
        %v806 = vor.u32 %v803, %v804
        %v807 = vrot.slane %v803, 4
        %v809 = vshrl.u32 %v753, 16
        %v811 = vrot.slane %v809, 7
        %v812 = vshll.u32 %v753, 16
        %v814 = vor.u32 %v811, %v812
        %v815 = vsel %vm765, %v807, %v814
        %v816 = vrot.slane %v811, 4
        %v818 = vshrl.u32 %v754, 16
        %v820 = vrot.slane %v818, 7
        %v821 = vshll.u32 %v754, 16
        %v823 = vor.u32 %v820, %v821
        %v824 = vrot.slane %v820, 4
        %v826 = vshrl.u32 %v755, 16
        %v828 = vrot.slane %v826, 7
        %v829 = vshll.u32 %v755, 16
        %v831 = vor.u32 %v828, %v829
        %v832 = vsel %vm765, %v824, %v831
        %v833 = vrot.slane %v828, 4
        %v835 = vshrl.u32 %v756, 16
        %v837 = vrot.slane %v835, 7
        %v838 = vshll.u32 %v756, 16
        %v840 = vor.u32 %v837, %v838
        %v841 = vrot.slane %v837, 4
        %v843 = vshrl.u32 %v757, 16
        %v845 = vrot.slane %v843, 7
        %v846 = vshll.u32 %v757, 16
        %v848 = vor.u32 %v845, %v846
        %v849 = vsel %vm765, %v841, %v848
        %v850 = vrot.slane %v845, 4
        %v852 = vshrl.u32 %v758, 16
        %v854 = vrot.slane %v852, 7
        %v855 = vshll.u32 %v758, 16
        %v857 = vor.u32 %v854, %v855
        %v858 = vrot.slane %v854, 4
        %v860 = vshrl.u32 %v759, 16
        %v862 = vrot.slane %v860, 7
        %v863 = vshll.u32 %v759, 16
        %v865 = vor.u32 %v862, %v863
        %v866 = vsel %vm765, %v858, %v865
        %v867 = vrot.slane %v862, 4
        %v869 = vshrl.u32 %v760, 16
        %v871 = vrot.slane %v869, 7
        %v872 = vshll.u32 %v760, 16
        %v874 = vor.u32 %v871, %v872
        %v875 = vrot.slane %v871, 4
        %v877 = vshrl.u32 %v761, 16
        %v879 = vrot.slane %v877, 7
        %v880 = vshll.u32 %v761, 16
        %v882 = vor.u32 %v879, %v880
        %v883 = vsel %vm765, %v875, %v882
        %v884 = vrot.slane %v879, 4
        %v886 = vshrl.u32 %v762, 16
        %v888 = vrot.slane %v886, 7
        %v889 = vshll.u32 %v762, 16
        %v891 = vor.u32 %v888, %v889
        %v892 = vrot.slane %v888, 4
        %v894 = vshrl.u32 %v763, 16
        %v896 = vrot.slane %v894, 7
        %v897 = vshll.u32 %v763, 16
        %v899 = vor.u32 %v896, %v897
        %v900 = vsel %vm765, %v892, %v899
        %v901 = vrot.slane %v896, 4
        %s926 = scalar_lea.vmem [#allocation2], 12
        %vm927 = vcmask 1043456
        %vm928 = vmand %vm927, %vm480
        %v929 = vld [vmem:[%s926] sm:$0xf]
        %v930 = vsel %vm928, %v772, %v929
        %931 = vst [vmem:[%s926] sm:$0xf] %v930
        %932 = vst [vmem:[%s926 + $0x4] sm:$0xf] %v781
        %v933 = vld [vmem:[%s926 + $0x8] sm:$0x1]
        %v934 = vsel %vm449, %v782, %v933
        %935 = vst [vmem:[%s926 + $0x8] sm:$0x1] %v934
        %v936 = vld [vmem:[%s926 + $0xc] sm:$0xf]
        %v937 = vsel %vm928, %v789, %v936
        %938 = vst [vmem:[%s926 + $0xc] sm:$0xf] %v937
        %939 = vst [vmem:[%s926 + $0x10] sm:$0xf] %v798
        %v940 = vld [vmem:[%s926 + $0x14] sm:$0x1]
        %v941 = vsel %vm449, %v799, %v940
        %942 = vst [vmem:[%s926 + $0x14] sm:$0x1] %v941
        %v943 = vld [vmem:[%s926 + $0x18] sm:$0xf]
        %v944 = vsel %vm928, %v806, %v943
        %945 = vst [vmem:[%s926 + $0x18] sm:$0xf] %v944
        %946 = vst [vmem:[%s926 + $0x1c] sm:$0xf] %v815
        %v947 = vld [vmem:[%s926 + $0x20] sm:$0x1]
        %v948 = vsel %vm449, %v816, %v947
        %949 = vst [vmem:[%s926 + $0x20] sm:$0x1] %v948
        %v950 = vld [vmem:[%s926 + $0x24] sm:$0xf]
        %v951 = vsel %vm928, %v823, %v950
        %952 = vst [vmem:[%s926 + $0x24] sm:$0xf] %v951
        %953 = vst [vmem:[%s926 + $0x28] sm:$0xf] %v832
        %v954 = vld [vmem:[%s926 + $0x2c] sm:$0x1]
        %v955 = vsel %vm449, %v833, %v954
        %956 = vst [vmem:[%s926 + $0x2c] sm:$0x1] %v955
        %v957 = vld [vmem:[%s926 + $0x30] sm:$0xf]
        %v958 = vsel %vm928, %v840, %v957
        %959 = vst [vmem:[%s926 + $0x30] sm:$0xf] %v958
        %960 = vst [vmem:[%s926 + $0x34] sm:$0xf] %v849
        %v961 = vld [vmem:[%s926 + $0x38] sm:$0x1]
        %v962 = vsel %vm449, %v850, %v961
        %963 = vst [vmem:[%s926 + $0x38] sm:$0x1] %v962
        %v964 = vld [vmem:[%s926 + $0x3c] sm:$0xf]
        %v965 = vsel %vm928, %v857, %v964
        %966 = vst [vmem:[%s926 + $0x3c] sm:$0xf] %v965
        %967 = vst [vmem:[%s926 + $0x40] sm:$0xf] %v866
        %v968 = vld [vmem:[%s926 + $0x44] sm:$0x1]
        %v969 = vsel %vm449, %v867, %v968
        %970 = vst [vmem:[%s926 + $0x44] sm:$0x1] %v969
        %v971 = vld [vmem:[%s926 + $0x48] sm:$0xf]
        %v972 = vsel %vm928, %v874, %v971
        %973 = vst [vmem:[%s926 + $0x48] sm:$0xf] %v972
        %974 = vst [vmem:[%s926 + $0x4c] sm:$0xf] %v883
        %v975 = vld [vmem:[%s926 + $0x50] sm:$0x1]
        %v976 = vsel %vm449, %v884, %v975
        %977 = vst [vmem:[%s926 + $0x50] sm:$0x1] %v976
        %v978 = vld [vmem:[%s926 + $0x54] sm:$0xf]
        %v979 = vsel %vm928, %v891, %v978
        %980 = vst [vmem:[%s926 + $0x54] sm:$0xf] %v979
        %981 = vst [vmem:[%s926 + $0x58] sm:$0xf] %v900
        %v982 = vld [vmem:[%s926 + $0x5c] sm:$0x1]
        %v983 = vsel %vm449, %v901, %v982
        %984 = vst [vmem:[%s926 + $0x5c] sm:$0x1] %v983
        %p985 = scmp.eq.s32.totalorder %s34, 0
        // Predicated region
        $region77: #{tpu_custom_call.1} parent=59 // pred_check
          %p986 = pneg %p985
        $region78: #{tpu_custom_call.1} parent=59 // pred_check_branch
          %988 = sbr.rel (%p986) target = $region80
        $region79: #{tpu_custom_call.1} parent=59 // pred_region
          %v989 = vld [vmem:[#allocation2] sm:$0xf]
          %v990 = vsel %vm928, 0, %v989
          %991 = vst [vmem:[#allocation2] sm:$0xf] %v990
          %992 = vst [vmem:[#allocation2 + $0x4] sm:$0xf] 0
          %v993 = vld [vmem:[#allocation2 + $0x8] sm:$0x1]
          %v994 = vsel %vm449, 0, %v993
          %995 = vst [vmem:[#allocation2 + $0x8] sm:$0x1] %v994
        $region80: #{tpu_custom_call.1} parent=59 // pred_fallthru
          _
        %p996 = scmp.gt.s32.totalorder %s34, 0
        // Predicated region
        $region81: #{tpu_custom_call.1} parent=59 // pred_check
          %p997 = pneg %p996
        $region82: #{tpu_custom_call.1} parent=59 // pred_check_branch
          %999 = sbr.rel (%p997) target = $region84
        $region83: #{tpu_custom_call.1} parent=59 // pred_region
          %s1000 = ssub.s32 %s446, 1
          %s1001 = smul.u32 %s1000, 2
          %s1002 = smul.addr %s1001, 4
          %s1003 = scalar_lea.vmem %s391, %s1002 [#allocation3]
          %v1004 = vld [vmem:[%s1003] sm:$0xf]
          %v1005 = vld [vmem:[%s1003 + $0x4] sm:$0xf]
          %v1006 = vld [vmem:[#allocation6] sm:$0xf]
          %v1007 = vld [vmem:[#allocation6 + $0x4] sm:$0xf]
          %v1008 = vld [vmem:[#allocation6 + $0x8] sm:$0xf]
          %v1009 = vld [vmem:[#allocation6 + $0xc] sm:$0xf]
          %v1010 = vld [vmem:[#allocation6 + $0x10] sm:$0xf]
          %v1011 = vld [vmem:[#allocation6 + $0x14] sm:$0xf]
          %v1012 = vld [vmem:[#allocation6 + $0x18] sm:$0xf]
          %v1013 = vld [vmem:[#allocation6 + $0x1c] sm:$0xf]
          %v1014 = vld [vmem:[#allocation6 + $0x20] sm:$0xf]
          %v1015 = vld [vmem:[#allocation6 + $0x24] sm:$0xf]
          %v1016 = vld [vmem:[#allocation6 + $0x28] sm:$0xf]
          %v1017 = vld [vmem:[#allocation6 + $0x2c] sm:$0xf]
          %v1018 = vld [vmem:[#allocation6 + $0x30] sm:$0xf]
          %v1019 = vld [vmem:[#allocation6 + $0x34] sm:$0xf]
          %v1020 = vld [vmem:[#allocation6 + $0x38] sm:$0xf]
          %v1021 = vld [vmem:[#allocation6 + $0x3c] sm:$0xf]
          %v1024 = vunpack.c.l.b16 %v1004
          %v1025 = vunpack.c.l.b16 %v1005
          %v1026 = vpack.c.b16 %v1025, %v1024
          %v1044 = vunpack.c.l.b16 %v1006
          %v1045 = vunpack.c.l.b16 %v1007
          %v1046 = vunpack.c.l.b16 %v1008
          %v1047 = vunpack.c.l.b16 %v1009
          %v1048 = vunpack.c.l.b16 %v1010
          %v1049 = vunpack.c.l.b16 %v1011
          %v1050 = vunpack.c.l.b16 %v1012
          %v1051 = vunpack.c.l.b16 %v1013
          %v1052 = vunpack.c.l.b16 %v1014
          %v1053 = vunpack.c.l.b16 %v1015
          %v1054 = vunpack.c.l.b16 %v1016
          %v1055 = vunpack.c.l.b16 %v1017
          %v1056 = vunpack.c.l.b16 %v1018
          %v1057 = vunpack.c.l.b16 %v1019
          %v1058 = vunpack.c.l.b16 %v1020
          %v1059 = vunpack.c.l.b16 %v1021
          %v1060 = vpack.c.b16 %v1045, %v1044
          %v1061 = vpack.c.b16 %v1047, %v1046
          %v1062 = vpack.c.b16 %v1049, %v1048
          %v1063 = vpack.c.b16 %v1051, %v1050
          %v1064 = vpack.c.b16 %v1053, %v1052
          %v1065 = vpack.c.b16 %v1055, %v1054
          %v1066 = vpack.c.b16 %v1057, %v1056
          %v1067 = vpack.c.b16 %v1059, %v1058
          %1076 = vmatpush.bf16.msra.mxu0 %v1067
          %1077 = vmatpush.bf16.msra.mxu0 %v1066
          %1078 = vmatpush.bf16.msra.mxu0 %v1065
          %1079 = vmatpush.bf16.msra.mxu0 %v1064
          %1080 = vmatpush.bf16.msra.mxu0 %v1063
          %1081 = vmatpush.bf16.msra.mxu0 %v1062
          %1082 = vmatpush.bf16.msra.mxu0 %v1061
          %1083 = vmatpush.bf16.msra.mxu0 %v1060
          %1084 = vmatmul.bf16.gmra.mxu0 %v1026
          %v1085 = vpop.f32.mrf.mxu0
          %v1086 = vadd.f32 0.0, %v1085
          %v1087 = vpop.f32.mrf.mxu0
          %v1088 = vadd.f32 0.0, %v1087
          %1089 = vdwg.mxu0
          %v1090 = vld [vmem:[%s2] sm:$0x1]
          %v1092 = vperm.slane %v1090, 0
          %v1094 = vmul.f32 %v1086, %v1092
          %v1095 = vmul.f32 %v1088, %v1092
          %v1096 = vld [vmem:[%s3] sm:$0x1]
          %v1098 = vperm.slane %v1096, 0
          %v1100 = vadd.f32 %v1094, %v1098
          %v1101 = vadd.f32 %v1095, %v1098
          %v1102 = vmax.f32 %v1100, 0.0
          %v1103 = vmax.f32 %v1101, 0.0
          %v1104 = vpack.c.bf16 %v1102, %v1102
          %v1105 = vpack.c.bf16 %v1103, %v1103
          %v1107 = vshrl.u32 %v1104, 16
          %v1109 = vrot.slane %v1107, 7
          %v1110 = vshll.u32 %v1104, 16
          %v1112 = vor.u32 %v1109, %v1110
          %v1113 = vrot.slane %v1109, 4
          %v1115 = vshrl.u32 %v1105, 16
          %v1117 = vrot.slane %v1115, 7
          %v1118 = vshll.u32 %v1105, 16
          %v1120 = vor.u32 %v1117, %v1118
          %v1121 = vsel %vm765, %v1113, %v1120
          %v1122 = vrot.slane %v1117, 4
          %v1126 = vld [vmem:[#allocation2] sm:$0xf]
          %v1127 = vsel %vm928, %v1112, %v1126
          %1128 = vst [vmem:[#allocation2] sm:$0xf] %v1127
          %1129 = vst [vmem:[#allocation2 + $0x4] sm:$0xf] %v1121
          %v1130 = vld [vmem:[#allocation2 + $0x8] sm:$0x1]
          %v1131 = vsel %vm449, %v1122, %v1130
          %1132 = vst [vmem:[#allocation2 + $0x8] sm:$0x1] %v1131
        $region84: #{tpu_custom_call.1} parent=59 // pred_fallthru
          _
        %p1133 = scmp.eq.s32.totalorder %s34, 1
        // Predicated region
        $region85: #{tpu_custom_call.1} parent=59 // pred_check
          %p1134 = pneg %p1133
        $region86: #{tpu_custom_call.1} parent=59 // pred_check_branch
          %1136 = sbr.rel (%p1134) target = $region88
        $region87: #{tpu_custom_call.1} parent=59 // pred_region
          %s1137 = scalar_lea.vmem [#allocation2], 108
          %v1138 = vld [vmem:[%s1137] sm:$0xf]
          %v1139 = vsel %vm928, 0, %v1138
          %1140 = vst [vmem:[%s1137] sm:$0xf] %v1139
          %1141 = vst [vmem:[%s1137 + $0x4] sm:$0xf] 0
          %v1142 = vld [vmem:[%s1137 + $0x8] sm:$0x1]
          %v1143 = vsel %vm449, 0, %v1142
          %1144 = vst [vmem:[%s1137 + $0x8] sm:$0x1] %v1143
        $region88: #{tpu_custom_call.1} parent=59 // pred_fallthru
          _
        %p1145 = scmp.lt.s32.totalorder %s34, 1
        // Predicated region
        $region89: #{tpu_custom_call.1} parent=59 // pred_check
          %p1146 = pneg %p1145
        $region90: #{tpu_custom_call.1} parent=59 // pred_check_branch
          %1148 = sbr.rel (%p1146) target = $region92
        $region91: #{tpu_custom_call.1} parent=59 // pred_region
          %s1149 = sadd.s32 %s446, 8
          %s1150 = smul.u32 %s1149, 2
          %s1151 = smul.addr %s1150, 4
          %s1152 = scalar_lea.vmem %s391, %s1151 [#allocation3]
          %v1153 = vld [vmem:[%s1152] sm:$0xf]
          %v1154 = vld [vmem:[%s1152 + $0x4] sm:$0xf]
          %v1155 = vld [vmem:[#allocation6] sm:$0xf]
          %v1156 = vld [vmem:[#allocation6 + $0x4] sm:$0xf]
          %v1157 = vld [vmem:[#allocation6 + $0x8] sm:$0xf]
          %v1158 = vld [vmem:[#allocation6 + $0xc] sm:$0xf]
          %v1159 = vld [vmem:[#allocation6 + $0x10] sm:$0xf]
          %v1160 = vld [vmem:[#allocation6 + $0x14] sm:$0xf]
          %v1161 = vld [vmem:[#allocation6 + $0x18] sm:$0xf]
          %v1162 = vld [vmem:[#allocation6 + $0x1c] sm:$0xf]
          %v1163 = vld [vmem:[#allocation6 + $0x20] sm:$0xf]
          %v1164 = vld [vmem:[#allocation6 + $0x24] sm:$0xf]
          %v1165 = vld [vmem:[#allocation6 + $0x28] sm:$0xf]
          %v1166 = vld [vmem:[#allocation6 + $0x2c] sm:$0xf]
          %v1167 = vld [vmem:[#allocation6 + $0x30] sm:$0xf]
          %v1168 = vld [vmem:[#allocation6 + $0x34] sm:$0xf]
          %v1169 = vld [vmem:[#allocation6 + $0x38] sm:$0xf]
          %v1170 = vld [vmem:[#allocation6 + $0x3c] sm:$0xf]
          %v1173 = vunpack.c.l.b16 %v1153
          %v1174 = vunpack.c.l.b16 %v1154
          %v1175 = vpack.c.b16 %v1174, %v1173
          %v1193 = vunpack.c.l.b16 %v1155
          %v1194 = vunpack.c.l.b16 %v1156
          %v1195 = vunpack.c.l.b16 %v1157
          %v1196 = vunpack.c.l.b16 %v1158
          %v1197 = vunpack.c.l.b16 %v1159
          %v1198 = vunpack.c.l.b16 %v1160
          %v1199 = vunpack.c.l.b16 %v1161
          %v1200 = vunpack.c.l.b16 %v1162
          %v1201 = vunpack.c.l.b16 %v1163
          %v1202 = vunpack.c.l.b16 %v1164
          %v1203 = vunpack.c.l.b16 %v1165
          %v1204 = vunpack.c.l.b16 %v1166
          %v1205 = vunpack.c.l.b16 %v1167
          %v1206 = vunpack.c.l.b16 %v1168
          %v1207 = vunpack.c.l.b16 %v1169
          %v1208 = vunpack.c.l.b16 %v1170
          %v1209 = vpack.c.b16 %v1194, %v1193
          %v1210 = vpack.c.b16 %v1196, %v1195
          %v1211 = vpack.c.b16 %v1198, %v1197
          %v1212 = vpack.c.b16 %v1200, %v1199
          %v1213 = vpack.c.b16 %v1202, %v1201
          %v1214 = vpack.c.b16 %v1204, %v1203
          %v1215 = vpack.c.b16 %v1206, %v1205
          %v1216 = vpack.c.b16 %v1208, %v1207
          %1225 = vmatpush.bf16.msra.mxu0 %v1216
          %1226 = vmatpush.bf16.msra.mxu0 %v1215
          %1227 = vmatpush.bf16.msra.mxu0 %v1214
          %1228 = vmatpush.bf16.msra.mxu0 %v1213
          %1229 = vmatpush.bf16.msra.mxu0 %v1212
          %1230 = vmatpush.bf16.msra.mxu0 %v1211
          %1231 = vmatpush.bf16.msra.mxu0 %v1210
          %1232 = vmatpush.bf16.msra.mxu0 %v1209
          %1233 = vmatmul.bf16.gmra.mxu0 %v1175
          %v1234 = vpop.f32.mrf.mxu0
          %v1235 = vadd.f32 0.0, %v1234
          %v1236 = vpop.f32.mrf.mxu0
          %v1237 = vadd.f32 0.0, %v1236
          %1238 = vdwg.mxu0
          %v1239 = vld [vmem:[%s2] sm:$0x1]
          %v1241 = vperm.slane %v1239, 0
          %v1243 = vmul.f32 %v1235, %v1241
          %v1244 = vmul.f32 %v1237, %v1241
          %v1245 = vld [vmem:[%s3] sm:$0x1]
          %v1247 = vperm.slane %v1245, 0
          %v1249 = vadd.f32 %v1243, %v1247
          %v1250 = vadd.f32 %v1244, %v1247
          %v1251 = vmax.f32 %v1249, 0.0
          %v1252 = vmax.f32 %v1250, 0.0
          %v1253 = vpack.c.bf16 %v1251, %v1251
          %v1254 = vpack.c.bf16 %v1252, %v1252
          %v1256 = vshrl.u32 %v1253, 16
          %v1258 = vrot.slane %v1256, 7
          %v1259 = vshll.u32 %v1253, 16
          %v1261 = vor.u32 %v1258, %v1259
          %v1262 = vrot.slane %v1258, 4
          %v1264 = vshrl.u32 %v1254, 16
          %v1266 = vrot.slane %v1264, 7
          %v1267 = vshll.u32 %v1254, 16
          %v1269 = vor.u32 %v1266, %v1267
          %v1270 = vsel %vm765, %v1262, %v1269
          %v1271 = vrot.slane %v1266, 4
          %s1275 = scalar_lea.vmem [#allocation2], 108
          %v1276 = vld [vmem:[%s1275] sm:$0xf]
          %v1277 = vsel %vm928, %v1261, %v1276
          %1278 = vst [vmem:[%s1275] sm:$0xf] %v1277
          %1279 = vst [vmem:[%s1275 + $0x4] sm:$0xf] %v1270
          %v1280 = vld [vmem:[%s1275 + $0x8] sm:$0x1]
          %v1281 = vsel %vm449, %v1271, %v1280
          %1282 = vst [vmem:[%s1275 + $0x8] sm:$0x1] %v1281
        $region92: #{tpu_custom_call.1} parent=59 // pred_fallthru
          _
        %v1283 = vld [vmem:[#allocation2] sm:$0xf]
        %v1284 = vld [vmem:[#allocation2 + $0x4] sm:$0xf]
        %v1285 = vld [vmem:[#allocation2 + $0xc] sm:$0xf]
        %v1286 = vld [vmem:[#allocation2 + $0x10] sm:$0xf]
        %v1287 = vld [vmem:[#allocation2 + $0x18] sm:$0xf]
        %v1288 = vld [vmem:[#allocation2 + $0x1c] sm:$0xf]
        %v1289 = vld [vmem:[#allocation2 + $0x24] sm:$0xf]
        %v1290 = vld [vmem:[#allocation2 + $0x28] sm:$0xf]
        %v1291 = vld [vmem:[#allocation2 + $0x30] sm:$0xf]
        %v1292 = vld [vmem:[#allocation2 + $0x34] sm:$0xf]
        %v1293 = vld [vmem:[#allocation2 + $0x3c] sm:$0xf]
        %v1294 = vld [vmem:[#allocation2 + $0x40] sm:$0xf]
        %v1295 = vld [vmem:[#allocation2 + $0x48] sm:$0xf]
        %v1296 = vld [vmem:[#allocation2 + $0x4c] sm:$0xf]
        %v1297 = vld [vmem:[#allocation2 + $0x54] sm:$0xf]
        %v1298 = vld [vmem:[#allocation2 + $0x58] sm:$0xf]
        %v1299 = vld [vmem:[#allocation8] sm:$0xf]
        %v1300 = vld [vmem:[#allocation8 + $0x4] sm:$0xf]
        %v1301 = vld [vmem:[#allocation8 + $0x8] sm:$0xf]
        %v1302 = vld [vmem:[#allocation8 + $0xc] sm:$0xf]
        %v1303 = vld [vmem:[#allocation8 + $0x10] sm:$0xf]
        %v1304 = vld [vmem:[#allocation8 + $0x14] sm:$0xf]
        %v1305 = vld [vmem:[#allocation8 + $0x18] sm:$0xf]
        %v1306 = vld [vmem:[#allocation8 + $0x1c] sm:$0xf]
        %v1307 = vld [vmem:[#allocation8 + $0x20] sm:$0xf]
        %v1308 = vld [vmem:[#allocation8 + $0x24] sm:$0xf]
        %v1309 = vld [vmem:[#allocation8 + $0x28] sm:$0xf]
        %v1310 = vld [vmem:[#allocation8 + $0x2c] sm:$0xf]
        %v1311 = vld [vmem:[#allocation8 + $0x30] sm:$0xf]
        %v1312 = vld [vmem:[#allocation8 + $0x34] sm:$0xf]
        %v1313 = vld [vmem:[#allocation8 + $0x38] sm:$0xf]
        %v1314 = vld [vmem:[#allocation8 + $0x3c] sm:$0xf]
        %v1315 = vld [vmem:[#allocation2 + $0x8] sm:$0x1]
        %v1316 = vld [vmem:[#allocation2 + $0x14] sm:$0x1]
        %v1317 = vld [vmem:[#allocation2 + $0x20] sm:$0x1]
        %v1318 = vld [vmem:[#allocation2 + $0x2c] sm:$0x1]
        %v1319 = vld [vmem:[#allocation2 + $0x38] sm:$0x1]
        %v1320 = vld [vmem:[#allocation2 + $0x44] sm:$0x1]
        %v1321 = vld [vmem:[#allocation2 + $0x50] sm:$0x1]
        %v1322 = vld [vmem:[#allocation2 + $0x5c] sm:$0x1]
        %vm1323 = vsmask.f32 3328
        %vm1324 = vsmask.f32 7440
        %vm1325 = vmor %vm1323, %vm1324
        %v1327 = vshrl.u32 %v1283, 16
        %v1329 = vrot.slane %v1327, 4
        %v1330 = vshll.u32 %v1283, 16
        %v1332 = vrot.slane %v1330, 5
        %v1333 = vor.u32 %v1329, %v1332
        %v1334 = vrot.slane %v1333, 4
        %v1336 = vshll.u32 %v1284, 16
        %v1338 = vrot.slane %v1336, 5
        %v1339 = vsel %vm1325, %v1334, %v1338
        %v1340 = vshrl.u32 %v1284, 16
        %v1342 = vrot.slane %v1340, 4
        %v1343 = vor.u32 %v1342, %v1338
        %v1344 = vrot.slane %v1343, 4
        %v1346 = vshll.u32 %v1315, 16
        %v1348 = vrot.slane %v1346, 5
        %v1349 = vsel %vm1325, %v1344, %v1348
        %v1351 = vshrl.u32 %v1285, 16
        %v1353 = vrot.slane %v1351, 4
        %v1354 = vshll.u32 %v1285, 16
        %v1356 = vrot.slane %v1354, 5
        %v1357 = vor.u32 %v1353, %v1356
        %v1358 = vrot.slane %v1357, 4
        %v1360 = vshll.u32 %v1286, 16
        %v1362 = vrot.slane %v1360, 5
        %v1363 = vsel %vm1325, %v1358, %v1362
        %v1364 = vshrl.u32 %v1286, 16
        %v1366 = vrot.slane %v1364, 4
        %v1367 = vor.u32 %v1366, %v1362
        %v1368 = vrot.slane %v1367, 4
        %v1370 = vshll.u32 %v1316, 16
        %v1372 = vrot.slane %v1370, 5
        %v1373 = vsel %vm1325, %v1368, %v1372
        %v1375 = vshrl.u32 %v1287, 16
        %v1377 = vrot.slane %v1375, 4
        %v1378 = vshll.u32 %v1287, 16
        %v1380 = vrot.slane %v1378, 5
        %v1381 = vor.u32 %v1377, %v1380
        %v1382 = vrot.slane %v1381, 4
        %v1384 = vshll.u32 %v1288, 16
        %v1386 = vrot.slane %v1384, 5
        %v1387 = vsel %vm1325, %v1382, %v1386
        %v1388 = vshrl.u32 %v1288, 16
        %v1390 = vrot.slane %v1388, 4
        %v1391 = vor.u32 %v1390, %v1386
        %v1392 = vrot.slane %v1391, 4
        %v1394 = vshll.u32 %v1317, 16
        %v1396 = vrot.slane %v1394, 5
        %v1397 = vsel %vm1325, %v1392, %v1396
        %v1399 = vshrl.u32 %v1289, 16
        %v1401 = vrot.slane %v1399, 4
        %v1402 = vshll.u32 %v1289, 16
        %v1404 = vrot.slane %v1402, 5
        %v1405 = vor.u32 %v1401, %v1404
        %v1406 = vrot.slane %v1405, 4
        %v1408 = vshll.u32 %v1290, 16
        %v1410 = vrot.slane %v1408, 5
        %v1411 = vsel %vm1325, %v1406, %v1410
        %v1412 = vshrl.u32 %v1290, 16
        %v1414 = vrot.slane %v1412, 4
        %v1415 = vor.u32 %v1414, %v1410
        %v1416 = vrot.slane %v1415, 4
        %v1418 = vshll.u32 %v1318, 16
        %v1420 = vrot.slane %v1418, 5
        %v1421 = vsel %vm1325, %v1416, %v1420
        %v1423 = vshrl.u32 %v1291, 16
        %v1425 = vrot.slane %v1423, 4
        %v1426 = vshll.u32 %v1291, 16
        %v1428 = vrot.slane %v1426, 5
        %v1429 = vor.u32 %v1425, %v1428
        %v1430 = vrot.slane %v1429, 4
        %v1432 = vshll.u32 %v1292, 16
        %v1434 = vrot.slane %v1432, 5
        %v1435 = vsel %vm1325, %v1430, %v1434
        %v1436 = vshrl.u32 %v1292, 16
        %v1438 = vrot.slane %v1436, 4
        %v1439 = vor.u32 %v1438, %v1434
        %v1440 = vrot.slane %v1439, 4
        %v1442 = vshll.u32 %v1319, 16
        %v1444 = vrot.slane %v1442, 5
        %v1445 = vsel %vm1325, %v1440, %v1444
        %v1447 = vshrl.u32 %v1293, 16
        %v1449 = vrot.slane %v1447, 4
        %v1450 = vshll.u32 %v1293, 16
        %v1452 = vrot.slane %v1450, 5
        %v1453 = vor.u32 %v1449, %v1452
        %v1454 = vrot.slane %v1453, 4
        %v1456 = vshll.u32 %v1294, 16
        %v1458 = vrot.slane %v1456, 5
        %v1459 = vsel %vm1325, %v1454, %v1458
        %v1460 = vshrl.u32 %v1294, 16
        %v1462 = vrot.slane %v1460, 4
        %v1463 = vor.u32 %v1462, %v1458
        %v1464 = vrot.slane %v1463, 4
        %v1466 = vshll.u32 %v1320, 16
        %v1468 = vrot.slane %v1466, 5
        %v1469 = vsel %vm1325, %v1464, %v1468
        %v1471 = vshrl.u32 %v1295, 16
        %v1473 = vrot.slane %v1471, 4
        %v1474 = vshll.u32 %v1295, 16
        %v1476 = vrot.slane %v1474, 5
        %v1477 = vor.u32 %v1473, %v1476
        %v1478 = vrot.slane %v1477, 4
        %v1480 = vshll.u32 %v1296, 16
        %v1482 = vrot.slane %v1480, 5
        %v1483 = vsel %vm1325, %v1478, %v1482
        %v1484 = vshrl.u32 %v1296, 16
        %v1486 = vrot.slane %v1484, 4
        %v1487 = vor.u32 %v1486, %v1482
        %v1488 = vrot.slane %v1487, 4
        %v1490 = vshll.u32 %v1321, 16
        %v1492 = vrot.slane %v1490, 5
        %v1493 = vsel %vm1325, %v1488, %v1492
        %v1495 = vshrl.u32 %v1297, 16
        %v1497 = vrot.slane %v1495, 4
        %v1498 = vshll.u32 %v1297, 16
        %v1500 = vrot.slane %v1498, 5
        %v1501 = vor.u32 %v1497, %v1500
        %v1502 = vrot.slane %v1501, 4
        %v1504 = vshll.u32 %v1298, 16
        %v1506 = vrot.slane %v1504, 5
        %v1507 = vsel %vm1325, %v1502, %v1506
        %v1508 = vshrl.u32 %v1298, 16
        %v1510 = vrot.slane %v1508, 4
        %v1511 = vor.u32 %v1510, %v1506
        %v1512 = vrot.slane %v1511, 4
        %v1514 = vshll.u32 %v1322, 16
        %v1516 = vrot.slane %v1514, 5
        %v1517 = vsel %vm1325, %v1512, %v1516
        %s1518 = scalar_lea.vmem [#allocation8], 64
        %v1519 = vld [vmem:[%s1518] sm:$0xf]
        %v1520 = vld [vmem:[%s1518 + $0x4] sm:$0xf]
        %v1521 = vld [vmem:[%s1518 + $0x8] sm:$0xf]
        %v1522 = vld [vmem:[%s1518 + $0xc] sm:$0xf]
        %v1523 = vld [vmem:[%s1518 + $0x10] sm:$0xf]
        %v1524 = vld [vmem:[%s1518 + $0x14] sm:$0xf]
        %v1525 = vld [vmem:[%s1518 + $0x18] sm:$0xf]
        %v1526 = vld [vmem:[%s1518 + $0x1c] sm:$0xf]
        %v1527 = vld [vmem:[%s1518 + $0x20] sm:$0xf]
        %v1528 = vld [vmem:[%s1518 + $0x24] sm:$0xf]
        %v1529 = vld [vmem:[%s1518 + $0x28] sm:$0xf]
        %v1530 = vld [vmem:[%s1518 + $0x2c] sm:$0xf]
        %v1531 = vld [vmem:[%s1518 + $0x30] sm:$0xf]
        %v1532 = vld [vmem:[%s1518 + $0x34] sm:$0xf]
        %v1533 = vld [vmem:[%s1518 + $0x38] sm:$0xf]
        %v1534 = vld [vmem:[%s1518 + $0x3c] sm:$0xf]
        %v1535 = vunpack.c.l.b16 %v1339
        %v1536 = vunpack.c.l.b16 %v1349
        %v1537 = vunpack.c.l.b16 %v1363
        %v1538 = vunpack.c.l.b16 %v1373
        %v1539 = vunpack.c.l.b16 %v1387
        %v1540 = vunpack.c.l.b16 %v1397
        %v1541 = vunpack.c.l.b16 %v1411
        %v1542 = vunpack.c.l.b16 %v1421
        %v1543 = vunpack.c.l.b16 %v1435
        %v1544 = vunpack.c.l.b16 %v1445
        %v1545 = vunpack.c.l.b16 %v1459
        %v1546 = vunpack.c.l.b16 %v1469
        %v1547 = vunpack.c.l.b16 %v1483
        %v1548 = vunpack.c.l.b16 %v1493
        %v1549 = vunpack.c.l.b16 %v1507
        %v1550 = vunpack.c.l.b16 %v1517
        %v1551 = vpack.c.b16 %v1536, %v1535
        %v1552 = vpack.c.b16 %v1538, %v1537
        %v1553 = vpack.c.b16 %v1540, %v1539
        %v1554 = vpack.c.b16 %v1542, %v1541
        %v1555 = vpack.c.b16 %v1544, %v1543
        %v1556 = vpack.c.b16 %v1546, %v1545
        %v1557 = vpack.c.b16 %v1548, %v1547
        %v1558 = vpack.c.b16 %v1550, %v1549
        %v1583 = vunpack.c.l.b16 %v1519
        %v1584 = vunpack.c.l.b16 %v1520
        %v1585 = vunpack.c.l.b16 %v1521
        %v1586 = vunpack.c.l.b16 %v1522
        %v1587 = vunpack.c.l.b16 %v1523
        %v1588 = vunpack.c.l.b16 %v1524
        %v1589 = vunpack.c.l.b16 %v1525
        %v1590 = vunpack.c.l.b16 %v1526
        %v1591 = vunpack.c.l.b16 %v1527
        %v1592 = vunpack.c.l.b16 %v1528
        %v1593 = vunpack.c.l.b16 %v1529
        %v1594 = vunpack.c.l.b16 %v1530
        %v1595 = vunpack.c.l.b16 %v1531
        %v1596 = vunpack.c.l.b16 %v1532
        %v1597 = vunpack.c.l.b16 %v1533
        %v1598 = vunpack.c.l.b16 %v1534
        %v1599 = vpack.c.b16 %v1584, %v1583
        %v1600 = vpack.c.b16 %v1586, %v1585
        %v1601 = vpack.c.b16 %v1588, %v1587
        %v1602 = vpack.c.b16 %v1590, %v1589
        %v1603 = vpack.c.b16 %v1592, %v1591
        %v1604 = vpack.c.b16 %v1594, %v1593
        %v1605 = vpack.c.b16 %v1596, %v1595
        %v1606 = vpack.c.b16 %v1598, %v1597
        %1615 = vmatpush.bf16.msra.mxu0 %v1606
        %1616 = vmatpush.bf16.msra.mxu0 %v1605
        %1617 = vmatpush.bf16.msra.mxu0 %v1604
        %1618 = vmatpush.bf16.msra.mxu0 %v1603
        %1619 = vmatpush.bf16.msra.mxu0 %v1602
        %1620 = vmatpush.bf16.msra.mxu0 %v1601
        %1621 = vmatpush.bf16.msra.mxu0 %v1600
        %1622 = vmatpush.bf16.msra.mxu0 %v1599
        %1623 = vmatmul.bf16.gmra.mxu0 %v1551
        %v1624 = vpop.f32.mrf.mxu0
        %v1625 = vadd.f32 0.0, %v1624
        %v1626 = vpop.f32.mrf.mxu0
        %v1627 = vadd.f32 0.0, %v1626
        %1628 = vmatmul.bf16.gmra.mxu0 %v1552
        %v1629 = vpop.f32.mrf.mxu0
        %v1630 = vadd.f32 0.0, %v1629
        %v1631 = vpop.f32.mrf.mxu0
        %v1632 = vadd.f32 0.0, %v1631
        %1633 = vmatmul.bf16.gmra.mxu0 %v1553
        %v1634 = vpop.f32.mrf.mxu0
        %v1635 = vadd.f32 0.0, %v1634
        %v1636 = vpop.f32.mrf.mxu0
        %v1637 = vadd.f32 0.0, %v1636
        %1638 = vmatmul.bf16.gmra.mxu0 %v1554
        %v1639 = vpop.f32.mrf.mxu0
        %v1640 = vadd.f32 0.0, %v1639
        %v1641 = vpop.f32.mrf.mxu0
        %v1642 = vadd.f32 0.0, %v1641
        %1643 = vmatmul.bf16.gmra.mxu0 %v1555
        %v1644 = vpop.f32.mrf.mxu0
        %v1645 = vadd.f32 0.0, %v1644
        %v1646 = vpop.f32.mrf.mxu0
        %v1647 = vadd.f32 0.0, %v1646
        %1648 = vmatmul.bf16.gmra.mxu0 %v1556
        %v1649 = vpop.f32.mrf.mxu0
        %v1650 = vadd.f32 0.0, %v1649
        %v1651 = vpop.f32.mrf.mxu0
        %v1652 = vadd.f32 0.0, %v1651
        %1653 = vmatmul.bf16.gmra.mxu0 %v1557
        %v1654 = vpop.f32.mrf.mxu0
        %v1655 = vadd.f32 0.0, %v1654
        %v1656 = vpop.f32.mrf.mxu0
        %v1657 = vadd.f32 0.0, %v1656
        %1658 = vmatmul.bf16.gmra.mxu0 %v1558
        %v1659 = vpop.f32.mrf.mxu0
        %v1660 = vadd.f32 0.0, %v1659
        %v1661 = vpop.f32.mrf.mxu0
        %v1662 = vadd.f32 0.0, %v1661
        %1663 = vdwg.mxu0
        %v1680 = vunpack.c.l.b16 %v1283
        %v1681 = vunpack.c.l.b16 %v1284
        %v1682 = vunpack.c.l.b16 %v1285
        %v1683 = vunpack.c.l.b16 %v1286
        %v1684 = vunpack.c.l.b16 %v1287
        %v1685 = vunpack.c.l.b16 %v1288
        %v1686 = vunpack.c.l.b16 %v1289
        %v1687 = vunpack.c.l.b16 %v1290
        %v1688 = vunpack.c.l.b16 %v1291
        %v1689 = vunpack.c.l.b16 %v1292
        %v1690 = vunpack.c.l.b16 %v1293
        %v1691 = vunpack.c.l.b16 %v1294
        %v1692 = vunpack.c.l.b16 %v1295
        %v1693 = vunpack.c.l.b16 %v1296
        %v1694 = vunpack.c.l.b16 %v1297
        %v1695 = vunpack.c.l.b16 %v1298
        %v1696 = vpack.c.b16 %v1681, %v1680
        %v1697 = vpack.c.b16 %v1683, %v1682
        %v1698 = vpack.c.b16 %v1685, %v1684
        %v1699 = vpack.c.b16 %v1687, %v1686
        %v1700 = vpack.c.b16 %v1689, %v1688
        %v1701 = vpack.c.b16 %v1691, %v1690
        %v1702 = vpack.c.b16 %v1693, %v1692
        %v1703 = vpack.c.b16 %v1695, %v1694
        %v1728 = vunpack.c.l.b16 %v1299
        %v1729 = vunpack.c.l.b16 %v1300
        %v1730 = vunpack.c.l.b16 %v1301
        %v1731 = vunpack.c.l.b16 %v1302
        %v1732 = vunpack.c.l.b16 %v1303
        %v1733 = vunpack.c.l.b16 %v1304
        %v1734 = vunpack.c.l.b16 %v1305
        %v1735 = vunpack.c.l.b16 %v1306
        %v1736 = vunpack.c.l.b16 %v1307
        %v1737 = vunpack.c.l.b16 %v1308
        %v1738 = vunpack.c.l.b16 %v1309
        %v1739 = vunpack.c.l.b16 %v1310
        %v1740 = vunpack.c.l.b16 %v1311
        %v1741 = vunpack.c.l.b16 %v1312
        %v1742 = vunpack.c.l.b16 %v1313
        %v1743 = vunpack.c.l.b16 %v1314
        %v1744 = vpack.c.b16 %v1729, %v1728
        %v1745 = vpack.c.b16 %v1731, %v1730
        %v1746 = vpack.c.b16 %v1733, %v1732
        %v1747 = vpack.c.b16 %v1735, %v1734
        %v1748 = vpack.c.b16 %v1737, %v1736
        %v1749 = vpack.c.b16 %v1739, %v1738
        %v1750 = vpack.c.b16 %v1741, %v1740
        %v1751 = vpack.c.b16 %v1743, %v1742
        %1760 = vmatpush.bf16.msra.mxu0 %v1751
        %1761 = vmatpush.bf16.msra.mxu0 %v1750
        %1762 = vmatpush.bf16.msra.mxu0 %v1749
        %1763 = vmatpush.bf16.msra.mxu0 %v1748
        %1764 = vmatpush.bf16.msra.mxu0 %v1747
        %1765 = vmatpush.bf16.msra.mxu0 %v1746
        %1766 = vmatpush.bf16.msra.mxu0 %v1745
        %1767 = vmatpush.bf16.msra.mxu0 %v1744
        %1768 = vmatmul.bf16.gmra.mxu0 %v1696
        %v1769 = vpop.f32.mrf.mxu0
        %v1770 = vadd.f32 %v1625, %v1769
        %v1771 = vpop.f32.mrf.mxu0
        %v1772 = vadd.f32 %v1627, %v1771
        %1773 = vmatmul.bf16.gmra.mxu0 %v1697
        %v1774 = vpop.f32.mrf.mxu0
        %v1775 = vadd.f32 %v1630, %v1774
        %v1776 = vpop.f32.mrf.mxu0
        %v1777 = vadd.f32 %v1632, %v1776
        %1778 = vmatmul.bf16.gmra.mxu0 %v1698
        %v1779 = vpop.f32.mrf.mxu0
        %v1780 = vadd.f32 %v1635, %v1779
        %v1781 = vpop.f32.mrf.mxu0
        %v1782 = vadd.f32 %v1637, %v1781
        %1783 = vmatmul.bf16.gmra.mxu0 %v1699
        %v1784 = vpop.f32.mrf.mxu0
        %v1785 = vadd.f32 %v1640, %v1784
        %v1786 = vpop.f32.mrf.mxu0
        %v1787 = vadd.f32 %v1642, %v1786
        %1788 = vmatmul.bf16.gmra.mxu0 %v1700
        %v1789 = vpop.f32.mrf.mxu0
        %v1790 = vadd.f32 %v1645, %v1789
        %v1791 = vpop.f32.mrf.mxu0
        %v1792 = vadd.f32 %v1647, %v1791
        %1793 = vmatmul.bf16.gmra.mxu0 %v1701
        %v1794 = vpop.f32.mrf.mxu0
        %v1795 = vadd.f32 %v1650, %v1794
        %v1796 = vpop.f32.mrf.mxu0
        %v1797 = vadd.f32 %v1652, %v1796
        %1798 = vmatmul.bf16.gmra.mxu0 %v1702
        %v1799 = vpop.f32.mrf.mxu0
        %v1800 = vadd.f32 %v1655, %v1799
        %v1801 = vpop.f32.mrf.mxu0
        %v1802 = vadd.f32 %v1657, %v1801
        %1803 = vmatmul.bf16.gmra.mxu0 %v1703
        %v1804 = vpop.f32.mrf.mxu0
        %v1805 = vadd.f32 %v1660, %v1804
        %v1806 = vpop.f32.mrf.mxu0
        %v1807 = vadd.f32 %v1662, %v1806
        %1808 = vdwg.mxu0
        %v1809 = vld [vmem:[#allocation2] sm:$0xe]
        %v1810 = vld [vmem:[#allocation2 + $0xc] sm:$0xe]
        %v1811 = vld [vmem:[#allocation2 + $0x18] sm:$0xe]
        %v1812 = vld [vmem:[#allocation2 + $0x24] sm:$0xe]
        %v1813 = vld [vmem:[#allocation2 + $0x30] sm:$0xe]
        %v1814 = vld [vmem:[#allocation2 + $0x3c] sm:$0xe]
        %v1815 = vld [vmem:[#allocation2 + $0x48] sm:$0xe]
        %v1816 = vld [vmem:[#allocation2 + $0x54] sm:$0xe]
        %vm1833 = vcmask 1042432
        %vm1834 = vcmask 1046532
        %vm1835 = vmor %vm1833, %vm1834
        %v1836 = vrot.slane %v1809, 5
        %v1837 = vrot.slane %v1836, 4
        %v1838 = vrot.slane %v1284, 5
        %v1839 = vsel %vm1835, %v1837, %v1838
        %v1840 = vrot.slane %v1838, 4
        %v1841 = vrot.slane %v1315, 5
        %v1842 = vsel %vm1835, %v1840, %v1841
        %v1843 = vrot.slane %v1810, 5
        %v1844 = vrot.slane %v1843, 4
        %v1845 = vrot.slane %v1286, 5
        %v1846 = vsel %vm1835, %v1844, %v1845
        %v1847 = vrot.slane %v1845, 4
        %v1848 = vrot.slane %v1316, 5
        %v1849 = vsel %vm1835, %v1847, %v1848
        %v1850 = vrot.slane %v1811, 5
        %v1851 = vrot.slane %v1850, 4
        %v1852 = vrot.slane %v1288, 5
        %v1853 = vsel %vm1835, %v1851, %v1852
        %v1854 = vrot.slane %v1852, 4
        %v1855 = vrot.slane %v1317, 5
        %v1856 = vsel %vm1835, %v1854, %v1855
        %v1857 = vrot.slane %v1812, 5
        %v1858 = vrot.slane %v1857, 4
        %v1859 = vrot.slane %v1290, 5
        %v1860 = vsel %vm1835, %v1858, %v1859
        %v1861 = vrot.slane %v1859, 4
        %v1862 = vrot.slane %v1318, 5
        %v1863 = vsel %vm1835, %v1861, %v1862
        %v1864 = vrot.slane %v1813, 5
        %v1865 = vrot.slane %v1864, 4
        %v1866 = vrot.slane %v1292, 5
        %v1867 = vsel %vm1835, %v1865, %v1866
        %v1868 = vrot.slane %v1866, 4
        %v1869 = vrot.slane %v1319, 5
        %v1870 = vsel %vm1835, %v1868, %v1869
        %v1871 = vrot.slane %v1814, 5
        %v1872 = vrot.slane %v1871, 4
        %v1873 = vrot.slane %v1294, 5
        %v1874 = vsel %vm1835, %v1872, %v1873
        %v1875 = vrot.slane %v1873, 4
        %v1876 = vrot.slane %v1320, 5
        %v1877 = vsel %vm1835, %v1875, %v1876
        %v1878 = vrot.slane %v1815, 5
        %v1879 = vrot.slane %v1878, 4
        %v1880 = vrot.slane %v1296, 5
        %v1881 = vsel %vm1835, %v1879, %v1880
        %v1882 = vrot.slane %v1880, 4
        %v1883 = vrot.slane %v1321, 5
        %v1884 = vsel %vm1835, %v1882, %v1883
        %v1885 = vrot.slane %v1816, 5
        %v1886 = vrot.slane %v1885, 4
        %v1887 = vrot.slane %v1298, 5
        %v1888 = vsel %vm1835, %v1886, %v1887
        %v1889 = vrot.slane %v1887, 4
        %v1890 = vrot.slane %v1322, 5
        %v1891 = vsel %vm1835, %v1889, %v1890
        %s1892 = scalar_lea.vmem [#allocation8], 128
        %v1893 = vld [vmem:[%s1892] sm:$0xf]
        %v1894 = vld [vmem:[%s1892 + $0x4] sm:$0xf]
        %v1895 = vld [vmem:[%s1892 + $0x8] sm:$0xf]
        %v1896 = vld [vmem:[%s1892 + $0xc] sm:$0xf]
        %v1897 = vld [vmem:[%s1892 + $0x10] sm:$0xf]
        %v1898 = vld [vmem:[%s1892 + $0x14] sm:$0xf]
        %v1899 = vld [vmem:[%s1892 + $0x18] sm:$0xf]
        %v1900 = vld [vmem:[%s1892 + $0x1c] sm:$0xf]
        %v1901 = vld [vmem:[%s1892 + $0x20] sm:$0xf]
        %v1902 = vld [vmem:[%s1892 + $0x24] sm:$0xf]
        %v1903 = vld [vmem:[%s1892 + $0x28] sm:$0xf]
        %v1904 = vld [vmem:[%s1892 + $0x2c] sm:$0xf]
        %v1905 = vld [vmem:[%s1892 + $0x30] sm:$0xf]
        %v1906 = vld [vmem:[%s1892 + $0x34] sm:$0xf]
        %v1907 = vld [vmem:[%s1892 + $0x38] sm:$0xf]
        %v1908 = vld [vmem:[%s1892 + $0x3c] sm:$0xf]
        %v1909 = vunpack.c.l.b16 %v1839
        %v1910 = vunpack.c.l.b16 %v1842
        %v1911 = vunpack.c.l.b16 %v1846
        %v1912 = vunpack.c.l.b16 %v1849
        %v1913 = vunpack.c.l.b16 %v1853
        %v1914 = vunpack.c.l.b16 %v1856
        %v1915 = vunpack.c.l.b16 %v1860
        %v1916 = vunpack.c.l.b16 %v1863
        %v1917 = vunpack.c.l.b16 %v1867
        %v1918 = vunpack.c.l.b16 %v1870
        %v1919 = vunpack.c.l.b16 %v1874
        %v1920 = vunpack.c.l.b16 %v1877
        %v1921 = vunpack.c.l.b16 %v1881
        %v1922 = vunpack.c.l.b16 %v1884
        %v1923 = vunpack.c.l.b16 %v1888
        %v1924 = vunpack.c.l.b16 %v1891
        %v1925 = vpack.c.b16 %v1910, %v1909
        %v1926 = vpack.c.b16 %v1912, %v1911
        %v1927 = vpack.c.b16 %v1914, %v1913
        %v1928 = vpack.c.b16 %v1916, %v1915
        %v1929 = vpack.c.b16 %v1918, %v1917
        %v1930 = vpack.c.b16 %v1920, %v1919
        %v1931 = vpack.c.b16 %v1922, %v1921
        %v1932 = vpack.c.b16 %v1924, %v1923
        %v1957 = vunpack.c.l.b16 %v1893
        %v1958 = vunpack.c.l.b16 %v1894
        %v1959 = vunpack.c.l.b16 %v1895
        %v1960 = vunpack.c.l.b16 %v1896
        %v1961 = vunpack.c.l.b16 %v1897
        %v1962 = vunpack.c.l.b16 %v1898
        %v1963 = vunpack.c.l.b16 %v1899
        %v1964 = vunpack.c.l.b16 %v1900
        %v1965 = vunpack.c.l.b16 %v1901
        %v1966 = vunpack.c.l.b16 %v1902
        %v1967 = vunpack.c.l.b16 %v1903
        %v1968 = vunpack.c.l.b16 %v1904
        %v1969 = vunpack.c.l.b16 %v1905
        %v1970 = vunpack.c.l.b16 %v1906
        %v1971 = vunpack.c.l.b16 %v1907
        %v1972 = vunpack.c.l.b16 %v1908
        %v1973 = vpack.c.b16 %v1958, %v1957
        %v1974 = vpack.c.b16 %v1960, %v1959
        %v1975 = vpack.c.b16 %v1962, %v1961
        %v1976 = vpack.c.b16 %v1964, %v1963
        %v1977 = vpack.c.b16 %v1966, %v1965
        %v1978 = vpack.c.b16 %v1968, %v1967
        %v1979 = vpack.c.b16 %v1970, %v1969
        %v1980 = vpack.c.b16 %v1972, %v1971
        %1989 = vmatpush.bf16.msra.mxu0 %v1980
        %1990 = vmatpush.bf16.msra.mxu0 %v1979
        %1991 = vmatpush.bf16.msra.mxu0 %v1978
        %1992 = vmatpush.bf16.msra.mxu0 %v1977
        %1993 = vmatpush.bf16.msra.mxu0 %v1976
        %1994 = vmatpush.bf16.msra.mxu0 %v1975
        %1995 = vmatpush.bf16.msra.mxu0 %v1974
        %1996 = vmatpush.bf16.msra.mxu0 %v1973
        %1997 = vmatmul.bf16.gmra.mxu0 %v1925
        %v1998 = vpop.f32.mrf.mxu0
        %v1999 = vadd.f32 0.0, %v1998
        %v2000 = vpop.f32.mrf.mxu0
        %v2001 = vadd.f32 0.0, %v2000
        %2002 = vmatmul.bf16.gmra.mxu0 %v1926
        %v2003 = vpop.f32.mrf.mxu0
        %v2004 = vadd.f32 0.0, %v2003
        %v2005 = vpop.f32.mrf.mxu0
        %v2006 = vadd.f32 0.0, %v2005
        %2007 = vmatmul.bf16.gmra.mxu0 %v1927
        %v2008 = vpop.f32.mrf.mxu0
        %v2009 = vadd.f32 0.0, %v2008
        %v2010 = vpop.f32.mrf.mxu0
        %v2011 = vadd.f32 0.0, %v2010
        %2012 = vmatmul.bf16.gmra.mxu0 %v1928
        %v2013 = vpop.f32.mrf.mxu0
        %v2014 = vadd.f32 0.0, %v2013
        %v2015 = vpop.f32.mrf.mxu0
        %v2016 = vadd.f32 0.0, %v2015
        %2017 = vmatmul.bf16.gmra.mxu0 %v1929
        %v2018 = vpop.f32.mrf.mxu0
        %v2019 = vadd.f32 0.0, %v2018
        %v2020 = vpop.f32.mrf.mxu0
        %v2021 = vadd.f32 0.0, %v2020
        %2022 = vmatmul.bf16.gmra.mxu0 %v1930
        %v2023 = vpop.f32.mrf.mxu0
        %v2024 = vadd.f32 0.0, %v2023
        %v2025 = vpop.f32.mrf.mxu0
        %v2026 = vadd.f32 0.0, %v2025
        %2027 = vmatmul.bf16.gmra.mxu0 %v1931
        %v2028 = vpop.f32.mrf.mxu0
        %v2029 = vadd.f32 0.0, %v2028
        %v2030 = vpop.f32.mrf.mxu0
        %v2031 = vadd.f32 0.0, %v2030
        %2032 = vmatmul.bf16.gmra.mxu0 %v1932
        %v2033 = vpop.f32.mrf.mxu0
        %v2034 = vadd.f32 0.0, %v2033
        %v2035 = vpop.f32.mrf.mxu0
        %v2036 = vadd.f32 0.0, %v2035
        %2037 = vdwg.mxu0
        %v2038 = vadd.f32 %v1770, %v1999
        %v2039 = vadd.f32 %v1772, %v2001
        %v2040 = vadd.f32 %v1775, %v2004
        %v2041 = vadd.f32 %v1777, %v2006
        %v2042 = vadd.f32 %v1780, %v2009
        %v2043 = vadd.f32 %v1782, %v2011
        %v2044 = vadd.f32 %v1785, %v2014
        %v2045 = vadd.f32 %v1787, %v2016
        %v2046 = vadd.f32 %v1790, %v2019
        %v2047 = vadd.f32 %v1792, %v2021
        %v2048 = vadd.f32 %v1795, %v2024
        %v2049 = vadd.f32 %v1797, %v2026
        %v2050 = vadd.f32 %v1800, %v2029
        %v2051 = vadd.f32 %v1802, %v2031
        %v2052 = vadd.f32 %v1805, %v2034
        %v2053 = vadd.f32 %v1807, %v2036
        %v2054 = vld [vmem:[%s926] sm:$0xf]
        %v2055 = vld [vmem:[%s926 + $0x4] sm:$0xf]
        %v2056 = vld [vmem:[%s926 + $0xc] sm:$0xf]
        %v2057 = vld [vmem:[%s926 + $0x10] sm:$0xf]
        %v2058 = vld [vmem:[%s926 + $0x18] sm:$0xf]
        %v2059 = vld [vmem:[%s926 + $0x1c] sm:$0xf]
        %v2060 = vld [vmem:[%s926 + $0x24] sm:$0xf]
        %v2061 = vld [vmem:[%s926 + $0x28] sm:$0xf]
        %v2062 = vld [vmem:[%s926 + $0x30] sm:$0xf]
        %v2063 = vld [vmem:[%s926 + $0x34] sm:$0xf]
        %v2064 = vld [vmem:[%s926 + $0x3c] sm:$0xf]
        %v2065 = vld [vmem:[%s926 + $0x40] sm:$0xf]
        %v2066 = vld [vmem:[%s926 + $0x48] sm:$0xf]
        %v2067 = vld [vmem:[%s926 + $0x4c] sm:$0xf]
        %v2068 = vld [vmem:[%s926 + $0x54] sm:$0xf]
        %v2069 = vld [vmem:[%s926 + $0x58] sm:$0xf]
        %s2070 = scalar_lea.vmem [#allocation8], 192
        %v2071 = vld [vmem:[%s2070] sm:$0xf]
        %v2072 = vld [vmem:[%s2070 + $0x4] sm:$0xf]
        %v2073 = vld [vmem:[%s2070 + $0x8] sm:$0xf]
        %v2074 = vld [vmem:[%s2070 + $0xc] sm:$0xf]
        %v2075 = vld [vmem:[%s2070 + $0x10] sm:$0xf]
        %v2076 = vld [vmem:[%s2070 + $0x14] sm:$0xf]
        %v2077 = vld [vmem:[%s2070 + $0x18] sm:$0xf]
        %v2078 = vld [vmem:[%s2070 + $0x1c] sm:$0xf]
        %v2079 = vld [vmem:[%s2070 + $0x20] sm:$0xf]
        %v2080 = vld [vmem:[%s2070 + $0x24] sm:$0xf]
        %v2081 = vld [vmem:[%s2070 + $0x28] sm:$0xf]
        %v2082 = vld [vmem:[%s2070 + $0x2c] sm:$0xf]
        %v2083 = vld [vmem:[%s2070 + $0x30] sm:$0xf]
        %v2084 = vld [vmem:[%s2070 + $0x34] sm:$0xf]
        %v2085 = vld [vmem:[%s2070 + $0x38] sm:$0xf]
        %v2086 = vld [vmem:[%s2070 + $0x3c] sm:$0xf]
        %v2103 = vunpack.c.l.b16 %v2054
        %v2104 = vunpack.c.l.b16 %v2055
        %v2105 = vunpack.c.l.b16 %v2056
        %v2106 = vunpack.c.l.b16 %v2057
        %v2107 = vunpack.c.l.b16 %v2058
        %v2108 = vunpack.c.l.b16 %v2059
        %v2109 = vunpack.c.l.b16 %v2060
        %v2110 = vunpack.c.l.b16 %v2061
        %v2111 = vunpack.c.l.b16 %v2062
        %v2112 = vunpack.c.l.b16 %v2063
        %v2113 = vunpack.c.l.b16 %v2064
        %v2114 = vunpack.c.l.b16 %v2065
        %v2115 = vunpack.c.l.b16 %v2066
        %v2116 = vunpack.c.l.b16 %v2067
        %v2117 = vunpack.c.l.b16 %v2068
        %v2118 = vunpack.c.l.b16 %v2069
        %v2119 = vpack.c.b16 %v2104, %v2103
        %v2120 = vpack.c.b16 %v2106, %v2105
        %v2121 = vpack.c.b16 %v2108, %v2107
        %v2122 = vpack.c.b16 %v2110, %v2109
        %v2123 = vpack.c.b16 %v2112, %v2111
        %v2124 = vpack.c.b16 %v2114, %v2113
        %v2125 = vpack.c.b16 %v2116, %v2115
        %v2126 = vpack.c.b16 %v2118, %v2117
        %v2151 = vunpack.c.l.b16 %v2071
        %v2152 = vunpack.c.l.b16 %v2072
        %v2153 = vunpack.c.l.b16 %v2073
        %v2154 = vunpack.c.l.b16 %v2074
        %v2155 = vunpack.c.l.b16 %v2075
        %v2156 = vunpack.c.l.b16 %v2076
        %v2157 = vunpack.c.l.b16 %v2077
        %v2158 = vunpack.c.l.b16 %v2078
        %v2159 = vunpack.c.l.b16 %v2079
        %v2160 = vunpack.c.l.b16 %v2080
        %v2161 = vunpack.c.l.b16 %v2081
        %v2162 = vunpack.c.l.b16 %v2082
        %v2163 = vunpack.c.l.b16 %v2083
        %v2164 = vunpack.c.l.b16 %v2084
        %v2165 = vunpack.c.l.b16 %v2085
        %v2166 = vunpack.c.l.b16 %v2086
        %v2167 = vpack.c.b16 %v2152, %v2151
        %v2168 = vpack.c.b16 %v2154, %v2153
        %v2169 = vpack.c.b16 %v2156, %v2155
        %v2170 = vpack.c.b16 %v2158, %v2157
        %v2171 = vpack.c.b16 %v2160, %v2159
        %v2172 = vpack.c.b16 %v2162, %v2161
        %v2173 = vpack.c.b16 %v2164, %v2163
        %v2174 = vpack.c.b16 %v2166, %v2165
        %2183 = vmatpush.bf16.msra.mxu0 %v2174
        %2184 = vmatpush.bf16.msra.mxu0 %v2173
        %2185 = vmatpush.bf16.msra.mxu0 %v2172
        %2186 = vmatpush.bf16.msra.mxu0 %v2171
        %2187 = vmatpush.bf16.msra.mxu0 %v2170
        %2188 = vmatpush.bf16.msra.mxu0 %v2169
        %2189 = vmatpush.bf16.msra.mxu0 %v2168
        %2190 = vmatpush.bf16.msra.mxu0 %v2167
        %2191 = vmatmul.bf16.gmra.mxu0 %v2119
        %v2192 = vpop.f32.mrf.mxu0
        %v2193 = vadd.f32 0.0, %v2192
        %v2194 = vpop.f32.mrf.mxu0
        %v2195 = vadd.f32 0.0, %v2194
        %2196 = vmatmul.bf16.gmra.mxu0 %v2120
        %v2197 = vpop.f32.mrf.mxu0
        %v2198 = vadd.f32 0.0, %v2197
        %v2199 = vpop.f32.mrf.mxu0
        %v2200 = vadd.f32 0.0, %v2199
        %2201 = vmatmul.bf16.gmra.mxu0 %v2121
        %v2202 = vpop.f32.mrf.mxu0
        %v2203 = vadd.f32 0.0, %v2202
        %v2204 = vpop.f32.mrf.mxu0
        %v2205 = vadd.f32 0.0, %v2204
        %2206 = vmatmul.bf16.gmra.mxu0 %v2122
        %v2207 = vpop.f32.mrf.mxu0
        %v2208 = vadd.f32 0.0, %v2207
        %v2209 = vpop.f32.mrf.mxu0
        %v2210 = vadd.f32 0.0, %v2209
        %2211 = vmatmul.bf16.gmra.mxu0 %v2123
        %v2212 = vpop.f32.mrf.mxu0
        %v2213 = vadd.f32 0.0, %v2212
        %v2214 = vpop.f32.mrf.mxu0
        %v2215 = vadd.f32 0.0, %v2214
        %2216 = vmatmul.bf16.gmra.mxu0 %v2124
        %v2217 = vpop.f32.mrf.mxu0
        %v2218 = vadd.f32 0.0, %v2217
        %v2219 = vpop.f32.mrf.mxu0
        %v2220 = vadd.f32 0.0, %v2219
        %2221 = vmatmul.bf16.gmra.mxu0 %v2125
        %v2222 = vpop.f32.mrf.mxu0
        %v2223 = vadd.f32 0.0, %v2222
        %v2224 = vpop.f32.mrf.mxu0
        %v2225 = vadd.f32 0.0, %v2224
        %2226 = vmatmul.bf16.gmra.mxu0 %v2126
        %v2227 = vpop.f32.mrf.mxu0
        %v2228 = vadd.f32 0.0, %v2227
        %v2229 = vpop.f32.mrf.mxu0
        %v2230 = vadd.f32 0.0, %v2229
        %2231 = vdwg.mxu0
        %v2232 = vadd.f32 %v2038, %v2193
        %v2233 = vadd.f32 %v2039, %v2195
        %v2234 = vadd.f32 %v2040, %v2198
        %v2235 = vadd.f32 %v2041, %v2200
        %v2236 = vadd.f32 %v2042, %v2203
        %v2237 = vadd.f32 %v2043, %v2205
        %v2238 = vadd.f32 %v2044, %v2208
        %v2239 = vadd.f32 %v2045, %v2210
        %v2240 = vadd.f32 %v2046, %v2213
        %v2241 = vadd.f32 %v2047, %v2215
        %v2242 = vadd.f32 %v2048, %v2218
        %v2243 = vadd.f32 %v2049, %v2220
        %v2244 = vadd.f32 %v2050, %v2223
        %v2245 = vadd.f32 %v2051, %v2225
        %v2246 = vadd.f32 %v2052, %v2228
        %v2247 = vadd.f32 %v2053, %v2230
        %v2248 = vld [vmem:[%s926] sm:$0xf]
        %v2249 = vld [vmem:[%s926 + $0x4] sm:$0xf]
        %v2250 = vld [vmem:[%s926 + $0x8] sm:$0x1]
        %v2251 = vld [vmem:[%s926 + $0xc] sm:$0xf]
        %v2252 = vld [vmem:[%s926 + $0x10] sm:$0xf]
        %v2253 = vld [vmem:[%s926 + $0x14] sm:$0x1]
        %v2254 = vld [vmem:[%s926 + $0x18] sm:$0xf]
        %v2255 = vld [vmem:[%s926 + $0x1c] sm:$0xf]
        %v2256 = vld [vmem:[%s926 + $0x20] sm:$0x1]
        %v2257 = vld [vmem:[%s926 + $0x24] sm:$0xf]
        %v2258 = vld [vmem:[%s926 + $0x28] sm:$0xf]
        %v2259 = vld [vmem:[%s926 + $0x2c] sm:$0x1]
        %v2260 = vld [vmem:[%s926 + $0x30] sm:$0xf]
        %v2261 = vld [vmem:[%s926 + $0x34] sm:$0xf]
        %v2262 = vld [vmem:[%s926 + $0x38] sm:$0x1]
        %v2263 = vld [vmem:[%s926 + $0x3c] sm:$0xf]
        %v2264 = vld [vmem:[%s926 + $0x40] sm:$0xf]
        %v2265 = vld [vmem:[%s926 + $0x44] sm:$0x1]
        %v2266 = vld [vmem:[%s926 + $0x48] sm:$0xf]
        %v2267 = vld [vmem:[%s926 + $0x4c] sm:$0xf]
        %v2268 = vld [vmem:[%s926 + $0x50] sm:$0x1]
        %v2269 = vld [vmem:[%s926 + $0x54] sm:$0xf]
        %v2270 = vld [vmem:[%s926 + $0x58] sm:$0xf]
        %v2271 = vld [vmem:[%s926 + $0x5c] sm:$0x1]
        %v2273 = vshrl.u32 %v2248, 16
        %v2275 = vrot.slane %v2273, 4
        %v2276 = vshll.u32 %v2248, 16
        %v2278 = vrot.slane %v2276, 5
        %v2279 = vor.u32 %v2275, %v2278
        %v2280 = vrot.slane %v2279, 4
        %v2282 = vshll.u32 %v2249, 16
        %v2284 = vrot.slane %v2282, 5
        %v2285 = vsel %vm1325, %v2280, %v2284
        %v2286 = vshrl.u32 %v2249, 16
        %v2288 = vrot.slane %v2286, 4
        %v2289 = vor.u32 %v2288, %v2284
        %v2290 = vrot.slane %v2289, 4
        %v2292 = vshll.u32 %v2250, 16
        %v2294 = vrot.slane %v2292, 5
        %v2295 = vsel %vm1325, %v2290, %v2294
        %v2297 = vshrl.u32 %v2251, 16
        %v2299 = vrot.slane %v2297, 4
        %v2300 = vshll.u32 %v2251, 16
        %v2302 = vrot.slane %v2300, 5
        %v2303 = vor.u32 %v2299, %v2302
        %v2304 = vrot.slane %v2303, 4
        %v2306 = vshll.u32 %v2252, 16
        %v2308 = vrot.slane %v2306, 5
        %v2309 = vsel %vm1325, %v2304, %v2308
        %v2310 = vshrl.u32 %v2252, 16
        %v2312 = vrot.slane %v2310, 4
        %v2313 = vor.u32 %v2312, %v2308
        %v2314 = vrot.slane %v2313, 4
        %v2316 = vshll.u32 %v2253, 16
        %v2318 = vrot.slane %v2316, 5
        %v2319 = vsel %vm1325, %v2314, %v2318
        %v2321 = vshrl.u32 %v2254, 16
        %v2323 = vrot.slane %v2321, 4
        %v2324 = vshll.u32 %v2254, 16
        %v2326 = vrot.slane %v2324, 5
        %v2327 = vor.u32 %v2323, %v2326
        %v2328 = vrot.slane %v2327, 4
        %v2330 = vshll.u32 %v2255, 16
        %v2332 = vrot.slane %v2330, 5
        %v2333 = vsel %vm1325, %v2328, %v2332
        %v2334 = vshrl.u32 %v2255, 16
        %v2336 = vrot.slane %v2334, 4
        %v2337 = vor.u32 %v2336, %v2332
        %v2338 = vrot.slane %v2337, 4
        %v2340 = vshll.u32 %v2256, 16
        %v2342 = vrot.slane %v2340, 5
        %v2343 = vsel %vm1325, %v2338, %v2342
        %v2345 = vshrl.u32 %v2257, 16
        %v2347 = vrot.slane %v2345, 4
        %v2348 = vshll.u32 %v2257, 16
        %v2350 = vrot.slane %v2348, 5
        %v2351 = vor.u32 %v2347, %v2350
        %v2352 = vrot.slane %v2351, 4
        %v2354 = vshll.u32 %v2258, 16
        %v2356 = vrot.slane %v2354, 5
        %v2357 = vsel %vm1325, %v2352, %v2356
        %v2358 = vshrl.u32 %v2258, 16
        %v2360 = vrot.slane %v2358, 4
        %v2361 = vor.u32 %v2360, %v2356
        %v2362 = vrot.slane %v2361, 4
        %v2364 = vshll.u32 %v2259, 16
        %v2366 = vrot.slane %v2364, 5
        %v2367 = vsel %vm1325, %v2362, %v2366
        %v2369 = vshrl.u32 %v2260, 16
        %v2371 = vrot.slane %v2369, 4
        %v2372 = vshll.u32 %v2260, 16
        %v2374 = vrot.slane %v2372, 5
        %v2375 = vor.u32 %v2371, %v2374
        %v2376 = vrot.slane %v2375, 4
        %v2378 = vshll.u32 %v2261, 16
        %v2380 = vrot.slane %v2378, 5
        %v2381 = vsel %vm1325, %v2376, %v2380
        %v2382 = vshrl.u32 %v2261, 16
        %v2384 = vrot.slane %v2382, 4
        %v2385 = vor.u32 %v2384, %v2380
        %v2386 = vrot.slane %v2385, 4
        %v2388 = vshll.u32 %v2262, 16
        %v2390 = vrot.slane %v2388, 5
        %v2391 = vsel %vm1325, %v2386, %v2390
        %v2393 = vshrl.u32 %v2263, 16
        %v2395 = vrot.slane %v2393, 4
        %v2396 = vshll.u32 %v2263, 16
        %v2398 = vrot.slane %v2396, 5
        %v2399 = vor.u32 %v2395, %v2398
        %v2400 = vrot.slane %v2399, 4
        %v2402 = vshll.u32 %v2264, 16
        %v2404 = vrot.slane %v2402, 5
        %v2405 = vsel %vm1325, %v2400, %v2404
        %v2406 = vshrl.u32 %v2264, 16
        %v2408 = vrot.slane %v2406, 4
        %v2409 = vor.u32 %v2408, %v2404
        %v2410 = vrot.slane %v2409, 4
        %v2412 = vshll.u32 %v2265, 16
        %v2414 = vrot.slane %v2412, 5
        %v2415 = vsel %vm1325, %v2410, %v2414
        %v2417 = vshrl.u32 %v2266, 16
        %v2419 = vrot.slane %v2417, 4
        %v2420 = vshll.u32 %v2266, 16
        %v2422 = vrot.slane %v2420, 5
        %v2423 = vor.u32 %v2419, %v2422
        %v2424 = vrot.slane %v2423, 4
        %v2426 = vshll.u32 %v2267, 16
        %v2428 = vrot.slane %v2426, 5
        %v2429 = vsel %vm1325, %v2424, %v2428
        %v2430 = vshrl.u32 %v2267, 16
        %v2432 = vrot.slane %v2430, 4
        %v2433 = vor.u32 %v2432, %v2428
        %v2434 = vrot.slane %v2433, 4
        %v2436 = vshll.u32 %v2268, 16
        %v2438 = vrot.slane %v2436, 5
        %v2439 = vsel %vm1325, %v2434, %v2438
        %v2441 = vshrl.u32 %v2269, 16
        %v2443 = vrot.slane %v2441, 4
        %v2444 = vshll.u32 %v2269, 16
        %v2446 = vrot.slane %v2444, 5
        %v2447 = vor.u32 %v2443, %v2446
        %v2448 = vrot.slane %v2447, 4
        %v2450 = vshll.u32 %v2270, 16
        %v2452 = vrot.slane %v2450, 5
        %v2453 = vsel %vm1325, %v2448, %v2452
        %v2454 = vshrl.u32 %v2270, 16
        %v2456 = vrot.slane %v2454, 4
        %v2457 = vor.u32 %v2456, %v2452
        %v2458 = vrot.slane %v2457, 4
        %v2460 = vshll.u32 %v2271, 16
        %v2462 = vrot.slane %v2460, 5
        %v2463 = vsel %vm1325, %v2458, %v2462
        %s2464 = scalar_lea.vmem [#allocation8], 256
        %v2465 = vld [vmem:[%s2464] sm:$0xf]
        %v2466 = vld [vmem:[%s2464 + $0x4] sm:$0xf]
        %v2467 = vld [vmem:[%s2464 + $0x8] sm:$0xf]
        %v2468 = vld [vmem:[%s2464 + $0xc] sm:$0xf]
        %v2469 = vld [vmem:[%s2464 + $0x10] sm:$0xf]
        %v2470 = vld [vmem:[%s2464 + $0x14] sm:$0xf]
        %v2471 = vld [vmem:[%s2464 + $0x18] sm:$0xf]
        %v2472 = vld [vmem:[%s2464 + $0x1c] sm:$0xf]
        %v2473 = vld [vmem:[%s2464 + $0x20] sm:$0xf]
        %v2474 = vld [vmem:[%s2464 + $0x24] sm:$0xf]
        %v2475 = vld [vmem:[%s2464 + $0x28] sm:$0xf]
        %v2476 = vld [vmem:[%s2464 + $0x2c] sm:$0xf]
        %v2477 = vld [vmem:[%s2464 + $0x30] sm:$0xf]
        %v2478 = vld [vmem:[%s2464 + $0x34] sm:$0xf]
        %v2479 = vld [vmem:[%s2464 + $0x38] sm:$0xf]
        %v2480 = vld [vmem:[%s2464 + $0x3c] sm:$0xf]
        %v2481 = vunpack.c.l.b16 %v2285
        %v2482 = vunpack.c.l.b16 %v2295
        %v2483 = vunpack.c.l.b16 %v2309
        %v2484 = vunpack.c.l.b16 %v2319
        %v2485 = vunpack.c.l.b16 %v2333
        %v2486 = vunpack.c.l.b16 %v2343
        %v2487 = vunpack.c.l.b16 %v2357
        %v2488 = vunpack.c.l.b16 %v2367
        %v2489 = vunpack.c.l.b16 %v2381
        %v2490 = vunpack.c.l.b16 %v2391
        %v2491 = vunpack.c.l.b16 %v2405
        %v2492 = vunpack.c.l.b16 %v2415
        %v2493 = vunpack.c.l.b16 %v2429
        %v2494 = vunpack.c.l.b16 %v2439
        %v2495 = vunpack.c.l.b16 %v2453
        %v2496 = vunpack.c.l.b16 %v2463
        %v2497 = vpack.c.b16 %v2482, %v2481
        %v2498 = vpack.c.b16 %v2484, %v2483
        %v2499 = vpack.c.b16 %v2486, %v2485
        %v2500 = vpack.c.b16 %v2488, %v2487
        %v2501 = vpack.c.b16 %v2490, %v2489
        %v2502 = vpack.c.b16 %v2492, %v2491
        %v2503 = vpack.c.b16 %v2494, %v2493
        %v2504 = vpack.c.b16 %v2496, %v2495
        %v2529 = vunpack.c.l.b16 %v2465
        %v2530 = vunpack.c.l.b16 %v2466
        %v2531 = vunpack.c.l.b16 %v2467
        %v2532 = vunpack.c.l.b16 %v2468
        %v2533 = vunpack.c.l.b16 %v2469
        %v2534 = vunpack.c.l.b16 %v2470
        %v2535 = vunpack.c.l.b16 %v2471
        %v2536 = vunpack.c.l.b16 %v2472
        %v2537 = vunpack.c.l.b16 %v2473
        %v2538 = vunpack.c.l.b16 %v2474
        %v2539 = vunpack.c.l.b16 %v2475
        %v2540 = vunpack.c.l.b16 %v2476
        %v2541 = vunpack.c.l.b16 %v2477
        %v2542 = vunpack.c.l.b16 %v2478
        %v2543 = vunpack.c.l.b16 %v2479
        %v2544 = vunpack.c.l.b16 %v2480
        %v2545 = vpack.c.b16 %v2530, %v2529
        %v2546 = vpack.c.b16 %v2532, %v2531
        %v2547 = vpack.c.b16 %v2534, %v2533
        %v2548 = vpack.c.b16 %v2536, %v2535
        %v2549 = vpack.c.b16 %v2538, %v2537
        %v2550 = vpack.c.b16 %v2540, %v2539
        %v2551 = vpack.c.b16 %v2542, %v2541
        %v2552 = vpack.c.b16 %v2544, %v2543
        %2561 = vmatpush.bf16.msra.mxu0 %v2552
        %2562 = vmatpush.bf16.msra.mxu0 %v2551
        %2563 = vmatpush.bf16.msra.mxu0 %v2550
        %2564 = vmatpush.bf16.msra.mxu0 %v2549
        %2565 = vmatpush.bf16.msra.mxu0 %v2548
        %2566 = vmatpush.bf16.msra.mxu0 %v2547
        %2567 = vmatpush.bf16.msra.mxu0 %v2546
        %2568 = vmatpush.bf16.msra.mxu0 %v2545
        %2569 = vmatmul.bf16.gmra.mxu0 %v2497
        %v2570 = vpop.f32.mrf.mxu0
        %v2571 = vadd.f32 0.0, %v2570
        %v2572 = vpop.f32.mrf.mxu0
        %v2573 = vadd.f32 0.0, %v2572
        %2574 = vmatmul.bf16.gmra.mxu0 %v2498
        %v2575 = vpop.f32.mrf.mxu0
        %v2576 = vadd.f32 0.0, %v2575
        %v2577 = vpop.f32.mrf.mxu0
        %v2578 = vadd.f32 0.0, %v2577
        %2579 = vmatmul.bf16.gmra.mxu0 %v2499
        %v2580 = vpop.f32.mrf.mxu0
        %v2581 = vadd.f32 0.0, %v2580
        %v2582 = vpop.f32.mrf.mxu0
        %v2583 = vadd.f32 0.0, %v2582
        %2584 = vmatmul.bf16.gmra.mxu0 %v2500
        %v2585 = vpop.f32.mrf.mxu0
        %v2586 = vadd.f32 0.0, %v2585
        %v2587 = vpop.f32.mrf.mxu0
        %v2588 = vadd.f32 0.0, %v2587
        %2589 = vmatmul.bf16.gmra.mxu0 %v2501
        %v2590 = vpop.f32.mrf.mxu0
        %v2591 = vadd.f32 0.0, %v2590
        %v2592 = vpop.f32.mrf.mxu0
        %v2593 = vadd.f32 0.0, %v2592
        %2594 = vmatmul.bf16.gmra.mxu0 %v2502
        %v2595 = vpop.f32.mrf.mxu0
        %v2596 = vadd.f32 0.0, %v2595
        %v2597 = vpop.f32.mrf.mxu0
        %v2598 = vadd.f32 0.0, %v2597
        %2599 = vmatmul.bf16.gmra.mxu0 %v2503
        %v2600 = vpop.f32.mrf.mxu0
        %v2601 = vadd.f32 0.0, %v2600
        %v2602 = vpop.f32.mrf.mxu0
        %v2603 = vadd.f32 0.0, %v2602
        %2604 = vmatmul.bf16.gmra.mxu0 %v2504
        %v2605 = vpop.f32.mrf.mxu0
        %v2606 = vadd.f32 0.0, %v2605
        %v2607 = vpop.f32.mrf.mxu0
        %v2608 = vadd.f32 0.0, %v2607
        %2609 = vdwg.mxu0
        %v2610 = vadd.f32 %v2232, %v2571
        %v2611 = vadd.f32 %v2233, %v2573
        %v2612 = vadd.f32 %v2234, %v2576
        %v2613 = vadd.f32 %v2235, %v2578
        %v2614 = vadd.f32 %v2236, %v2581
        %v2615 = vadd.f32 %v2237, %v2583
        %v2616 = vadd.f32 %v2238, %v2586
        %v2617 = vadd.f32 %v2239, %v2588
        %v2618 = vadd.f32 %v2240, %v2591
        %v2619 = vadd.f32 %v2241, %v2593
        %v2620 = vadd.f32 %v2242, %v2596
        %v2621 = vadd.f32 %v2243, %v2598
        %v2622 = vadd.f32 %v2244, %v2601
        %v2623 = vadd.f32 %v2245, %v2603
        %v2624 = vadd.f32 %v2246, %v2606
        %v2625 = vadd.f32 %v2247, %v2608
        %v2626 = vld [vmem:[%s926] sm:$0xe]
        %v2627 = vld [vmem:[%s926 + $0xc] sm:$0xe]
        %v2628 = vld [vmem:[%s926 + $0x18] sm:$0xe]
        %v2629 = vld [vmem:[%s926 + $0x24] sm:$0xe]
        %v2630 = vld [vmem:[%s926 + $0x30] sm:$0xe]
        %v2631 = vld [vmem:[%s926 + $0x3c] sm:$0xe]
        %v2632 = vld [vmem:[%s926 + $0x48] sm:$0xe]
        %v2633 = vld [vmem:[%s926 + $0x54] sm:$0xe]
        %v2658 = vrot.slane %v2626, 5
        %v2659 = vrot.slane %v2658, 4
        %v2660 = vrot.slane %v2249, 5
        %v2661 = vsel %vm1835, %v2659, %v2660
        %v2662 = vrot.slane %v2660, 4
        %v2663 = vrot.slane %v2250, 5
        %v2664 = vsel %vm1835, %v2662, %v2663
        %v2665 = vrot.slane %v2627, 5
        %v2666 = vrot.slane %v2665, 4
        %v2667 = vrot.slane %v2252, 5
        %v2668 = vsel %vm1835, %v2666, %v2667
        %v2669 = vrot.slane %v2667, 4
        %v2670 = vrot.slane %v2253, 5
        %v2671 = vsel %vm1835, %v2669, %v2670
        %v2672 = vrot.slane %v2628, 5
        %v2673 = vrot.slane %v2672, 4
        %v2674 = vrot.slane %v2255, 5
        %v2675 = vsel %vm1835, %v2673, %v2674
        %v2676 = vrot.slane %v2674, 4
        %v2677 = vrot.slane %v2256, 5
        %v2678 = vsel %vm1835, %v2676, %v2677
        %v2679 = vrot.slane %v2629, 5
        %v2680 = vrot.slane %v2679, 4
        %v2681 = vrot.slane %v2258, 5
        %v2682 = vsel %vm1835, %v2680, %v2681
        %v2683 = vrot.slane %v2681, 4
        %v2684 = vrot.slane %v2259, 5
        %v2685 = vsel %vm1835, %v2683, %v2684
        %v2686 = vrot.slane %v2630, 5
        %v2687 = vrot.slane %v2686, 4
        %v2688 = vrot.slane %v2261, 5
        %v2689 = vsel %vm1835, %v2687, %v2688
        %v2690 = vrot.slane %v2688, 4
        %v2691 = vrot.slane %v2262, 5
        %v2692 = vsel %vm1835, %v2690, %v2691
        %v2693 = vrot.slane %v2631, 5
        %v2694 = vrot.slane %v2693, 4
        %v2695 = vrot.slane %v2264, 5
        %v2696 = vsel %vm1835, %v2694, %v2695
        %v2697 = vrot.slane %v2695, 4
        %v2698 = vrot.slane %v2265, 5
        %v2699 = vsel %vm1835, %v2697, %v2698
        %v2700 = vrot.slane %v2632, 5
        %v2701 = vrot.slane %v2700, 4
        %v2702 = vrot.slane %v2267, 5
        %v2703 = vsel %vm1835, %v2701, %v2702
        %v2704 = vrot.slane %v2702, 4
        %v2705 = vrot.slane %v2268, 5
        %v2706 = vsel %vm1835, %v2704, %v2705
        %v2707 = vrot.slane %v2633, 5
        %v2708 = vrot.slane %v2707, 4
        %v2709 = vrot.slane %v2270, 5
        %v2710 = vsel %vm1835, %v2708, %v2709
        %v2711 = vrot.slane %v2709, 4
        %v2712 = vrot.slane %v2271, 5
        %v2713 = vsel %vm1835, %v2711, %v2712
        %s2714 = scalar_lea.vmem [#allocation8], 320
        %v2715 = vld [vmem:[%s2714] sm:$0xf]
        %v2716 = vld [vmem:[%s2714 + $0x4] sm:$0xf]
        %v2717 = vld [vmem:[%s2714 + $0x8] sm:$0xf]
        %v2718 = vld [vmem:[%s2714 + $0xc] sm:$0xf]
        %v2719 = vld [vmem:[%s2714 + $0x10] sm:$0xf]
        %v2720 = vld [vmem:[%s2714 + $0x14] sm:$0xf]
        %v2721 = vld [vmem:[%s2714 + $0x18] sm:$0xf]
        %v2722 = vld [vmem:[%s2714 + $0x1c] sm:$0xf]
        %v2723 = vld [vmem:[%s2714 + $0x20] sm:$0xf]
        %v2724 = vld [vmem:[%s2714 + $0x24] sm:$0xf]
        %v2725 = vld [vmem:[%s2714 + $0x28] sm:$0xf]
        %v2726 = vld [vmem:[%s2714 + $0x2c] sm:$0xf]
        %v2727 = vld [vmem:[%s2714 + $0x30] sm:$0xf]
        %v2728 = vld [vmem:[%s2714 + $0x34] sm:$0xf]
        %v2729 = vld [vmem:[%s2714 + $0x38] sm:$0xf]
        %v2730 = vld [vmem:[%s2714 + $0x3c] sm:$0xf]
        %v2731 = vunpack.c.l.b16 %v2661
        %v2732 = vunpack.c.l.b16 %v2664
        %v2733 = vunpack.c.l.b16 %v2668
        %v2734 = vunpack.c.l.b16 %v2671
        %v2735 = vunpack.c.l.b16 %v2675
        %v2736 = vunpack.c.l.b16 %v2678
        %v2737 = vunpack.c.l.b16 %v2682
        %v2738 = vunpack.c.l.b16 %v2685
        %v2739 = vunpack.c.l.b16 %v2689
        %v2740 = vunpack.c.l.b16 %v2692
        %v2741 = vunpack.c.l.b16 %v2696
        %v2742 = vunpack.c.l.b16 %v2699
        %v2743 = vunpack.c.l.b16 %v2703
        %v2744 = vunpack.c.l.b16 %v2706
        %v2745 = vunpack.c.l.b16 %v2710
        %v2746 = vunpack.c.l.b16 %v2713
        %v2747 = vpack.c.b16 %v2732, %v2731
        %v2748 = vpack.c.b16 %v2734, %v2733
        %v2749 = vpack.c.b16 %v2736, %v2735
        %v2750 = vpack.c.b16 %v2738, %v2737
        %v2751 = vpack.c.b16 %v2740, %v2739
        %v2752 = vpack.c.b16 %v2742, %v2741
        %v2753 = vpack.c.b16 %v2744, %v2743
        %v2754 = vpack.c.b16 %v2746, %v2745
        %v2779 = vunpack.c.l.b16 %v2715
        %v2780 = vunpack.c.l.b16 %v2716
        %v2781 = vunpack.c.l.b16 %v2717
        %v2782 = vunpack.c.l.b16 %v2718
        %v2783 = vunpack.c.l.b16 %v2719
        %v2784 = vunpack.c.l.b16 %v2720
        %v2785 = vunpack.c.l.b16 %v2721
        %v2786 = vunpack.c.l.b16 %v2722
        %v2787 = vunpack.c.l.b16 %v2723
        %v2788 = vunpack.c.l.b16 %v2724
        %v2789 = vunpack.c.l.b16 %v2725
        %v2790 = vunpack.c.l.b16 %v2726
        %v2791 = vunpack.c.l.b16 %v2727
        %v2792 = vunpack.c.l.b16 %v2728
        %v2793 = vunpack.c.l.b16 %v2729
        %v2794 = vunpack.c.l.b16 %v2730
        %v2795 = vpack.c.b16 %v2780, %v2779
        %v2796 = vpack.c.b16 %v2782, %v2781
        %v2797 = vpack.c.b16 %v2784, %v2783
        %v2798 = vpack.c.b16 %v2786, %v2785
        %v2799 = vpack.c.b16 %v2788, %v2787
        %v2800 = vpack.c.b16 %v2790, %v2789
        %v2801 = vpack.c.b16 %v2792, %v2791
        %v2802 = vpack.c.b16 %v2794, %v2793
        %2811 = vmatpush.bf16.msra.mxu0 %v2802
        %2812 = vmatpush.bf16.msra.mxu0 %v2801
        %2813 = vmatpush.bf16.msra.mxu0 %v2800
        %2814 = vmatpush.bf16.msra.mxu0 %v2799
        %2815 = vmatpush.bf16.msra.mxu0 %v2798
        %2816 = vmatpush.bf16.msra.mxu0 %v2797
        %2817 = vmatpush.bf16.msra.mxu0 %v2796
        %2818 = vmatpush.bf16.msra.mxu0 %v2795
        %2819 = vmatmul.bf16.gmra.mxu0 %v2747
        %v2820 = vpop.f32.mrf.mxu0
        %v2821 = vadd.f32 0.0, %v2820
        %v2822 = vpop.f32.mrf.mxu0
        %v2823 = vadd.f32 0.0, %v2822
        %2824 = vmatmul.bf16.gmra.mxu0 %v2748
        %v2825 = vpop.f32.mrf.mxu0
        %v2826 = vadd.f32 0.0, %v2825
        %v2827 = vpop.f32.mrf.mxu0
        %v2828 = vadd.f32 0.0, %v2827
        %2829 = vmatmul.bf16.gmra.mxu0 %v2749
        %v2830 = vpop.f32.mrf.mxu0
        %v2831 = vadd.f32 0.0, %v2830
        %v2832 = vpop.f32.mrf.mxu0
        %v2833 = vadd.f32 0.0, %v2832
        %2834 = vmatmul.bf16.gmra.mxu0 %v2750
        %v2835 = vpop.f32.mrf.mxu0
        %v2836 = vadd.f32 0.0, %v2835
        %v2837 = vpop.f32.mrf.mxu0
        %v2838 = vadd.f32 0.0, %v2837
        %2839 = vmatmul.bf16.gmra.mxu0 %v2751
        %v2840 = vpop.f32.mrf.mxu0
        %v2841 = vadd.f32 0.0, %v2840
        %v2842 = vpop.f32.mrf.mxu0
        %v2843 = vadd.f32 0.0, %v2842
        %2844 = vmatmul.bf16.gmra.mxu0 %v2752
        %v2845 = vpop.f32.mrf.mxu0
        %v2846 = vadd.f32 0.0, %v2845
        %v2847 = vpop.f32.mrf.mxu0
        %v2848 = vadd.f32 0.0, %v2847
        %2849 = vmatmul.bf16.gmra.mxu0 %v2753
        %v2850 = vpop.f32.mrf.mxu0
        %v2851 = vadd.f32 0.0, %v2850
        %v2852 = vpop.f32.mrf.mxu0
        %v2853 = vadd.f32 0.0, %v2852
        %2854 = vmatmul.bf16.gmra.mxu0 %v2754
        %v2855 = vpop.f32.mrf.mxu0
        %v2856 = vadd.f32 0.0, %v2855
        %v2857 = vpop.f32.mrf.mxu0
        %v2858 = vadd.f32 0.0, %v2857
        %2859 = vdwg.mxu0
        %v2860 = vadd.f32 %v2610, %v2821
        %v2861 = vadd.f32 %v2611, %v2823
        %v2862 = vadd.f32 %v2612, %v2826
        %v2863 = vadd.f32 %v2613, %v2828
        %v2864 = vadd.f32 %v2614, %v2831
        %v2865 = vadd.f32 %v2615, %v2833
        %v2866 = vadd.f32 %v2616, %v2836
        %v2867 = vadd.f32 %v2617, %v2838
        %v2868 = vadd.f32 %v2618, %v2841
        %v2869 = vadd.f32 %v2619, %v2843
        %v2870 = vadd.f32 %v2620, %v2846
        %v2871 = vadd.f32 %v2621, %v2848
        %v2872 = vadd.f32 %v2622, %v2851
        %v2873 = vadd.f32 %v2623, %v2853
        %v2874 = vadd.f32 %v2624, %v2856
        %v2875 = vadd.f32 %v2625, %v2858
        %s2876 = scalar_lea.vmem [#allocation2], 24
        %v2877 = vld [vmem:[%s2876] sm:$0xf]
        %v2878 = vld [vmem:[%s2876 + $0x4] sm:$0xf]
        %v2879 = vld [vmem:[%s2876 + $0xc] sm:$0xf]
        %v2880 = vld [vmem:[%s2876 + $0x10] sm:$0xf]
        %v2881 = vld [vmem:[%s2876 + $0x18] sm:$0xf]
        %v2882 = vld [vmem:[%s2876 + $0x1c] sm:$0xf]
        %v2883 = vld [vmem:[%s2876 + $0x24] sm:$0xf]
        %v2884 = vld [vmem:[%s2876 + $0x28] sm:$0xf]
        %v2885 = vld [vmem:[%s2876 + $0x30] sm:$0xf]
        %v2886 = vld [vmem:[%s2876 + $0x34] sm:$0xf]
        %v2887 = vld [vmem:[%s2876 + $0x3c] sm:$0xf]
        %v2888 = vld [vmem:[%s2876 + $0x40] sm:$0xf]
        %v2889 = vld [vmem:[%s2876 + $0x48] sm:$0xf]
        %v2890 = vld [vmem:[%s2876 + $0x4c] sm:$0xf]
        %v2891 = vld [vmem:[%s2876 + $0x54] sm:$0xf]
        %v2892 = vld [vmem:[%s2876 + $0x58] sm:$0xf]
        %s2893 = scalar_lea.vmem [#allocation8], 384
        %v2894 = vld [vmem:[%s2893] sm:$0xf]
        %v2895 = vld [vmem:[%s2893 + $0x4] sm:$0xf]
        %v2896 = vld [vmem:[%s2893 + $0x8] sm:$0xf]
        %v2897 = vld [vmem:[%s2893 + $0xc] sm:$0xf]
        %v2898 = vld [vmem:[%s2893 + $0x10] sm:$0xf]
        %v2899 = vld [vmem:[%s2893 + $0x14] sm:$0xf]
        %v2900 = vld [vmem:[%s2893 + $0x18] sm:$0xf]
        %v2901 = vld [vmem:[%s2893 + $0x1c] sm:$0xf]
        %v2902 = vld [vmem:[%s2893 + $0x20] sm:$0xf]
        %v2903 = vld [vmem:[%s2893 + $0x24] sm:$0xf]
        %v2904 = vld [vmem:[%s2893 + $0x28] sm:$0xf]
        %v2905 = vld [vmem:[%s2893 + $0x2c] sm:$0xf]
        %v2906 = vld [vmem:[%s2893 + $0x30] sm:$0xf]
        %v2907 = vld [vmem:[%s2893 + $0x34] sm:$0xf]
        %v2908 = vld [vmem:[%s2893 + $0x38] sm:$0xf]
        %v2909 = vld [vmem:[%s2893 + $0x3c] sm:$0xf]
        %v2926 = vunpack.c.l.b16 %v2877
        %v2927 = vunpack.c.l.b16 %v2878
        %v2928 = vunpack.c.l.b16 %v2879
        %v2929 = vunpack.c.l.b16 %v2880
        %v2930 = vunpack.c.l.b16 %v2881
        %v2931 = vunpack.c.l.b16 %v2882
        %v2932 = vunpack.c.l.b16 %v2883
        %v2933 = vunpack.c.l.b16 %v2884
        %v2934 = vunpack.c.l.b16 %v2885
        %v2935 = vunpack.c.l.b16 %v2886
        %v2936 = vunpack.c.l.b16 %v2887
        %v2937 = vunpack.c.l.b16 %v2888
        %v2938 = vunpack.c.l.b16 %v2889
        %v2939 = vunpack.c.l.b16 %v2890
        %v2940 = vunpack.c.l.b16 %v2891
        %v2941 = vunpack.c.l.b16 %v2892
        %v2942 = vpack.c.b16 %v2927, %v2926
        %v2943 = vpack.c.b16 %v2929, %v2928
        %v2944 = vpack.c.b16 %v2931, %v2930
        %v2945 = vpack.c.b16 %v2933, %v2932
        %v2946 = vpack.c.b16 %v2935, %v2934
        %v2947 = vpack.c.b16 %v2937, %v2936
        %v2948 = vpack.c.b16 %v2939, %v2938
        %v2949 = vpack.c.b16 %v2941, %v2940
        %v2974 = vunpack.c.l.b16 %v2894
        %v2975 = vunpack.c.l.b16 %v2895
        %v2976 = vunpack.c.l.b16 %v2896
        %v2977 = vunpack.c.l.b16 %v2897
        %v2978 = vunpack.c.l.b16 %v2898
        %v2979 = vunpack.c.l.b16 %v2899
        %v2980 = vunpack.c.l.b16 %v2900
        %v2981 = vunpack.c.l.b16 %v2901
        %v2982 = vunpack.c.l.b16 %v2902
        %v2983 = vunpack.c.l.b16 %v2903
        %v2984 = vunpack.c.l.b16 %v2904
        %v2985 = vunpack.c.l.b16 %v2905
        %v2986 = vunpack.c.l.b16 %v2906
        %v2987 = vunpack.c.l.b16 %v2907
        %v2988 = vunpack.c.l.b16 %v2908
        %v2989 = vunpack.c.l.b16 %v2909
        %v2990 = vpack.c.b16 %v2975, %v2974
        %v2991 = vpack.c.b16 %v2977, %v2976
        %v2992 = vpack.c.b16 %v2979, %v2978
        %v2993 = vpack.c.b16 %v2981, %v2980
        %v2994 = vpack.c.b16 %v2983, %v2982
        %v2995 = vpack.c.b16 %v2985, %v2984
        %v2996 = vpack.c.b16 %v2987, %v2986
        %v2997 = vpack.c.b16 %v2989, %v2988
        %3006 = vmatpush.bf16.msra.mxu0 %v2997
        %3007 = vmatpush.bf16.msra.mxu0 %v2996
        %3008 = vmatpush.bf16.msra.mxu0 %v2995
        %3009 = vmatpush.bf16.msra.mxu0 %v2994
        %3010 = vmatpush.bf16.msra.mxu0 %v2993
        %3011 = vmatpush.bf16.msra.mxu0 %v2992
        %3012 = vmatpush.bf16.msra.mxu0 %v2991
        %3013 = vmatpush.bf16.msra.mxu0 %v2990
        %3014 = vmatmul.bf16.gmra.mxu0 %v2942
        %v3015 = vpop.f32.mrf.mxu0
        %v3016 = vadd.f32 0.0, %v3015
        %v3017 = vpop.f32.mrf.mxu0
        %v3018 = vadd.f32 0.0, %v3017
        %3019 = vmatmul.bf16.gmra.mxu0 %v2943
        %v3020 = vpop.f32.mrf.mxu0
        %v3021 = vadd.f32 0.0, %v3020
        %v3022 = vpop.f32.mrf.mxu0
        %v3023 = vadd.f32 0.0, %v3022
        %3024 = vmatmul.bf16.gmra.mxu0 %v2944
        %v3025 = vpop.f32.mrf.mxu0
        %v3026 = vadd.f32 0.0, %v3025
        %v3027 = vpop.f32.mrf.mxu0
        %v3028 = vadd.f32 0.0, %v3027
        %3029 = vmatmul.bf16.gmra.mxu0 %v2945
        %v3030 = vpop.f32.mrf.mxu0
        %v3031 = vadd.f32 0.0, %v3030
        %v3032 = vpop.f32.mrf.mxu0
        %v3033 = vadd.f32 0.0, %v3032
        %3034 = vmatmul.bf16.gmra.mxu0 %v2946
        %v3035 = vpop.f32.mrf.mxu0
        %v3036 = vadd.f32 0.0, %v3035
        %v3037 = vpop.f32.mrf.mxu0
        %v3038 = vadd.f32 0.0, %v3037
        %3039 = vmatmul.bf16.gmra.mxu0 %v2947
        %v3040 = vpop.f32.mrf.mxu0
        %v3041 = vadd.f32 0.0, %v3040
        %v3042 = vpop.f32.mrf.mxu0
        %v3043 = vadd.f32 0.0, %v3042
        %3044 = vmatmul.bf16.gmra.mxu0 %v2948
        %v3045 = vpop.f32.mrf.mxu0
        %v3046 = vadd.f32 0.0, %v3045
        %v3047 = vpop.f32.mrf.mxu0
        %v3048 = vadd.f32 0.0, %v3047
        %3049 = vmatmul.bf16.gmra.mxu0 %v2949
        %v3050 = vpop.f32.mrf.mxu0
        %v3051 = vadd.f32 0.0, %v3050
        %v3052 = vpop.f32.mrf.mxu0
        %v3053 = vadd.f32 0.0, %v3052
        %3054 = vdwg.mxu0
        %v3055 = vadd.f32 %v2860, %v3016
        %v3056 = vadd.f32 %v2861, %v3018
        %v3057 = vadd.f32 %v2862, %v3021
        %v3058 = vadd.f32 %v2863, %v3023
        %v3059 = vadd.f32 %v2864, %v3026
        %v3060 = vadd.f32 %v2865, %v3028
        %v3061 = vadd.f32 %v2866, %v3031
        %v3062 = vadd.f32 %v2867, %v3033
        %v3063 = vadd.f32 %v2868, %v3036
        %v3064 = vadd.f32 %v2869, %v3038
        %v3065 = vadd.f32 %v2870, %v3041
        %v3066 = vadd.f32 %v2871, %v3043
        %v3067 = vadd.f32 %v2872, %v3046
        %v3068 = vadd.f32 %v2873, %v3048
        %v3069 = vadd.f32 %v2874, %v3051
        %v3070 = vadd.f32 %v2875, %v3053
        %v3071 = vld [vmem:[%s2876] sm:$0xf]
        %v3072 = vld [vmem:[%s2876 + $0x4] sm:$0xf]
        %v3073 = vld [vmem:[%s2876 + $0x8] sm:$0x1]
        %v3074 = vld [vmem:[%s2876 + $0xc] sm:$0xf]
        %v3075 = vld [vmem:[%s2876 + $0x10] sm:$0xf]
        %v3076 = vld [vmem:[%s2876 + $0x14] sm:$0x1]
        %v3077 = vld [vmem:[%s2876 + $0x18] sm:$0xf]
        %v3078 = vld [vmem:[%s2876 + $0x1c] sm:$0xf]
        %v3079 = vld [vmem:[%s2876 + $0x20] sm:$0x1]
        %v3080 = vld [vmem:[%s2876 + $0x24] sm:$0xf]
        %v3081 = vld [vmem:[%s2876 + $0x28] sm:$0xf]
        %v3082 = vld [vmem:[%s2876 + $0x2c] sm:$0x1]
        %v3083 = vld [vmem:[%s2876 + $0x30] sm:$0xf]
        %v3084 = vld [vmem:[%s2876 + $0x34] sm:$0xf]
        %v3085 = vld [vmem:[%s2876 + $0x38] sm:$0x1]
        %v3086 = vld [vmem:[%s2876 + $0x3c] sm:$0xf]
        %v3087 = vld [vmem:[%s2876 + $0x40] sm:$0xf]
        %v3088 = vld [vmem:[%s2876 + $0x44] sm:$0x1]
        %v3089 = vld [vmem:[%s2876 + $0x48] sm:$0xf]
        %v3090 = vld [vmem:[%s2876 + $0x4c] sm:$0xf]
        %v3091 = vld [vmem:[%s2876 + $0x50] sm:$0x1]
        %v3092 = vld [vmem:[%s2876 + $0x54] sm:$0xf]
        %v3093 = vld [vmem:[%s2876 + $0x58] sm:$0xf]
        %v3094 = vld [vmem:[%s2876 + $0x5c] sm:$0x1]
        %v3096 = vshrl.u32 %v3071, 16
        %v3098 = vrot.slane %v3096, 4
        %v3099 = vshll.u32 %v3071, 16
        %v3101 = vrot.slane %v3099, 5
        %v3102 = vor.u32 %v3098, %v3101
        %v3103 = vrot.slane %v3102, 4
        %v3105 = vshll.u32 %v3072, 16
        %v3107 = vrot.slane %v3105, 5
        %v3108 = vsel %vm1325, %v3103, %v3107
        %v3109 = vshrl.u32 %v3072, 16
        %v3111 = vrot.slane %v3109, 4
        %v3112 = vor.u32 %v3111, %v3107
        %v3113 = vrot.slane %v3112, 4
        %v3115 = vshll.u32 %v3073, 16
        %v3117 = vrot.slane %v3115, 5
        %v3118 = vsel %vm1325, %v3113, %v3117
        %v3120 = vshrl.u32 %v3074, 16
        %v3122 = vrot.slane %v3120, 4
        %v3123 = vshll.u32 %v3074, 16
        %v3125 = vrot.slane %v3123, 5
        %v3126 = vor.u32 %v3122, %v3125
        %v3127 = vrot.slane %v3126, 4
        %v3129 = vshll.u32 %v3075, 16
        %v3131 = vrot.slane %v3129, 5
        %v3132 = vsel %vm1325, %v3127, %v3131
        %v3133 = vshrl.u32 %v3075, 16
        %v3135 = vrot.slane %v3133, 4
        %v3136 = vor.u32 %v3135, %v3131
        %v3137 = vrot.slane %v3136, 4
        %v3139 = vshll.u32 %v3076, 16
        %v3141 = vrot.slane %v3139, 5
        %v3142 = vsel %vm1325, %v3137, %v3141
        %v3144 = vshrl.u32 %v3077, 16
        %v3146 = vrot.slane %v3144, 4
        %v3147 = vshll.u32 %v3077, 16
        %v3149 = vrot.slane %v3147, 5
        %v3150 = vor.u32 %v3146, %v3149
        %v3151 = vrot.slane %v3150, 4
        %v3153 = vshll.u32 %v3078, 16
        %v3155 = vrot.slane %v3153, 5
        %v3156 = vsel %vm1325, %v3151, %v3155
        %v3157 = vshrl.u32 %v3078, 16
        %v3159 = vrot.slane %v3157, 4
        %v3160 = vor.u32 %v3159, %v3155
        %v3161 = vrot.slane %v3160, 4
        %v3163 = vshll.u32 %v3079, 16
        %v3165 = vrot.slane %v3163, 5
        %v3166 = vsel %vm1325, %v3161, %v3165
        %v3168 = vshrl.u32 %v3080, 16
        %v3170 = vrot.slane %v3168, 4
        %v3171 = vshll.u32 %v3080, 16
        %v3173 = vrot.slane %v3171, 5
        %v3174 = vor.u32 %v3170, %v3173
        %v3175 = vrot.slane %v3174, 4
        %v3177 = vshll.u32 %v3081, 16
        %v3179 = vrot.slane %v3177, 5
        %v3180 = vsel %vm1325, %v3175, %v3179
        %v3181 = vshrl.u32 %v3081, 16
        %v3183 = vrot.slane %v3181, 4
        %v3184 = vor.u32 %v3183, %v3179
        %v3185 = vrot.slane %v3184, 4
        %v3187 = vshll.u32 %v3082, 16
        %v3189 = vrot.slane %v3187, 5
        %v3190 = vsel %vm1325, %v3185, %v3189
        %v3192 = vshrl.u32 %v3083, 16
        %v3194 = vrot.slane %v3192, 4
        %v3195 = vshll.u32 %v3083, 16
        %v3197 = vrot.slane %v3195, 5
        %v3198 = vor.u32 %v3194, %v3197
        %v3199 = vrot.slane %v3198, 4
        %v3201 = vshll.u32 %v3084, 16
        %v3203 = vrot.slane %v3201, 5
        %v3204 = vsel %vm1325, %v3199, %v3203
        %v3205 = vshrl.u32 %v3084, 16
        %v3207 = vrot.slane %v3205, 4
        %v3208 = vor.u32 %v3207, %v3203
        %v3209 = vrot.slane %v3208, 4
        %v3211 = vshll.u32 %v3085, 16
        %v3213 = vrot.slane %v3211, 5
        %v3214 = vsel %vm1325, %v3209, %v3213
        %v3216 = vshrl.u32 %v3086, 16
        %v3218 = vrot.slane %v3216, 4
        %v3219 = vshll.u32 %v3086, 16
        %v3221 = vrot.slane %v3219, 5
        %v3222 = vor.u32 %v3218, %v3221
        %v3223 = vrot.slane %v3222, 4
        %v3225 = vshll.u32 %v3087, 16
        %v3227 = vrot.slane %v3225, 5
        %v3228 = vsel %vm1325, %v3223, %v3227
        %v3229 = vshrl.u32 %v3087, 16
        %v3231 = vrot.slane %v3229, 4
        %v3232 = vor.u32 %v3231, %v3227
        %v3233 = vrot.slane %v3232, 4
        %v3235 = vshll.u32 %v3088, 16
        %v3237 = vrot.slane %v3235, 5
        %v3238 = vsel %vm1325, %v3233, %v3237
        %v3240 = vshrl.u32 %v3089, 16
        %v3242 = vrot.slane %v3240, 4
        %v3243 = vshll.u32 %v3089, 16
        %v3245 = vrot.slane %v3243, 5
        %v3246 = vor.u32 %v3242, %v3245
        %v3247 = vrot.slane %v3246, 4
        %v3249 = vshll.u32 %v3090, 16
        %v3251 = vrot.slane %v3249, 5
        %v3252 = vsel %vm1325, %v3247, %v3251
        %v3253 = vshrl.u32 %v3090, 16
        %v3255 = vrot.slane %v3253, 4
        %v3256 = vor.u32 %v3255, %v3251
        %v3257 = vrot.slane %v3256, 4
        %v3259 = vshll.u32 %v3091, 16
        %v3261 = vrot.slane %v3259, 5
        %v3262 = vsel %vm1325, %v3257, %v3261
        %v3264 = vshrl.u32 %v3092, 16
        %v3266 = vrot.slane %v3264, 4
        %v3267 = vshll.u32 %v3092, 16
        %v3269 = vrot.slane %v3267, 5
        %v3270 = vor.u32 %v3266, %v3269
        %v3271 = vrot.slane %v3270, 4
        %v3273 = vshll.u32 %v3093, 16
        %v3275 = vrot.slane %v3273, 5
        %v3276 = vsel %vm1325, %v3271, %v3275
        %v3277 = vshrl.u32 %v3093, 16
        %v3279 = vrot.slane %v3277, 4
        %v3280 = vor.u32 %v3279, %v3275
        %v3281 = vrot.slane %v3280, 4
        %v3283 = vshll.u32 %v3094, 16
        %v3285 = vrot.slane %v3283, 5
        %v3286 = vsel %vm1325, %v3281, %v3285
        %s3287 = scalar_lea.vmem [#allocation8], 448
        %v3288 = vld [vmem:[%s3287] sm:$0xf]
        %v3289 = vld [vmem:[%s3287 + $0x4] sm:$0xf]
        %v3290 = vld [vmem:[%s3287 + $0x8] sm:$0xf]
        %v3291 = vld [vmem:[%s3287 + $0xc] sm:$0xf]
        %v3292 = vld [vmem:[%s3287 + $0x10] sm:$0xf]
        %v3293 = vld [vmem:[%s3287 + $0x14] sm:$0xf]
        %v3294 = vld [vmem:[%s3287 + $0x18] sm:$0xf]
        %v3295 = vld [vmem:[%s3287 + $0x1c] sm:$0xf]
        %v3296 = vld [vmem:[%s3287 + $0x20] sm:$0xf]
        %v3297 = vld [vmem:[%s3287 + $0x24] sm:$0xf]
        %v3298 = vld [vmem:[%s3287 + $0x28] sm:$0xf]
        %v3299 = vld [vmem:[%s3287 + $0x2c] sm:$0xf]
        %v3300 = vld [vmem:[%s3287 + $0x30] sm:$0xf]
        %v3301 = vld [vmem:[%s3287 + $0x34] sm:$0xf]
        %v3302 = vld [vmem:[%s3287 + $0x38] sm:$0xf]
        %v3303 = vld [vmem:[%s3287 + $0x3c] sm:$0xf]
        %v3304 = vunpack.c.l.b16 %v3108
        %v3305 = vunpack.c.l.b16 %v3118
        %v3306 = vunpack.c.l.b16 %v3132
        %v3307 = vunpack.c.l.b16 %v3142
        %v3308 = vunpack.c.l.b16 %v3156
        %v3309 = vunpack.c.l.b16 %v3166
        %v3310 = vunpack.c.l.b16 %v3180
        %v3311 = vunpack.c.l.b16 %v3190
        %v3312 = vunpack.c.l.b16 %v3204
        %v3313 = vunpack.c.l.b16 %v3214
        %v3314 = vunpack.c.l.b16 %v3228
        %v3315 = vunpack.c.l.b16 %v3238
        %v3316 = vunpack.c.l.b16 %v3252
        %v3317 = vunpack.c.l.b16 %v3262
        %v3318 = vunpack.c.l.b16 %v3276
        %v3319 = vunpack.c.l.b16 %v3286
        %v3320 = vpack.c.b16 %v3305, %v3304
        %v3321 = vpack.c.b16 %v3307, %v3306
        %v3322 = vpack.c.b16 %v3309, %v3308
        %v3323 = vpack.c.b16 %v3311, %v3310
        %v3324 = vpack.c.b16 %v3313, %v3312
        %v3325 = vpack.c.b16 %v3315, %v3314
        %v3326 = vpack.c.b16 %v3317, %v3316
        %v3327 = vpack.c.b16 %v3319, %v3318
        %v3352 = vunpack.c.l.b16 %v3288
        %v3353 = vunpack.c.l.b16 %v3289
        %v3354 = vunpack.c.l.b16 %v3290
        %v3355 = vunpack.c.l.b16 %v3291
        %v3356 = vunpack.c.l.b16 %v3292
        %v3357 = vunpack.c.l.b16 %v3293
        %v3358 = vunpack.c.l.b16 %v3294
        %v3359 = vunpack.c.l.b16 %v3295
        %v3360 = vunpack.c.l.b16 %v3296
        %v3361 = vunpack.c.l.b16 %v3297
        %v3362 = vunpack.c.l.b16 %v3298
        %v3363 = vunpack.c.l.b16 %v3299
        %v3364 = vunpack.c.l.b16 %v3300
        %v3365 = vunpack.c.l.b16 %v3301
        %v3366 = vunpack.c.l.b16 %v3302
        %v3367 = vunpack.c.l.b16 %v3303
        %v3368 = vpack.c.b16 %v3353, %v3352
        %v3369 = vpack.c.b16 %v3355, %v3354
        %v3370 = vpack.c.b16 %v3357, %v3356
        %v3371 = vpack.c.b16 %v3359, %v3358
        %v3372 = vpack.c.b16 %v3361, %v3360
        %v3373 = vpack.c.b16 %v3363, %v3362
        %v3374 = vpack.c.b16 %v3365, %v3364
        %v3375 = vpack.c.b16 %v3367, %v3366
        %3384 = vmatpush.bf16.msra.mxu0 %v3375
        %3385 = vmatpush.bf16.msra.mxu0 %v3374
        %3386 = vmatpush.bf16.msra.mxu0 %v3373
        %3387 = vmatpush.bf16.msra.mxu0 %v3372
        %3388 = vmatpush.bf16.msra.mxu0 %v3371
        %3389 = vmatpush.bf16.msra.mxu0 %v3370
        %3390 = vmatpush.bf16.msra.mxu0 %v3369
        %3391 = vmatpush.bf16.msra.mxu0 %v3368
        %3392 = vmatmul.bf16.gmra.mxu0 %v3320
        %v3393 = vpop.f32.mrf.mxu0
        %v3394 = vadd.f32 0.0, %v3393
        %v3395 = vpop.f32.mrf.mxu0
        %v3396 = vadd.f32 0.0, %v3395
        %3397 = vmatmul.bf16.gmra.mxu0 %v3321
        %v3398 = vpop.f32.mrf.mxu0
        %v3399 = vadd.f32 0.0, %v3398
        %v3400 = vpop.f32.mrf.mxu0
        %v3401 = vadd.f32 0.0, %v3400
        %3402 = vmatmul.bf16.gmra.mxu0 %v3322
        %v3403 = vpop.f32.mrf.mxu0
        %v3404 = vadd.f32 0.0, %v3403
        %v3405 = vpop.f32.mrf.mxu0
        %v3406 = vadd.f32 0.0, %v3405
        %3407 = vmatmul.bf16.gmra.mxu0 %v3323
        %v3408 = vpop.f32.mrf.mxu0
        %v3409 = vadd.f32 0.0, %v3408
        %v3410 = vpop.f32.mrf.mxu0
        %v3411 = vadd.f32 0.0, %v3410
        %3412 = vmatmul.bf16.gmra.mxu0 %v3324
        %v3413 = vpop.f32.mrf.mxu0
        %v3414 = vadd.f32 0.0, %v3413
        %v3415 = vpop.f32.mrf.mxu0
        %v3416 = vadd.f32 0.0, %v3415
        %3417 = vmatmul.bf16.gmra.mxu0 %v3325
        %v3418 = vpop.f32.mrf.mxu0
        %v3419 = vadd.f32 0.0, %v3418
        %v3420 = vpop.f32.mrf.mxu0
        %v3421 = vadd.f32 0.0, %v3420
        %3422 = vmatmul.bf16.gmra.mxu0 %v3326
        %v3423 = vpop.f32.mrf.mxu0
        %v3424 = vadd.f32 0.0, %v3423
        %v3425 = vpop.f32.mrf.mxu0
        %v3426 = vadd.f32 0.0, %v3425
        %3427 = vmatmul.bf16.gmra.mxu0 %v3327
        %v3428 = vpop.f32.mrf.mxu0
        %v3429 = vadd.f32 0.0, %v3428
        %v3430 = vpop.f32.mrf.mxu0
        %v3431 = vadd.f32 0.0, %v3430
        %3432 = vdwg.mxu0
        %v3433 = vadd.f32 %v3055, %v3394
        %v3434 = vadd.f32 %v3056, %v3396
        %v3435 = vadd.f32 %v3057, %v3399
        %v3436 = vadd.f32 %v3058, %v3401
        %v3437 = vadd.f32 %v3059, %v3404
        %v3438 = vadd.f32 %v3060, %v3406
        %v3439 = vadd.f32 %v3061, %v3409
        %v3440 = vadd.f32 %v3062, %v3411
        %v3441 = vadd.f32 %v3063, %v3414
        %v3442 = vadd.f32 %v3064, %v3416
        %v3443 = vadd.f32 %v3065, %v3419
        %v3444 = vadd.f32 %v3066, %v3421
        %v3445 = vadd.f32 %v3067, %v3424
        %v3446 = vadd.f32 %v3068, %v3426
        %v3447 = vadd.f32 %v3069, %v3429
        %v3448 = vadd.f32 %v3070, %v3431
        %v3449 = vld [vmem:[%s2876] sm:$0xe]
        %v3450 = vld [vmem:[%s2876 + $0xc] sm:$0xe]
        %v3451 = vld [vmem:[%s2876 + $0x18] sm:$0xe]
        %v3452 = vld [vmem:[%s2876 + $0x24] sm:$0xe]
        %v3453 = vld [vmem:[%s2876 + $0x30] sm:$0xe]
        %v3454 = vld [vmem:[%s2876 + $0x3c] sm:$0xe]
        %v3455 = vld [vmem:[%s2876 + $0x48] sm:$0xe]
        %v3456 = vld [vmem:[%s2876 + $0x54] sm:$0xe]
        %v3481 = vrot.slane %v3449, 5
        %v3482 = vrot.slane %v3481, 4
        %v3483 = vrot.slane %v3072, 5
        %v3484 = vsel %vm1835, %v3482, %v3483
        %v3485 = vrot.slane %v3483, 4
        %v3486 = vrot.slane %v3073, 5
        %v3487 = vsel %vm1835, %v3485, %v3486
        %v3488 = vrot.slane %v3450, 5
        %v3489 = vrot.slane %v3488, 4
        %v3490 = vrot.slane %v3075, 5
        %v3491 = vsel %vm1835, %v3489, %v3490
        %v3492 = vrot.slane %v3490, 4
        %v3493 = vrot.slane %v3076, 5
        %v3494 = vsel %vm1835, %v3492, %v3493
        %v3495 = vrot.slane %v3451, 5
        %v3496 = vrot.slane %v3495, 4
        %v3497 = vrot.slane %v3078, 5
        %v3498 = vsel %vm1835, %v3496, %v3497
        %v3499 = vrot.slane %v3497, 4
        %v3500 = vrot.slane %v3079, 5
        %v3501 = vsel %vm1835, %v3499, %v3500
        %v3502 = vrot.slane %v3452, 5
        %v3503 = vrot.slane %v3502, 4
        %v3504 = vrot.slane %v3081, 5
        %v3505 = vsel %vm1835, %v3503, %v3504
        %v3506 = vrot.slane %v3504, 4
        %v3507 = vrot.slane %v3082, 5
        %v3508 = vsel %vm1835, %v3506, %v3507
        %v3509 = vrot.slane %v3453, 5
        %v3510 = vrot.slane %v3509, 4
        %v3511 = vrot.slane %v3084, 5
        %v3512 = vsel %vm1835, %v3510, %v3511
        %v3513 = vrot.slane %v3511, 4
        %v3514 = vrot.slane %v3085, 5
        %v3515 = vsel %vm1835, %v3513, %v3514
        %v3516 = vrot.slane %v3454, 5
        %v3517 = vrot.slane %v3516, 4
        %v3518 = vrot.slane %v3087, 5
        %v3519 = vsel %vm1835, %v3517, %v3518
        %v3520 = vrot.slane %v3518, 4
        %v3521 = vrot.slane %v3088, 5
        %v3522 = vsel %vm1835, %v3520, %v3521
        %v3523 = vrot.slane %v3455, 5
        %v3524 = vrot.slane %v3523, 4
        %v3525 = vrot.slane %v3090, 5
        %v3526 = vsel %vm1835, %v3524, %v3525
        %v3527 = vrot.slane %v3525, 4
        %v3528 = vrot.slane %v3091, 5
        %v3529 = vsel %vm1835, %v3527, %v3528
        %v3530 = vrot.slane %v3456, 5
        %v3531 = vrot.slane %v3530, 4
        %v3532 = vrot.slane %v3093, 5
        %v3533 = vsel %vm1835, %v3531, %v3532
        %v3534 = vrot.slane %v3532, 4
        %v3535 = vrot.slane %v3094, 5
        %v3536 = vsel %vm1835, %v3534, %v3535
        %s3537 = scalar_lea.vmem [#allocation8], 512
        %v3538 = vld [vmem:[%s3537] sm:$0xf]
        %v3539 = vld [vmem:[%s3537 + $0x4] sm:$0xf]
        %v3540 = vld [vmem:[%s3537 + $0x8] sm:$0xf]
        %v3541 = vld [vmem:[%s3537 + $0xc] sm:$0xf]
        %v3542 = vld [vmem:[%s3537 + $0x10] sm:$0xf]
        %v3543 = vld [vmem:[%s3537 + $0x14] sm:$0xf]
        %v3544 = vld [vmem:[%s3537 + $0x18] sm:$0xf]
        %v3545 = vld [vmem:[%s3537 + $0x1c] sm:$0xf]
        %v3546 = vld [vmem:[%s3537 + $0x20] sm:$0xf]
        %v3547 = vld [vmem:[%s3537 + $0x24] sm:$0xf]
        %v3548 = vld [vmem:[%s3537 + $0x28] sm:$0xf]
        %v3549 = vld [vmem:[%s3537 + $0x2c] sm:$0xf]
        %v3550 = vld [vmem:[%s3537 + $0x30] sm:$0xf]
        %v3551 = vld [vmem:[%s3537 + $0x34] sm:$0xf]
        %v3552 = vld [vmem:[%s3537 + $0x38] sm:$0xf]
        %v3553 = vld [vmem:[%s3537 + $0x3c] sm:$0xf]
        %v3554 = vunpack.c.l.b16 %v3484
        %v3555 = vunpack.c.l.b16 %v3487
        %v3556 = vunpack.c.l.b16 %v3491
        %v3557 = vunpack.c.l.b16 %v3494
        %v3558 = vunpack.c.l.b16 %v3498
        %v3559 = vunpack.c.l.b16 %v3501
        %v3560 = vunpack.c.l.b16 %v3505
        %v3561 = vunpack.c.l.b16 %v3508
        %v3562 = vunpack.c.l.b16 %v3512
        %v3563 = vunpack.c.l.b16 %v3515
        %v3564 = vunpack.c.l.b16 %v3519
        %v3565 = vunpack.c.l.b16 %v3522
        %v3566 = vunpack.c.l.b16 %v3526
        %v3567 = vunpack.c.l.b16 %v3529
        %v3568 = vunpack.c.l.b16 %v3533
        %v3569 = vunpack.c.l.b16 %v3536
        %v3570 = vpack.c.b16 %v3555, %v3554
        %v3571 = vpack.c.b16 %v3557, %v3556
        %v3572 = vpack.c.b16 %v3559, %v3558
        %v3573 = vpack.c.b16 %v3561, %v3560
        %v3574 = vpack.c.b16 %v3563, %v3562
        %v3575 = vpack.c.b16 %v3565, %v3564
        %v3576 = vpack.c.b16 %v3567, %v3566
        %v3577 = vpack.c.b16 %v3569, %v3568
        %v3602 = vunpack.c.l.b16 %v3538
        %v3603 = vunpack.c.l.b16 %v3539
        %v3604 = vunpack.c.l.b16 %v3540
        %v3605 = vunpack.c.l.b16 %v3541
        %v3606 = vunpack.c.l.b16 %v3542
        %v3607 = vunpack.c.l.b16 %v3543
        %v3608 = vunpack.c.l.b16 %v3544
        %v3609 = vunpack.c.l.b16 %v3545
        %v3610 = vunpack.c.l.b16 %v3546
        %v3611 = vunpack.c.l.b16 %v3547
        %v3612 = vunpack.c.l.b16 %v3548
        %v3613 = vunpack.c.l.b16 %v3549
        %v3614 = vunpack.c.l.b16 %v3550
        %v3615 = vunpack.c.l.b16 %v3551
        %v3616 = vunpack.c.l.b16 %v3552
        %v3617 = vunpack.c.l.b16 %v3553
        %v3618 = vpack.c.b16 %v3603, %v3602
        %v3619 = vpack.c.b16 %v3605, %v3604
        %v3620 = vpack.c.b16 %v3607, %v3606
        %v3621 = vpack.c.b16 %v3609, %v3608
        %v3622 = vpack.c.b16 %v3611, %v3610
        %v3623 = vpack.c.b16 %v3613, %v3612
        %v3624 = vpack.c.b16 %v3615, %v3614
        %v3625 = vpack.c.b16 %v3617, %v3616
        %3634 = vmatpush.bf16.msra.mxu0 %v3625
        %3635 = vmatpush.bf16.msra.mxu0 %v3624
        %3636 = vmatpush.bf16.msra.mxu0 %v3623
        %3637 = vmatpush.bf16.msra.mxu0 %v3622
        %3638 = vmatpush.bf16.msra.mxu0 %v3621
        %3639 = vmatpush.bf16.msra.mxu0 %v3620
        %3640 = vmatpush.bf16.msra.mxu0 %v3619
        %3641 = vmatpush.bf16.msra.mxu0 %v3618
        %3642 = vmatmul.bf16.gmra.mxu0 %v3570
        %v3643 = vpop.f32.mrf.mxu0
        %v3644 = vadd.f32 0.0, %v3643
        %v3645 = vpop.f32.mrf.mxu0
        %v3646 = vadd.f32 0.0, %v3645
        %3647 = vmatmul.bf16.gmra.mxu0 %v3571
        %v3648 = vpop.f32.mrf.mxu0
        %v3649 = vadd.f32 0.0, %v3648
        %v3650 = vpop.f32.mrf.mxu0
        %v3651 = vadd.f32 0.0, %v3650
        %3652 = vmatmul.bf16.gmra.mxu0 %v3572
        %v3653 = vpop.f32.mrf.mxu0
        %v3654 = vadd.f32 0.0, %v3653
        %v3655 = vpop.f32.mrf.mxu0
        %v3656 = vadd.f32 0.0, %v3655
        %3657 = vmatmul.bf16.gmra.mxu0 %v3573
        %v3658 = vpop.f32.mrf.mxu0
        %v3659 = vadd.f32 0.0, %v3658
        %v3660 = vpop.f32.mrf.mxu0
        %v3661 = vadd.f32 0.0, %v3660
        %3662 = vmatmul.bf16.gmra.mxu0 %v3574
        %v3663 = vpop.f32.mrf.mxu0
        %v3664 = vadd.f32 0.0, %v3663
        %v3665 = vpop.f32.mrf.mxu0
        %v3666 = vadd.f32 0.0, %v3665
        %3667 = vmatmul.bf16.gmra.mxu0 %v3575
        %v3668 = vpop.f32.mrf.mxu0
        %v3669 = vadd.f32 0.0, %v3668
        %v3670 = vpop.f32.mrf.mxu0
        %v3671 = vadd.f32 0.0, %v3670
        %3672 = vmatmul.bf16.gmra.mxu0 %v3576
        %v3673 = vpop.f32.mrf.mxu0
        %v3674 = vadd.f32 0.0, %v3673
        %v3675 = vpop.f32.mrf.mxu0
        %v3676 = vadd.f32 0.0, %v3675
        %3677 = vmatmul.bf16.gmra.mxu0 %v3577
        %v3678 = vpop.f32.mrf.mxu0
        %v3679 = vadd.f32 0.0, %v3678
        %v3680 = vpop.f32.mrf.mxu0
        %v3681 = vadd.f32 0.0, %v3680
        %3682 = vdwg.mxu0
        %v3683 = vadd.f32 %v3433, %v3644
        %v3684 = vadd.f32 %v3434, %v3646
        %v3685 = vadd.f32 %v3435, %v3649
        %v3686 = vadd.f32 %v3436, %v3651
        %v3687 = vadd.f32 %v3437, %v3654
        %v3688 = vadd.f32 %v3438, %v3656
        %v3689 = vadd.f32 %v3439, %v3659
        %v3690 = vadd.f32 %v3440, %v3661
        %v3691 = vadd.f32 %v3441, %v3664
        %v3692 = vadd.f32 %v3442, %v3666
        %v3693 = vadd.f32 %v3443, %v3669
        %v3694 = vadd.f32 %v3444, %v3671
        %v3695 = vadd.f32 %v3445, %v3674
        %v3696 = vadd.f32 %v3446, %v3676
        %v3697 = vadd.f32 %v3447, %v3679
        %v3698 = vadd.f32 %v3448, %v3681
        %v3699 = vld [vmem:[%s5] sm:$0x1]
        %v3701 = vperm.slane %v3699, 0
        %v3703 = vmul.f32 %v3683, %v3701
        %v3704 = vmul.f32 %v3684, %v3701
        %v3705 = vmul.f32 %v3685, %v3701
        %v3706 = vmul.f32 %v3686, %v3701
        %v3707 = vmul.f32 %v3687, %v3701
        %v3708 = vmul.f32 %v3688, %v3701
        %v3709 = vmul.f32 %v3689, %v3701
        %v3710 = vmul.f32 %v3690, %v3701
        %v3711 = vmul.f32 %v3691, %v3701
        %v3712 = vmul.f32 %v3692, %v3701
        %v3713 = vmul.f32 %v3693, %v3701
        %v3714 = vmul.f32 %v3694, %v3701
        %v3715 = vmul.f32 %v3695, %v3701
        %v3716 = vmul.f32 %v3696, %v3701
        %v3717 = vmul.f32 %v3697, %v3701
        %v3718 = vmul.f32 %v3698, %v3701
        %v3719 = vld [vmem:[%s6] sm:$0x1]
        %v3721 = vperm.slane %v3719, 0
        %v3723 = vadd.f32 %v3703, %v3721
        %v3724 = vadd.f32 %v3704, %v3721
        %v3725 = vadd.f32 %v3705, %v3721
        %v3726 = vadd.f32 %v3706, %v3721
        %v3727 = vadd.f32 %v3707, %v3721
        %v3728 = vadd.f32 %v3708, %v3721
        %v3729 = vadd.f32 %v3709, %v3721
        %v3730 = vadd.f32 %v3710, %v3721
        %v3731 = vadd.f32 %v3711, %v3721
        %v3732 = vadd.f32 %v3712, %v3721
        %v3733 = vadd.f32 %v3713, %v3721
        %v3734 = vadd.f32 %v3714, %v3721
        %v3735 = vadd.f32 %v3715, %v3721
        %v3736 = vadd.f32 %v3716, %v3721
        %v3737 = vadd.f32 %v3717, %v3721
        %v3738 = vadd.f32 %v3718, %v3721
        %v3739 = vmax.f32 %v3723, 0.0
        %v3740 = vmax.f32 %v3724, 0.0
        %v3741 = vmax.f32 %v3725, 0.0
        %v3742 = vmax.f32 %v3726, 0.0
        %v3743 = vmax.f32 %v3727, 0.0
        %v3744 = vmax.f32 %v3728, 0.0
        %v3745 = vmax.f32 %v3729, 0.0
        %v3746 = vmax.f32 %v3730, 0.0
        %v3747 = vmax.f32 %v3731, 0.0
        %v3748 = vmax.f32 %v3732, 0.0
        %v3749 = vmax.f32 %v3733, 0.0
        %v3750 = vmax.f32 %v3734, 0.0
        %v3751 = vmax.f32 %v3735, 0.0
        %v3752 = vmax.f32 %v3736, 0.0
        %v3753 = vmax.f32 %v3737, 0.0
        %v3754 = vmax.f32 %v3738, 0.0
        %v3755 = vpack.c.bf16 %v3740, %v3739
        %v3756 = vpack.c.bf16 %v3742, %v3741
        %v3757 = vpack.c.bf16 %v3744, %v3743
        %v3758 = vpack.c.bf16 %v3746, %v3745
        %v3759 = vpack.c.bf16 %v3748, %v3747
        %v3760 = vpack.c.bf16 %v3750, %v3749
        %v3761 = vpack.c.bf16 %v3752, %v3751
        %v3762 = vpack.c.bf16 %v3754, %v3753
        %v3763 = vld [vmem:[#allocation9] sm:$0xf]
        %v3764 = vld [vmem:[#allocation9 + $0x4] sm:$0xf]
        %v3765 = vld [vmem:[#allocation9 + $0x8] sm:$0xf]
        %v3766 = vld [vmem:[#allocation9 + $0xc] sm:$0xf]
        %v3767 = vld [vmem:[#allocation9 + $0x10] sm:$0xf]
        %v3768 = vld [vmem:[#allocation9 + $0x14] sm:$0xf]
        %v3769 = vld [vmem:[#allocation9 + $0x18] sm:$0xf]
        %v3770 = vld [vmem:[#allocation9 + $0x1c] sm:$0xf]
        %v3771 = vld [vmem:[#allocation9 + $0x20] sm:$0xf]
        %v3772 = vld [vmem:[#allocation9 + $0x24] sm:$0xf]
        %v3773 = vld [vmem:[#allocation9 + $0x28] sm:$0xf]
        %v3774 = vld [vmem:[#allocation9 + $0x2c] sm:$0xf]
        %v3775 = vld [vmem:[#allocation9 + $0x30] sm:$0xf]
        %v3776 = vld [vmem:[#allocation9 + $0x34] sm:$0xf]
        %v3777 = vld [vmem:[#allocation9 + $0x38] sm:$0xf]
        %v3778 = vld [vmem:[#allocation9 + $0x3c] sm:$0xf]
        %v3795 = vunpack.c.l.b16 %v3763
        %v3796 = vunpack.c.l.b16 %v3764
        %v3797 = vunpack.c.l.b16 %v3765
        %v3798 = vunpack.c.l.b16 %v3766
        %v3799 = vunpack.c.l.b16 %v3767
        %v3800 = vunpack.c.l.b16 %v3768
        %v3801 = vunpack.c.l.b16 %v3769
        %v3802 = vunpack.c.l.b16 %v3770
        %v3803 = vunpack.c.l.b16 %v3771
        %v3804 = vunpack.c.l.b16 %v3772
        %v3805 = vunpack.c.l.b16 %v3773
        %v3806 = vunpack.c.l.b16 %v3774
        %v3807 = vunpack.c.l.b16 %v3775
        %v3808 = vunpack.c.l.b16 %v3776
        %v3809 = vunpack.c.l.b16 %v3777
        %v3810 = vunpack.c.l.b16 %v3778
        %v3811 = vpack.c.b16 %v3796, %v3795
        %v3812 = vpack.c.b16 %v3798, %v3797
        %v3813 = vpack.c.b16 %v3800, %v3799
        %v3814 = vpack.c.b16 %v3802, %v3801
        %v3815 = vpack.c.b16 %v3804, %v3803
        %v3816 = vpack.c.b16 %v3806, %v3805
        %v3817 = vpack.c.b16 %v3808, %v3807
        %v3818 = vpack.c.b16 %v3810, %v3809
        %3827 = vmatpush.bf16.msra.mxu0 %v3818
        %3828 = vmatpush.bf16.msra.mxu0 %v3817
        %3829 = vmatpush.bf16.msra.mxu0 %v3816
        %3830 = vmatpush.bf16.msra.mxu0 %v3815
        %3831 = vmatpush.bf16.msra.mxu0 %v3814
        %3832 = vmatpush.bf16.msra.mxu0 %v3813
        %3833 = vmatpush.bf16.msra.mxu0 %v3812
        %3834 = vmatpush.bf16.msra.mxu0 %v3811
        %3835 = vmatmul.bf16.gmra.mxu0 %v3755
        %v3836 = vpop.f32.mrf.mxu0
        %v3837 = vadd.f32 0.0, %v3836
        %v3838 = vpop.f32.mrf.mxu0
        %v3839 = vadd.f32 0.0, %v3838
        %3840 = vmatmul.bf16.gmra.mxu0 %v3756
        %v3841 = vpop.f32.mrf.mxu0
        %v3842 = vadd.f32 0.0, %v3841
        %v3843 = vpop.f32.mrf.mxu0
        %v3844 = vadd.f32 0.0, %v3843
        %3845 = vmatmul.bf16.gmra.mxu0 %v3757
        %v3846 = vpop.f32.mrf.mxu0
        %v3847 = vadd.f32 0.0, %v3846
        %v3848 = vpop.f32.mrf.mxu0
        %v3849 = vadd.f32 0.0, %v3848
        %3850 = vmatmul.bf16.gmra.mxu0 %v3758
        %v3851 = vpop.f32.mrf.mxu0
        %v3852 = vadd.f32 0.0, %v3851
        %v3853 = vpop.f32.mrf.mxu0
        %v3854 = vadd.f32 0.0, %v3853
        %3855 = vmatmul.bf16.gmra.mxu0 %v3759
        %v3856 = vpop.f32.mrf.mxu0
        %v3857 = vadd.f32 0.0, %v3856
        %v3858 = vpop.f32.mrf.mxu0
        %v3859 = vadd.f32 0.0, %v3858
        %3860 = vmatmul.bf16.gmra.mxu0 %v3760
        %v3861 = vpop.f32.mrf.mxu0
        %v3862 = vadd.f32 0.0, %v3861
        %v3863 = vpop.f32.mrf.mxu0
        %v3864 = vadd.f32 0.0, %v3863
        %3865 = vmatmul.bf16.gmra.mxu0 %v3761
        %v3866 = vpop.f32.mrf.mxu0
        %v3867 = vadd.f32 0.0, %v3866
        %v3868 = vpop.f32.mrf.mxu0
        %v3869 = vadd.f32 0.0, %v3868
        %3870 = vmatmul.bf16.gmra.mxu0 %v3762
        %v3871 = vpop.f32.mrf.mxu0
        %v3872 = vadd.f32 0.0, %v3871
        %v3873 = vpop.f32.mrf.mxu0
        %v3874 = vadd.f32 0.0, %v3873
        %3875 = vdwg.mxu0
        %v3876 = vld [vmem:[%s8] sm:$0x1]
        %v3878 = vperm.slane %v3876, 0
        %v3880 = vmul.f32 %v3837, %v3878
        %v3881 = vmul.f32 %v3839, %v3878
        %v3882 = vmul.f32 %v3842, %v3878
        %v3883 = vmul.f32 %v3844, %v3878
        %v3884 = vmul.f32 %v3847, %v3878
        %v3885 = vmul.f32 %v3849, %v3878
        %v3886 = vmul.f32 %v3852, %v3878
        %v3887 = vmul.f32 %v3854, %v3878
        %v3888 = vmul.f32 %v3857, %v3878
        %v3889 = vmul.f32 %v3859, %v3878
        %v3890 = vmul.f32 %v3862, %v3878
        %v3891 = vmul.f32 %v3864, %v3878
        %v3892 = vmul.f32 %v3867, %v3878
        %v3893 = vmul.f32 %v3869, %v3878
        %v3894 = vmul.f32 %v3872, %v3878
        %v3895 = vmul.f32 %v3874, %v3878
        %v3896 = vld [vmem:[%s9] sm:$0x1]
        %v3898 = vperm.slane %v3896, 0
        %v3900 = vadd.f32 %v3880, %v3898
        %v3901 = vadd.f32 %v3881, %v3898
        %v3902 = vadd.f32 %v3882, %v3898
        %v3903 = vadd.f32 %v3883, %v3898
        %v3904 = vadd.f32 %v3884, %v3898
        %v3905 = vadd.f32 %v3885, %v3898
        %v3906 = vadd.f32 %v3886, %v3898
        %v3907 = vadd.f32 %v3887, %v3898
        %v3908 = vadd.f32 %v3888, %v3898
        %v3909 = vadd.f32 %v3889, %v3898
        %v3910 = vadd.f32 %v3890, %v3898
        %v3911 = vadd.f32 %v3891, %v3898
        %v3912 = vadd.f32 %v3892, %v3898
        %v3913 = vadd.f32 %v3893, %v3898
        %v3914 = vadd.f32 %v3894, %v3898
        %v3915 = vadd.f32 %v3895, %v3898
        %v3916 = vunpack.c.l.bf16 %v515
        %v3917 = vunpack.c.l.bf16 %v516
        %v3918 = vunpack.c.l.bf16 %v517
        %v3919 = vunpack.c.l.bf16 %v518
        %v3920 = vunpack.c.l.bf16 %v519
        %v3921 = vunpack.c.l.bf16 %v520
        %v3922 = vunpack.c.l.bf16 %v521
        %v3923 = vunpack.c.l.bf16 %v522
        %v3924 = vunpack.c.l.bf16 %v523
        %v3925 = vunpack.c.l.bf16 %v524
        %v3926 = vunpack.c.l.bf16 %v525
        %v3927 = vunpack.c.l.bf16 %v526
        %v3928 = vunpack.c.l.bf16 %v527
        %v3929 = vunpack.c.l.bf16 %v528
        %v3930 = vunpack.c.l.bf16 %v529
        %v3931 = vunpack.c.l.bf16 %v530
        %v3932 = vadd.f32 %v3900, %v3916
        %v3933 = vadd.f32 %v3901, %v3917
        %v3934 = vadd.f32 %v3902, %v3918
        %v3935 = vadd.f32 %v3903, %v3919
        %v3936 = vadd.f32 %v3904, %v3920
        %v3937 = vadd.f32 %v3905, %v3921
        %v3938 = vadd.f32 %v3906, %v3922
        %v3939 = vadd.f32 %v3907, %v3923
        %v3940 = vadd.f32 %v3908, %v3924
        %v3941 = vadd.f32 %v3909, %v3925
        %v3942 = vadd.f32 %v3910, %v3926
        %v3943 = vadd.f32 %v3911, %v3927
        %v3944 = vadd.f32 %v3912, %v3928
        %v3945 = vadd.f32 %v3913, %v3929
        %v3946 = vadd.f32 %v3914, %v3930
        %v3947 = vadd.f32 %v3915, %v3931
        %v3948 = vmax.f32 %v3932, 0.0
        %v3949 = vmax.f32 %v3933, 0.0
        %v3950 = vmax.f32 %v3934, 0.0
        %v3951 = vmax.f32 %v3935, 0.0
        %v3952 = vmax.f32 %v3936, 0.0
        %v3953 = vmax.f32 %v3937, 0.0
        %v3954 = vmax.f32 %v3938, 0.0
        %v3955 = vmax.f32 %v3939, 0.0
        %v3956 = vmax.f32 %v3940, 0.0
        %v3957 = vmax.f32 %v3941, 0.0
        %v3958 = vmax.f32 %v3942, 0.0
        %v3959 = vmax.f32 %v3943, 0.0
        %v3960 = vmax.f32 %v3944, 0.0
        %v3961 = vmax.f32 %v3945, 0.0
        %v3962 = vmax.f32 %v3946, 0.0
        %v3963 = vmax.f32 %v3947, 0.0
        %v3964 = vpack.c.bf16 %v3948, %v3948
        %v3965 = vpack.c.bf16 %v3949, %v3949
        %v3966 = vpack.c.bf16 %v3950, %v3950
        %v3967 = vpack.c.bf16 %v3951, %v3951
        %v3968 = vpack.c.bf16 %v3952, %v3952
        %v3969 = vpack.c.bf16 %v3953, %v3953
        %v3970 = vpack.c.bf16 %v3954, %v3954
        %v3971 = vpack.c.bf16 %v3955, %v3955
        %v3972 = vpack.c.bf16 %v3956, %v3956
        %v3973 = vpack.c.bf16 %v3957, %v3957
        %v3974 = vpack.c.bf16 %v3958, %v3958
        %v3975 = vpack.c.bf16 %v3959, %v3959
        %v3976 = vpack.c.bf16 %v3960, %v3960
        %v3977 = vpack.c.bf16 %v3961, %v3961
        %v3978 = vpack.c.bf16 %v3962, %v3962
        %v3979 = vpack.c.bf16 %v3963, %v3963
        %3980 = vst [vmem:[%s443] sm:$0xf] %v3964
        %3981 = vst [vmem:[%s443 + $0x4] sm:$0xf] %v3965
        %3982 = vst [vmem:[%s443 + $0x8] sm:$0xf] %v3966
        %3983 = vst [vmem:[%s443 + $0xc] sm:$0xf] %v3967
        %3984 = vst [vmem:[%s443 + $0x10] sm:$0xf] %v3968
        %3985 = vst [vmem:[%s443 + $0x14] sm:$0xf] %v3969
        %3986 = vst [vmem:[%s443 + $0x18] sm:$0xf] %v3970
        %3987 = vst [vmem:[%s443 + $0x1c] sm:$0xf] %v3971
        %3988 = vst [vmem:[%s443 + $0x20] sm:$0xf] %v3972
        %3989 = vst [vmem:[%s443 + $0x24] sm:$0xf] %v3973
        %3990 = vst [vmem:[%s443 + $0x28] sm:$0xf] %v3974
        %3991 = vst [vmem:[%s443 + $0x2c] sm:$0xf] %v3975
        %3992 = vst [vmem:[%s443 + $0x30] sm:$0xf] %v3976
        %3993 = vst [vmem:[%s443 + $0x34] sm:$0xf] %v3977
        %3994 = vst [vmem:[%s443 + $0x38] sm:$0xf] %v3978
        %3995 = vst [vmem:[%s443 + $0x3c] sm:$0xf] %v3979
        %s3996 = sand.u32 %s266, 1
        %s3997 = scalar_lea.sflag [#allocation5], %s3996
        %s3998 = sand.u32 %s266, 1
        %s3999 = smul.addr %s3998, 64
        %s4000 = scalar_lea.vmem [#allocation11], %s3999
        // Predicated region
        $region93: #{tpu_custom_call.1} parent=59 // pred_check
          %p4001 = pneg %p276
        $region94: #{tpu_custom_call.1} parent=59 // pred_check_branch
          %4003 = sbr.rel (%p4001) target = $region96
        $region95: #{tpu_custom_call.1} parent=59 // pred_region
          %s4004 = smul.u32 8, %s34
          %4006 = vsyncadd %s3997, 0
          %s4007 = smul.addr %s4004, 2
          %s4008 = smul.addr %s33, 32
          %s4009 = sadd.s32 %s4007, %s4008
          %s4010 = smul.addr %s4009, 4
          %s4011 = scalar_lea.hbm %s10, %s4010
          %s4012 = sshll.u32 %s4000, 4
          %s4013 = int_to_ptr.vmem [resolvable:$true] %s4012
          %s4014 = sshll.u32 %s4011, 4
          %s4015 = int_to_ptr.hbm [resolvable:$true] %s4014
          %4020 = dma.vmem_to_hbm [thread:$0]  %s4013, 1024, %s4015, %s3997, 64, 64, 4
        $region96: #{tpu_custom_call.1} parent=59 // pred_fallthru
          _
      $region60: #{tpu_custom_call.1} parent=5 // pred_fallthru
        _
      %p4021 = scmp.le.s32.totalorder 2, %s24
      // Predicated region
      $region97: #{tpu_custom_call.1} parent=5 // pred_check
        %p4022 = pneg %p4021
      $region98: #{tpu_custom_call.1} parent=5 // pred_check_branch
        %4024 = sbr.rel (%p4022) target = $region100
      $region99: #{tpu_custom_call.1} parent=5 // pred_region
        %s4025 = ssub.s32 %s24, 2
        // Predicated region
        $region101: #{tpu_custom_call.1} parent=99 // pred_check
          %p4026 = pneg %p282
        $region102: #{tpu_custom_call.1} parent=99 // pred_check_branch
          %4028 = sbr.rel (%p4026) target = $region104
        $region103: #{tpu_custom_call.1} parent=99 // pred_region
          %s4029 = sand.u32 %s267, 1
          %s4030 = scalar_lea.sflag [#allocation5], %s4029
          %s4031 = sand.u32 %s267, 1
          %s4032 = smul.addr %s4031, 64
          %s4033 = scalar_lea.vmem [#allocation11], %s4032
          %4035 = dma.done %s4030, 1024
        $region104: #{tpu_custom_call.1} parent=99 // pred_fallthru
          _
      $region100: #{tpu_custom_call.1} parent=5 // pred_fallthru
        _
    $region6: #{tpu_custom_call.1} parent=1 // loop_footer
      %s28 = sadd.s32 1, %s24
    $region7: #{tpu_custom_call.1} parent=1 // loop_footer_branch
      %23 = sbr.rel target = $region3
    $region8: #{tpu_custom_call.1} parent=1 // loop_exit
      _
    %4036 = vsyncpa [#allocation4], 1
    %s4037 = scalar_lea.sflag [#allocation4], 1
    %4038 = vsyncpa %s4037, 1
    %4039 = vsyncpa [#allocation7], 1
    %4040 = vsyncpa [#allocation10], 1
    %4041 = vsyncpa [#allocation5], 1
    %s4042 = scalar_lea.sflag [#allocation5], 1
    %4043 = vsyncpa %s4042, 1

</llo_original>
